<compile_context>
chip_gen: v7x
topology: tpu7x:2x2x1
jax: 0.10.0
libtpu: 0.0.40
codegen_flags: <defaults>
</compile_context>

<pallas_src>
import functools
import math

import jax
import jax.numpy as jnp
from jax.experimental import pallas as pl
from jax.experimental.pallas import tpu as pltpu

BF16 = jnp.bfloat16
F32 = jnp.float32


# --------------------------------------------------------------------------
# One gated MultiHeadAttention block (ln=False, gated=True), traced inline.
#   Qrows: [B*Nq, dQ] if q_batched else [Nq, dQ] (batch-invariant Q input)
#   Kflat: [B*Nk, dK]
#   WQ: [dQ, 3*dV] bf16, columns = [scaled fused q in_proj | fc_q | gate]
#   WK: [dK, 2*dV] bf16, columns = [fused k in_proj | fused v in_proj]
#   Wop / Wfo: [dV, dV] bf16.   bQ/bK/bop/bfo: f32 row vectors.
# Returns the gated output [B, Nq, dV] (f32).
# --------------------------------------------------------------------------
def _gated_mha_block(Qrows, Kflat, WQ, bQ, WK, bK, Wop, bop, Wfo, bfo,
                     B, Nq, Nk, dV, num_heads, q_batched):
    hd = dV // num_heads

    # One wide matmul per input stream (bf16 MXU inputs, f32 accumulation).
    QP = jnp.dot(Qrows.astype(BF16), WQ, preferred_element_type=F32) + bQ
    KP = jnp.dot(Kflat.astype(BF16), WK, preferred_element_type=F32) + bK

    kp3 = KP[:, :dV].reshape(B, Nk, dV).astype(BF16)       # in_proj_k(fc_k(K))
    vp3 = KP[:, dV:].reshape(B, Nk, dV).astype(BF16)       # in_proj_v(fc_v(K))

    if q_batched:
        qp3 = QP[:, :dV].reshape(B, Nq, dV).astype(BF16)   # scaled in_proj_q(fc_q(Q))
        q3 = QP[:, dV:2 * dV].reshape(B, Nq, dV)           # fc_q(Q)
        g3 = QP[:, 2 * dV:].reshape(B, Nq, dV)             # gate linear(Q0)
    else:
        # Batch-invariant Q input: projections done once on Nq rows above;
        # broadcast only the tiny projected result (hoisted out of the loop).
        qp3 = jnp.broadcast_to(QP[:, :dV].astype(BF16)[None], (B, Nq, dV))
        q3 = QP[:, dV:2 * dV][None]                         # [1, Nq, dV]
        g3 = QP[:, 2 * dV:][None]                           # [1, Nq, dV]

    # Multi-head attention, batched over B (static head unroll).
    heads = []
    for h in range(num_heads):
        lo = h * hd
        s = jnp.einsum('bqd,bkd->bqk',
                       qp3[:, :, lo:lo + hd], kp3[:, :, lo:lo + hd],
                       preferred_element_type=F32)           # [B, Nq, Nk]
        s = s - jnp.max(s, axis=-1, keepdims=True)
        e = jnp.exp(s)
        p = e * pl.reciprocal(jnp.sum(e, axis=-1, keepdims=True), approx=True)
        heads.append(jnp.einsum('bqk,bkd->bqd',
                                p.astype(BF16), vp3[:, :, lo:lo + hd],
                                preferred_element_type=F32))  # [B, Nq, hd]
    attn = jnp.concatenate(heads, axis=-1)                    # [B, Nq, dV]

    # Single K=dV out_proj matmul (not num_heads tiny K=hd pushes).
    a3 = jnp.dot(attn.reshape(B * Nq, dV).astype(BF16), Wop,
                 preferred_element_type=F32).reshape(B, Nq, dV) + bop

    # O = fc_q(Q) + A ; O = O + relu(fc_o(O)) ; O = O * SiLU(gate(Q0))
    o3 = q3 + a3
    ff = jnp.dot(o3.reshape(B * Nq, dV).astype(BF16), Wfo,
                 preferred_element_type=F32).reshape(B, Nq, dV) + bfo
    o3 = o3 + jnp.maximum(ff, 0.0)
    return o3 * (g3 * jax.nn.sigmoid(g3))                     # [B, Nq, dV]


# --------------------------------------------------------------------------
# Fused GAB kernel: project_forward then project_backward; H stays in VMEM.
# --------------------------------------------------------------------------
def _gab_kernel(lat_ref, x_ref,
                wq_f_ref, bq_f_ref, wk_f_ref, bk_f_ref, wo_f_ref, bo_f_ref,
                wq_b_ref, bq_b_ref, wk_b_ref, bk_b_ref, wo_b_ref, bo_b_ref,
                o_ref, *, num_heads):
    Bt, N, din = x_ref.shape
    _, I, dV = lat_ref.shape

    Xf = x_ref[...].reshape(Bt * N, din)        # bf16 input slab, [Bt*N, din]
    lat = lat_ref[0]                            # [I, dV]  (batch-invariant)

    wo_f = wo_f_ref[...]
    bo_f = bo_f_ref[...]
    wo_b = wo_b_ref[...]
    bo_b = bo_b_ref[...]

    # project_forward: H = gated-MHA(latent, X) — latent projections computed
    # once per step on I rows, not Bt*I rows.
    H3 = _gated_mha_block(lat, Xf,
                          wq_f_ref[...], bq_f_ref[...],
                          wk_f_ref[...], bk_f_ref[...],
                          wo_f[0], bo_f[0:1, :], wo_f[1], bo_f[1:2, :],
                          Bt, I, N, dV, num_heads,
                          q_batched=False)                    # [Bt, I, dV]

    # project_backward: X_hat = gated-MHA(X, H)
    O3 = _gated_mha_block(Xf, H3.reshape(Bt * I, dV),
                          wq_b_ref[...], bq_b_ref[...],
                          wk_b_ref[...], bk_b_ref[...],
                          wo_b[0], bo_b[0:1, :], wo_b[1], bo_b[1:2, :],
                          Bt, N, I, dV, num_heads,
                          q_batched=True)                     # [Bt, N, dV]

    o_ref[...] = O3


# --------------------------------------------------------------------------
# Launch configuration helpers.
# --------------------------------------------------------------------------
def _pick_batch_block(B, N, I, din, dV, *, budget_bytes=20 << 20, target_steps=4):
    """Largest batch tile that fits a per-step VMEM budget while keeping
    >= min(target_steps, B) grid steps for pipelining / megacore sharding."""
    def step_bytes(bt):
        rows = bt * (N + I)
        act = rows * 8 * dV * 4                         # QP/KP/attn/ff f32 temps
        scores = bt * max(N, I) * max(N, I) * 4 * 2     # score + prob tiles
        io = (bt * N * din * 2 + bt * N * dV * 4) * 2   # double-buffered in/out
        return act + scores + io

    candidates = [bt for bt in range(1, B + 1)
                  if B % bt == 0 and step_bytes(bt) <= budget_bytes]
    if not candidates:
        return 1
    steps_needed = min(target_steps, B)
    good = [bt for bt in candidates if B // bt >= steps_needed]
    return max(good) if good else min(candidates)


def _gab_cost_estimate(B, N, I, din, dV, num_heads, weight_bytes):
    flops = (2 * I * dV * 3 * dV                 # fwd latent projections
             + 2 * B * N * din * 2 * dV          # fwd K/V projections
             + 4 * B * I * N * dV                # fwd attention
             + 4 * B * I * dV * dV               # fwd out_proj + fc_o
             + 2 * B * N * din * 3 * dV          # bwd Q/fc_q/gate projections
             + 2 * B * I * dV * 2 * dV           # bwd K/V projections
             + 4 * B * N * I * dV                # bwd attention
             + 4 * B * N * dV * dV)              # bwd out_proj + fc_o
    transcendentals = 2 * B * num_heads * I * N + B * (I + N) * dV
    bytes_accessed = (B * N * din * 2            # X (bf16)
                      + B * N * dV * 4           # output (f32)
                      + I * dV * 4               # latent
                      + weight_bytes)
    return pl.CostEstimate(flops=int(flops),
                           transcendentals=int(transcendentals),
                           bytes_accessed=int(bytes_accessed))


# --------------------------------------------------------------------------
# Wrapper: algebraic weight fusion (once, outside the kernel) + launch.
# --------------------------------------------------------------------------
def _fuse_block_params(p, num_heads):
    """Fold fc_q/fc_k/fc_v into the attention in_proj, fold the 1/sqrt(hd)
    scale into q, concatenate same-input weights into wide bf16 slabs."""
    dV = p["wiq"].shape[0]
    scale = 1.0 / math.sqrt(dV // num_heads)
    w_qp = (p["wfq"] @ p["wiq"]) * scale
    b_qp = (p["bfq"] @ p["wiq"] + p["biq"]) * scale
    w_kp = p["wfk"] @ p["wik"]
    b_kp = p["bfk"] @ p["wik"] + p["bik"]
    w_vp = p["wfv"] @ p["wiv"]
    b_vp = p["bfv"] @ p["wiv"] + p["biv"]
    WQ = jnp.concatenate([w_qp, p["wfq"], p["wg"]], axis=1).astype(BF16)  # [dQ, 3dV]
    bQ = jnp.concatenate([b_qp, p["bfq"], p["bg"]], axis=1)               # [1, 3dV] f32
    WK = jnp.concatenate([w_kp, w_vp], axis=1).astype(BF16)               # [dK, 2dV]
    bK = jnp.concatenate([b_kp, b_vp], axis=1)                            # [1, 2dV] f32
    WO = jnp.stack([p["wop"], p["wfo"]], axis=0).astype(BF16)             # [2, dV, dV]
    bO = jnp.concatenate([p["bop"], p["bfo"]], axis=0)                    # [2, dV] f32
    return WQ, bQ, WK, bK, WO, bO


def gab_pallas(latent, X, fwd_fused, bwd_fused, num_heads, *, batch_block=None):
    B, N, din = X.shape
    _, I, dV = latent.shape
    assert dV % num_heads == 0
    Bt = _pick_batch_block(B, N, I, din, dV) if batch_block is None else batch_block
    assert B % Bt == 0, "batch block must divide batch"

    weights = list(fwd_fused) + list(bwd_fused)
    weight_bytes = int(sum(w.size * w.dtype.itemsize for w in weights))

    def _const_spec(a):
        nd = a.ndim
        return pl.BlockSpec(a.shape, lambda b, _nd=nd: (0,) * _nd)

    in_specs = ([pl.BlockSpec((1, I, dV), lambda b: (0, 0, 0)),
                 pl.BlockSpec((Bt, N, din), lambda b: (b, 0, 0))]
                + [_const_spec(w) for w in weights])
    out_specs = pl.BlockSpec((Bt, N, dV), lambda b: (b, 0, 0))

    kernel = functools.partial(_gab_kernel, num_heads=num_heads)
    return pl.pallas_call(
        kernel,
        out_shape=jax.ShapeDtypeStruct((B, N, dV), jnp.float32),
        grid=(B // Bt,),
        in_specs=in_specs,
        out_specs=out_specs,
        compiler_params=pltpu.CompilerParams(
            dimension_semantics=("parallel",),
            vmem_limit_bytes=32 * 1024 * 1024),
        cost_estimate=_gab_cost_estimate(B, N, I, din, dV, num_heads, weight_bytes),
    )(latent, X, *weights)


@functools.partial(jax.jit, static_argnames=("num_heads",))
def gab_forward(params, X, num_heads):
    fwd = _fuse_block_params(params["fwd"], num_heads)
    bwd = _fuse_block_params(params["bwd"], num_heads)
    # X fed to the kernel in bf16: halves HBM traffic; it is only ever consumed
    # through bf16 MXU matmuls inside the kernel anyway.
    return gab_pallas(params["latent"], X.astype(BF16), fwd, bwd, num_heads)


# --------------------------------------------------------------------------
# Deterministic parameter construction (synthetic weights, no checkpoint).
# Weights stored (in, out) and applied as x @ W; a real PyTorch checkpoint
# would need transposes (Linear / MultiheadAttention store (out, in)).
# --------------------------------------------------------------------------
def _uniform(key, shape, fan_in):
    bound = 1.0 / math.sqrt(fan_in)
    return jax.random.uniform(key, shape, jnp.float32, -bound, bound)


def init_mha_params(key, dim_Q, dim_K, dim_V):
    keys = jax.random.split(key, 18)
    p = {}
    p["wfq"] = _uniform(keys[0], (dim_Q, dim_V), dim_Q)
    p["bfq"] = _uniform(keys[1], (1, dim_V), dim_Q)
    p["wfk"] = _uniform(keys[2], (dim_K, dim_V), dim_K)
    p["bfk"] = _uniform(keys[3], (1, dim_V), dim_K)
    p["wfv"] = _uniform(keys[4], (dim_K, dim_V), dim_K)
    p["bfv"] = _uniform(keys[5], (1, dim_V), dim_K)
    p["wiq"] = _uniform(keys[6], (dim_V, dim_V), dim_V)
    p["biq"] = _uniform(keys[7], (1, dim_V), dim_V)
    p["wik"] = _uniform(keys[8], (dim_V, dim_V), dim_V)
    p["bik"] = _uniform(keys[9], (1, dim_V), dim_V)
    p["wiv"] = _uniform(keys[10], (dim_V, dim_V), dim_V)
    p["biv"] = _uniform(keys[11], (1, dim_V), dim_V)
    p["wop"] = _uniform(keys[12], (dim_V, dim_V), dim_V)
    p["bop"] = _uniform(keys[13], (1, dim_V), dim_V)
    p["wfo"] = _uniform(keys[14], (dim_V, dim_V), dim_V)
    p["bfo"] = _uniform(keys[15], (1, dim_V), dim_V)
    p["wg"] = _uniform(keys[16], (dim_Q, dim_V), dim_Q)
    p["bg"] = _uniform(keys[17], (1, dim_V), dim_Q)
    return p


def init_gab_params(key, dim_in, dim_out, num_inds):
    k_lat, k_fwd, k_bwd = jax.random.split(key, 3)
    bound = math.sqrt(6.0 / (num_inds + dim_out))           # xavier_uniform_
    latent = jax.random.uniform(k_lat, (1, num_inds, dim_out), jnp.float32,
                                -bound, bound)
    fwd = init_mha_params(k_fwd, dim_out, dim_in, dim_out)  # project_forward
    bwd = init_mha_params(k_bwd, dim_in, dim_out, dim_out)  # project_backward
    return {"latent": latent, "fwd": fwd, "bwd": bwd}


# --------------------------------------------------------------------------
if __name__ == "__main__":
    dim_in, dim_out, num_heads, num_inds = 32, 32, 4, 8
    B, N = 8, 16                       # B=8 -> batch block 2 -> 4 parallel grid steps

    key = jax.random.PRNGKey(0)
    k_param, k_x = jax.random.split(key)
    params = init_gab_params(k_param, dim_in, dim_out, num_inds)
    X = jax.random.normal(k_x, (B, N, dim_in), jnp.float32)

    out = gab_forward(params, X, num_heads=num_heads)
    jax.block_until_ready(out)
    assert out.shape == (B, N, dim_out)
    assert bool(jnp.all(jnp.isfinite(out)))
    print("KERNEL_OK")
</pallas_src>

<mosaic_0001>
module attributes {stable_mosaic.version = 11 : i64} {
  func.func @_gab_kernel(%arg0: i32, %arg1: memref<1x8x32xf32, #tpu.memory_space<vmem>>, %arg2: memref<2x16x32xbf16, #tpu.memory_space<vmem>>, %arg3: memref<32x96xbf16, #tpu.memory_space<vmem>>, %arg4: memref<1x96xf32, #tpu.memory_space<vmem>>, %arg5: memref<32x64xbf16, #tpu.memory_space<vmem>>, %arg6: memref<1x64xf32, #tpu.memory_space<vmem>>, %arg7: memref<2x32x32xbf16, #tpu.memory_space<vmem>>, %arg8: memref<2x32xf32, #tpu.memory_space<vmem>>, %arg9: memref<32x96xbf16, #tpu.memory_space<vmem>>, %arg10: memref<1x96xf32, #tpu.memory_space<vmem>>, %arg11: memref<32x64xbf16, #tpu.memory_space<vmem>>, %arg12: memref<1x64xf32, #tpu.memory_space<vmem>>, %arg13: memref<2x32x32xbf16, #tpu.memory_space<vmem>>, %arg14: memref<2x32xf32, #tpu.memory_space<vmem>>, %arg15: memref<2x16x32xf32, #tpu.memory_space<vmem>>) attributes {dimension_semantics = [#tpu.dimension_semantics<parallel>], iteration_bounds = array<i64: 4>, scalar_prefetch = 0 : i64, scratch_operands = 0 : i64, tpu.core_type = #tpu.core_type<tc>, window_params = [{pipeline_mode = #tpu.pipeline_mode<synchronous>, transform_indices = @transform_0, window_bounds = array<i64: 1, 8, 32>}, {transform_indices = @transform_1, window_bounds = array<i64: 2, 16, 32>}, {pipeline_mode = #tpu.pipeline_mode<synchronous>, transform_indices = @transform_2, window_bounds = array<i64: 32, 96>}, {pipeline_mode = #tpu.pipeline_mode<synchronous>, transform_indices = @transform_3, window_bounds = array<i64: 1, 96>}, {pipeline_mode = #tpu.pipeline_mode<synchronous>, transform_indices = @transform_4, window_bounds = array<i64: 32, 64>}, {pipeline_mode = #tpu.pipeline_mode<synchronous>, transform_indices = @transform_5, window_bounds = array<i64: 1, 64>}, {pipeline_mode = #tpu.pipeline_mode<synchronous>, transform_indices = @transform_6, window_bounds = array<i64: 2, 32, 32>}, {pipeline_mode = #tpu.pipeline_mode<synchronous>, transform_indices = @transform_7, window_bounds = array<i64: 2, 32>}, {pipeline_mode = #tpu.pipeline_mode<synchronous>, transform_indices = @transform_8, window_bounds = array<i64: 32, 96>}, {pipeline_mode = #tpu.pipeline_mode<synchronous>, transform_indices = @transform_9, window_bounds = array<i64: 1, 96>}, {pipeline_mode = #tpu.pipeline_mode<synchronous>, transform_indices = @transform_10, window_bounds = array<i64: 32, 64>}, {pipeline_mode = #tpu.pipeline_mode<synchronous>, transform_indices = @transform_11, window_bounds = array<i64: 1, 64>}, {pipeline_mode = #tpu.pipeline_mode<synchronous>, transform_indices = @transform_12, window_bounds = array<i64: 2, 32, 32>}, {pipeline_mode = #tpu.pipeline_mode<synchronous>, transform_indices = @transform_13, window_bounds = array<i64: 2, 32>}, {transform_indices = @transform_14, window_bounds = array<i64: 2, 16, 32>}]} {
    %c0 = arith.constant 0 : index
    %c0_0 = arith.constant 0 : index
    %c0_1 = arith.constant 0 : index
    %0 = vector.load %arg2[%c0, %c0_0, %c0_1] : memref<2x16x32xbf16, #tpu.memory_space<vmem>>, vector<2x16x32xbf16>
    %1 = vector.shape_cast %0 : vector<2x16x32xbf16> to vector<32x32xbf16>
    %c0_2 = arith.constant 0 : index
    %c0_3 = arith.constant 0 : index
    %c0_4 = arith.constant 0 : index
    %2 = vector.load %arg1[%c0_2, %c0_3, %c0_4] : memref<1x8x32xf32, #tpu.memory_space<vmem>>, vector<1x8x32xf32>
    %3 = vector.shape_cast %2 : vector<1x8x32xf32> to vector<8x32xf32>
    %c0_5 = arith.constant 0 : index
    %c0_6 = arith.constant 0 : index
    %c0_7 = arith.constant 0 : index
    %4 = vector.load %arg7[%c0_5, %c0_6, %c0_7] : memref<2x32x32xbf16, #tpu.memory_space<vmem>>, vector<2x32x32xbf16>
    %c0_8 = arith.constant 0 : index
    %c0_9 = arith.constant 0 : index
    %5 = vector.load %arg8[%c0_8, %c0_9] : memref<2x32xf32, #tpu.memory_space<vmem>>, vector<2x32xf32>
    %c0_10 = arith.constant 0 : index
    %c0_11 = arith.constant 0 : index
    %c0_12 = arith.constant 0 : index
    %6 = vector.load %arg13[%c0_10, %c0_11, %c0_12] : memref<2x32x32xbf16, #tpu.memory_space<vmem>>, vector<2x32x32xbf16>
    %c0_13 = arith.constant 0 : index
    %c0_14 = arith.constant 0 : index
    %7 = vector.load %arg14[%c0_13, %c0_14] : memref<2x32xf32, #tpu.memory_space<vmem>>, vector<2x32xf32>
    %c0_15 = arith.constant 0 : index
    %c0_16 = arith.constant 0 : index
    %8 = vector.load %arg3[%c0_15, %c0_16] : memref<32x96xbf16, #tpu.memory_space<vmem>>, vector<32x96xbf16>
    %c0_17 = arith.constant 0 : index
    %c0_18 = arith.constant 0 : index
    %9 = vector.load %arg4[%c0_17, %c0_18] : memref<1x96xf32, #tpu.memory_space<vmem>>, vector<1x96xf32>
    %c0_19 = arith.constant 0 : index
    %c0_20 = arith.constant 0 : index
    %10 = vector.load %arg5[%c0_19, %c0_20] : memref<32x64xbf16, #tpu.memory_space<vmem>>, vector<32x64xbf16>
    %c0_21 = arith.constant 0 : index
    %c0_22 = arith.constant 0 : index
    %11 = vector.load %arg6[%c0_21, %c0_22] : memref<1x64xf32, #tpu.memory_space<vmem>>, vector<1x64xf32>
    %12 = vector.extract_strided_slice %4 {offsets = [0, 0, 0], sizes = [1, 32, 32], strides = [1, 1, 1]} : vector<2x32x32xbf16> to vector<1x32x32xbf16>
    %13 = vector.shape_cast %12 : vector<1x32x32xbf16> to vector<32x32xbf16>
    %14 = vector.extract_strided_slice %5 {offsets = [0, 0], sizes = [1, 32], strides = [1, 1]} : vector<2x32xf32> to vector<1x32xf32>
    %15 = vector.extract_strided_slice %4 {offsets = [1, 0, 0], sizes = [1, 32, 32], strides = [1, 1, 1]} : vector<2x32x32xbf16> to vector<1x32x32xbf16>
    %16 = vector.shape_cast %15 : vector<1x32x32xbf16> to vector<32x32xbf16>
    %17 = vector.extract_strided_slice %5 {offsets = [1, 0], sizes = [1, 32], strides = [1, 1]} : vector<2x32xf32> to vector<1x32xf32>
    %18 = arith.truncf %3 : vector<8x32xf32> to vector<8x32xbf16>
    %cst = arith.constant dense<0.000000e+00> : vector<8x96xf32>
    %19 = tpu.matmul %18, %8, %cst {dimension_numbers = #tpu.dot_dimension_numbers<[1], [0], [0], [1], [0, 0, 1, 1], [], []>} : vector<8x32xbf16>, vector<32x96xbf16>, vector<8x96xf32> -> vector<8x96xf32>
    %20 = vector.broadcast %9 : vector<1x96xf32> to vector<8x96xf32>
    %21 = arith.addf %19, %20 : vector<8x96xf32>
    %cst_23 = arith.constant dense<0.000000e+00> : vector<32x64xf32>
    %22 = tpu.matmul %1, %10, %cst_23 {dimension_numbers = #tpu.dot_dimension_numbers<[1], [0], [0], [1], [0, 0, 1, 1], [], []>} : vector<32x32xbf16>, vector<32x64xbf16>, vector<32x64xf32> -> vector<32x64xf32>
    %23 = vector.broadcast %11 : vector<1x64xf32> to vector<32x64xf32>
    %24 = arith.addf %22, %23 : vector<32x64xf32>
    %25 = vector.extract_strided_slice %24 {offsets = [0, 0], sizes = [32, 32], strides = [1, 1]} : vector<32x64xf32> to vector<32x32xf32>
    %26 = vector.shape_cast %25 : vector<32x32xf32> to vector<2x16x32xf32>
    %27 = arith.truncf %26 : vector<2x16x32xf32> to vector<2x16x32xbf16>
    %28 = vector.extract_strided_slice %24 {offsets = [0, 32], sizes = [32, 32], strides = [1, 1]} : vector<32x64xf32> to vector<32x32xf32>
    %29 = vector.shape_cast %28 : vector<32x32xf32> to vector<2x16x32xf32>
    %30 = arith.truncf %29 : vector<2x16x32xf32> to vector<2x16x32xbf16>
    %31 = vector.extract_strided_slice %21 {offsets = [0, 0], sizes = [8, 32], strides = [1, 1]} : vector<8x96xf32> to vector<8x32xf32>
    %32 = arith.truncf %31 : vector<8x32xf32> to vector<8x32xbf16>
    %33 = vector.shape_cast %32 : vector<8x32xbf16> to vector<1x8x32xbf16>
    %34 = vector.shape_cast %33 : vector<1x8x32xbf16> to vector<1x8x32xbf16>
    %35 = vector.broadcast %34 : vector<1x8x32xbf16> to vector<2x8x32xbf16>
    %36 = vector.extract_strided_slice %21 {offsets = [0, 32], sizes = [8, 32], strides = [1, 1]} : vector<8x96xf32> to vector<8x32xf32>
    %37 = vector.shape_cast %36 : vector<8x32xf32> to vector<1x8x32xf32>
    %38 = vector.extract_strided_slice %21 {offsets = [0, 64], sizes = [8, 32], strides = [1, 1]} : vector<8x96xf32> to vector<8x32xf32>
    %39 = vector.shape_cast %38 : vector<8x32xf32> to vector<1x8x32xf32>
    %40 = vector.extract_strided_slice %35 {offsets = [0, 0, 0], sizes = [2, 8, 8], strides = [1, 1, 1]} : vector<2x8x32xbf16> to vector<2x8x8xbf16>
    %41 = vector.extract_strided_slice %27 {offsets = [0, 0, 0], sizes = [2, 16, 8], strides = [1, 1, 1]} : vector<2x16x32xbf16> to vector<2x16x8xbf16>
    "tpu.trace_start"() <{level = 10 : i32, message = "bqd,bkd->bqk"}> : () -> ()
    %cst_24 = arith.constant dense<0.000000e+00> : vector<2x8x16xf32>
    %42 = tpu.matmul %40, %41, %cst_24 {dimension_numbers = #tpu.dot_dimension_numbers<[2], [2], [1], [1], [0, 0, 0, 1, 1, 1], [0], [0]>} : vector<2x8x8xbf16>, vector<2x16x8xbf16>, vector<2x8x16xf32> -> vector<2x8x16xf32>
    "tpu.trace_stop"() : () -> ()
    %cst_25 = arith.constant dense<0xFF800000> : vector<2x8xf32>
    %43 = vector.multi_reduction <maximumf>, %42, %cst_25 [2] : vector<2x8x16xf32> to vector<2x8xf32>
    %44 = vector.shape_cast %43 : vector<2x8xf32> to vector<2x8x1xf32>
    %45 = vector.broadcast %44 : vector<2x8x1xf32> to vector<2x8x16xf32>
    %46 = arith.subf %42, %45 : vector<2x8x16xf32>
    %47 = math.exp %46 : vector<2x8x16xf32>
    %cst_26 = arith.constant dense<0.000000e+00> : vector<2x8xf32>
    %48 = vector.multi_reduction <add>, %47, %cst_26 [2] : vector<2x8x16xf32> to vector<2x8xf32>
    %49 = vector.shape_cast %48 : vector<2x8xf32> to vector<2x8x1xf32>
    %50 = tpu.reciprocal %49 {approx = true} : vector<2x8x1xf32> -> vector<2x8x1xf32>
    %51 = vector.broadcast %50 : vector<2x8x1xf32> to vector<2x8x16xf32>
    %52 = arith.mulf %47, %51 : vector<2x8x16xf32>
    %53 = arith.truncf %52 : vector<2x8x16xf32> to vector<2x8x16xbf16>
    %54 = vector.extract_strided_slice %30 {offsets = [0, 0, 0], sizes = [2, 16, 8], strides = [1, 1, 1]} : vector<2x16x32xbf16> to vector<2x16x8xbf16>
    "tpu.trace_start"() <{level = 10 : i32, message = "bqk,bkd->bqd"}> : () -> ()
    %cst_27 = arith.constant dense<0.000000e+00> : vector<2x8x8xf32>
    %55 = tpu.matmul %53, %54, %cst_27 {dimension_numbers = #tpu.dot_dimension_numbers<[2], [1], [1], [2], [0, 0, 0, 1, 1, 2], [0], [0]>} : vector<2x8x16xbf16>, vector<2x16x8xbf16>, vector<2x8x8xf32> -> vector<2x8x8xf32>
    "tpu.trace_stop"() : () -> ()
    %56 = vector.extract_strided_slice %35 {offsets = [0, 0, 8], sizes = [2, 8, 8], strides = [1, 1, 1]} : vector<2x8x32xbf16> to vector<2x8x8xbf16>
    %57 = vector.extract_strided_slice %27 {offsets = [0, 0, 8], sizes = [2, 16, 8], strides = [1, 1, 1]} : vector<2x16x32xbf16> to vector<2x16x8xbf16>
    "tpu.trace_start"() <{level = 10 : i32, message = "bqd,bkd->bqk"}> : () -> ()
    %cst_28 = arith.constant dense<0.000000e+00> : vector<2x8x16xf32>
    %58 = tpu.matmul %56, %57, %cst_28 {dimension_numbers = #tpu.dot_dimension_numbers<[2], [2], [1], [1], [0, 0, 0, 1, 1, 1], [0], [0]>} : vector<2x8x8xbf16>, vector<2x16x8xbf16>, vector<2x8x16xf32> -> vector<2x8x16xf32>
    "tpu.trace_stop"() : () -> ()
    %cst_29 = arith.constant dense<0xFF800000> : vector<2x8xf32>
    %59 = vector.multi_reduction <maximumf>, %58, %cst_29 [2] : vector<2x8x16xf32> to vector<2x8xf32>
    %60 = vector.shape_cast %59 : vector<2x8xf32> to vector<2x8x1xf32>
    %61 = vector.broadcast %60 : vector<2x8x1xf32> to vector<2x8x16xf32>
    %62 = arith.subf %58, %61 : vector<2x8x16xf32>
    %63 = math.exp %62 : vector<2x8x16xf32>
    %cst_30 = arith.constant dense<0.000000e+00> : vector<2x8xf32>
    %64 = vector.multi_reduction <add>, %63, %cst_30 [2] : vector<2x8x16xf32> to vector<2x8xf32>
    %65 = vector.shape_cast %64 : vector<2x8xf32> to vector<2x8x1xf32>
    %66 = tpu.reciprocal %65 {approx = true} : vector<2x8x1xf32> -> vector<2x8x1xf32>
    %67 = vector.broadcast %66 : vector<2x8x1xf32> to vector<2x8x16xf32>
    %68 = arith.mulf %63, %67 : vector<2x8x16xf32>
    %69 = arith.truncf %68 : vector<2x8x16xf32> to vector<2x8x16xbf16>
    %70 = vector.extract_strided_slice %30 {offsets = [0, 0, 8], sizes = [2, 16, 8], strides = [1, 1, 1]} : vector<2x16x32xbf16> to vector<2x16x8xbf16>
    "tpu.trace_start"() <{level = 10 : i32, message = "bqk,bkd->bqd"}> : () -> ()
    %cst_31 = arith.constant dense<0.000000e+00> : vector<2x8x8xf32>
    %71 = tpu.matmul %69, %70, %cst_31 {dimension_numbers = #tpu.dot_dimension_numbers<[2], [1], [1], [2], [0, 0, 0, 1, 1, 2], [0], [0]>} : vector<2x8x16xbf16>, vector<2x16x8xbf16>, vector<2x8x8xf32> -> vector<2x8x8xf32>
    "tpu.trace_stop"() : () -> ()
    %72 = vector.extract_strided_slice %35 {offsets = [0, 0, 16], sizes = [2, 8, 8], strides = [1, 1, 1]} : vector<2x8x32xbf16> to vector<2x8x8xbf16>
    %73 = vector.extract_strided_slice %27 {offsets = [0, 0, 16], sizes = [2, 16, 8], strides = [1, 1, 1]} : vector<2x16x32xbf16> to vector<2x16x8xbf16>
    "tpu.trace_start"() <{level = 10 : i32, message = "bqd,bkd->bqk"}> : () -> ()
    %cst_32 = arith.constant dense<0.000000e+00> : vector<2x8x16xf32>
    %74 = tpu.matmul %72, %73, %cst_32 {dimension_numbers = #tpu.dot_dimension_numbers<[2], [2], [1], [1], [0, 0, 0, 1, 1, 1], [0], [0]>} : vector<2x8x8xbf16>, vector<2x16x8xbf16>, vector<2x8x16xf32> -> vector<2x8x16xf32>
    "tpu.trace_stop"() : () -> ()
    %cst_33 = arith.constant dense<0xFF800000> : vector<2x8xf32>
    %75 = vector.multi_reduction <maximumf>, %74, %cst_33 [2] : vector<2x8x16xf32> to vector<2x8xf32>
    %76 = vector.shape_cast %75 : vector<2x8xf32> to vector<2x8x1xf32>
    %77 = vector.broadcast %76 : vector<2x8x1xf32> to vector<2x8x16xf32>
    %78 = arith.subf %74, %77 : vector<2x8x16xf32>
    %79 = math.exp %78 : vector<2x8x16xf32>
    %cst_34 = arith.constant dense<0.000000e+00> : vector<2x8xf32>
    %80 = vector.multi_reduction <add>, %79, %cst_34 [2] : vector<2x8x16xf32> to vector<2x8xf32>
    %81 = vector.shape_cast %80 : vector<2x8xf32> to vector<2x8x1xf32>
    %82 = tpu.reciprocal %81 {approx = true} : vector<2x8x1xf32> -> vector<2x8x1xf32>
    %83 = vector.broadcast %82 : vector<2x8x1xf32> to vector<2x8x16xf32>
    %84 = arith.mulf %79, %83 : vector<2x8x16xf32>
    %85 = arith.truncf %84 : vector<2x8x16xf32> to vector<2x8x16xbf16>
    %86 = vector.extract_strided_slice %30 {offsets = [0, 0, 16], sizes = [2, 16, 8], strides = [1, 1, 1]} : vector<2x16x32xbf16> to vector<2x16x8xbf16>
    "tpu.trace_start"() <{level = 10 : i32, message = "bqk,bkd->bqd"}> : () -> ()
    %cst_35 = arith.constant dense<0.000000e+00> : vector<2x8x8xf32>
    %87 = tpu.matmul %85, %86, %cst_35 {dimension_numbers = #tpu.dot_dimension_numbers<[2], [1], [1], [2], [0, 0, 0, 1, 1, 2], [0], [0]>} : vector<2x8x16xbf16>, vector<2x16x8xbf16>, vector<2x8x8xf32> -> vector<2x8x8xf32>
    "tpu.trace_stop"() : () -> ()
    %88 = vector.extract_strided_slice %35 {offsets = [0, 0, 24], sizes = [2, 8, 8], strides = [1, 1, 1]} : vector<2x8x32xbf16> to vector<2x8x8xbf16>
    %89 = vector.extract_strided_slice %27 {offsets = [0, 0, 24], sizes = [2, 16, 8], strides = [1, 1, 1]} : vector<2x16x32xbf16> to vector<2x16x8xbf16>
    "tpu.trace_start"() <{level = 10 : i32, message = "bqd,bkd->bqk"}> : () -> ()
    %cst_36 = arith.constant dense<0.000000e+00> : vector<2x8x16xf32>
    %90 = tpu.matmul %88, %89, %cst_36 {dimension_numbers = #tpu.dot_dimension_numbers<[2], [2], [1], [1], [0, 0, 0, 1, 1, 1], [0], [0]>} : vector<2x8x8xbf16>, vector<2x16x8xbf16>, vector<2x8x16xf32> -> vector<2x8x16xf32>
    "tpu.trace_stop"() : () -> ()
    %cst_37 = arith.constant dense<0xFF800000> : vector<2x8xf32>
    %91 = vector.multi_reduction <maximumf>, %90, %cst_37 [2] : vector<2x8x16xf32> to vector<2x8xf32>
    %92 = vector.shape_cast %91 : vector<2x8xf32> to vector<2x8x1xf32>
    %93 = vector.broadcast %92 : vector<2x8x1xf32> to vector<2x8x16xf32>
    %94 = arith.subf %90, %93 : vector<2x8x16xf32>
    %95 = math.exp %94 : vector<2x8x16xf32>
    %cst_38 = arith.constant dense<0.000000e+00> : vector<2x8xf32>
    %96 = vector.multi_reduction <add>, %95, %cst_38 [2] : vector<2x8x16xf32> to vector<2x8xf32>
    %97 = vector.shape_cast %96 : vector<2x8xf32> to vector<2x8x1xf32>
    %98 = tpu.reciprocal %97 {approx = true} : vector<2x8x1xf32> -> vector<2x8x1xf32>
    %99 = vector.broadcast %98 : vector<2x8x1xf32> to vector<2x8x16xf32>
    %100 = arith.mulf %95, %99 : vector<2x8x16xf32>
    %101 = arith.truncf %100 : vector<2x8x16xf32> to vector<2x8x16xbf16>
    %102 = vector.extract_strided_slice %30 {offsets = [0, 0, 24], sizes = [2, 16, 8], strides = [1, 1, 1]} : vector<2x16x32xbf16> to vector<2x16x8xbf16>
    "tpu.trace_start"() <{level = 10 : i32, message = "bqk,bkd->bqd"}> : () -> ()
    %cst_39 = arith.constant dense<0.000000e+00> : vector<2x8x8xf32>
    %103 = tpu.matmul %101, %102, %cst_39 {dimension_numbers = #tpu.dot_dimension_numbers<[2], [1], [1], [2], [0, 0, 0, 1, 1, 2], [0], [0]>} : vector<2x8x16xbf16>, vector<2x16x8xbf16>, vector<2x8x8xf32> -> vector<2x8x8xf32>
    "tpu.trace_stop"() : () -> ()
    %104 = tpu.concatenate %55, %71, %87, %103 in 2 : vector<2x8x8xf32>, vector<2x8x8xf32>, vector<2x8x8xf32>, vector<2x8x8xf32> -> vector<2x8x32xf32>
    %105 = vector.shape_cast %104 : vector<2x8x32xf32> to vector<16x32xf32>
    %106 = arith.truncf %105 : vector<16x32xf32> to vector<16x32xbf16>
    %cst_40 = arith.constant dense<0.000000e+00> : vector<16x32xf32>
    %107 = tpu.matmul %106, %13, %cst_40 {dimension_numbers = #tpu.dot_dimension_numbers<[1], [0], [0], [1], [0, 0, 1, 1], [], []>} : vector<16x32xbf16>, vector<32x32xbf16>, vector<16x32xf32> -> vector<16x32xf32>
    %108 = vector.shape_cast %107 : vector<16x32xf32> to vector<2x8x32xf32>
    %109 = vector.shape_cast %14 : vector<1x32xf32> to vector<1x1x32xf32>
    %110 = vector.broadcast %109 : vector<1x1x32xf32> to vector<2x8x32xf32>
    %111 = arith.addf %108, %110 : vector<2x8x32xf32>
    %112 = vector.broadcast %37 : vector<1x8x32xf32> to vector<2x8x32xf32>
    %113 = arith.addf %112, %111 : vector<2x8x32xf32>
    %114 = vector.shape_cast %113 : vector<2x8x32xf32> to vector<16x32xf32>
    %115 = arith.truncf %114 : vector<16x32xf32> to vector<16x32xbf16>
    %cst_41 = arith.constant dense<0.000000e+00> : vector<16x32xf32>
    %116 = tpu.matmul %115, %16, %cst_41 {dimension_numbers = #tpu.dot_dimension_numbers<[1], [0], [0], [1], [0, 0, 1, 1], [], []>} : vector<16x32xbf16>, vector<32x32xbf16>, vector<16x32xf32> -> vector<16x32xf32>
    %117 = vector.shape_cast %116 : vector<16x32xf32> to vector<2x8x32xf32>
    %118 = vector.shape_cast %17 : vector<1x32xf32> to vector<1x1x32xf32>
    %119 = vector.broadcast %118 : vector<1x1x32xf32> to vector<2x8x32xf32>
    %120 = arith.addf %117, %119 : vector<2x8x32xf32>
    %cst_42 = arith.constant 0.000000e+00 : f32
    %121 = vector.broadcast %cst_42 : f32 to vector<2x8x32xf32>
    %122 = arith.maximumf %120, %121 : vector<2x8x32xf32>
    %123 = arith.addf %113, %122 : vector<2x8x32xf32>
    %124 = arith.negf %39 : vector<1x8x32xf32>
    %125 = math.exp %124 : vector<1x8x32xf32>
    %cst_43 = arith.constant 1.000000e+00 : f32
    %126 = vector.broadcast %cst_43 : f32 to vector<1x8x32xf32>
    %127 = arith.addf %126, %125 : vector<1x8x32xf32>
    %128 = arith.divf %126, %127 : vector<1x8x32xf32>
    %129 = arith.mulf %39, %128 : vector<1x8x32xf32>
    %130 = vector.broadcast %129 : vector<1x8x32xf32> to vector<2x8x32xf32>
    %131 = arith.mulf %123, %130 : vector<2x8x32xf32>
    %132 = vector.shape_cast %131 : vector<2x8x32xf32> to vector<16x32xf32>
    %c0_44 = arith.constant 0 : index
    %c0_45 = arith.constant 0 : index
    %133 = vector.load %arg9[%c0_44, %c0_45] : memref<32x96xbf16, #tpu.memory_space<vmem>>, vector<32x96xbf16>
    %c0_46 = arith.constant 0 : index
    %c0_47 = arith.constant 0 : index
    %134 = vector.load %arg10[%c0_46, %c0_47] : memref<1x96xf32, #tpu.memory_space<vmem>>, vector<1x96xf32>
    %c0_48 = arith.constant 0 : index
    %c0_49 = arith.constant 0 : index
    %135 = vector.load %arg11[%c0_48, %c0_49] : memref<32x64xbf16, #tpu.memory_space<vmem>>, vector<32x64xbf16>
    %c0_50 = arith.constant 0 : index
    %c0_51 = arith.constant 0 : index
    %136 = vector.load %arg12[%c0_50, %c0_51] : memref<1x64xf32, #tpu.memory_space<vmem>>, vector<1x64xf32>
    %137 = vector.extract_strided_slice %6 {offsets = [0, 0, 0], sizes = [1, 32, 32], strides = [1, 1, 1]} : vector<2x32x32xbf16> to vector<1x32x32xbf16>
    %138 = vector.shape_cast %137 : vector<1x32x32xbf16> to vector<32x32xbf16>
    %139 = vector.extract_strided_slice %7 {offsets = [0, 0], sizes = [1, 32], strides = [1, 1]} : vector<2x32xf32> to vector<1x32xf32>
    %140 = vector.extract_strided_slice %6 {offsets = [1, 0, 0], sizes = [1, 32, 32], strides = [1, 1, 1]} : vector<2x32x32xbf16> to vector<1x32x32xbf16>
    %141 = vector.shape_cast %140 : vector<1x32x32xbf16> to vector<32x32xbf16>
    %142 = vector.extract_strided_slice %7 {offsets = [1, 0], sizes = [1, 32], strides = [1, 1]} : vector<2x32xf32> to vector<1x32xf32>
    %cst_52 = arith.constant dense<0.000000e+00> : vector<32x96xf32>
    %143 = tpu.matmul %1, %133, %cst_52 {dimension_numbers = #tpu.dot_dimension_numbers<[1], [0], [0], [1], [0, 0, 1, 1], [], []>} : vector<32x32xbf16>, vector<32x96xbf16>, vector<32x96xf32> -> vector<32x96xf32>
    %144 = vector.broadcast %134 : vector<1x96xf32> to vector<32x96xf32>
    %145 = arith.addf %143, %144 : vector<32x96xf32>
    %146 = arith.truncf %132 : vector<16x32xf32> to vector<16x32xbf16>
    %cst_53 = arith.constant dense<0.000000e+00> : vector<16x64xf32>
    %147 = tpu.matmul %146, %135, %cst_53 {dimension_numbers = #tpu.dot_dimension_numbers<[1], [0], [0], [1], [0, 0, 1, 1], [], []>} : vector<16x32xbf16>, vector<32x64xbf16>, vector<16x64xf32> -> vector<16x64xf32>
    %148 = vector.broadcast %136 : vector<1x64xf32> to vector<16x64xf32>
    %149 = arith.addf %147, %148 : vector<16x64xf32>
    %150 = vector.extract_strided_slice %149 {offsets = [0, 0], sizes = [16, 32], strides = [1, 1]} : vector<16x64xf32> to vector<16x32xf32>
    %151 = vector.shape_cast %150 : vector<16x32xf32> to vector<2x8x32xf32>
    %152 = arith.truncf %151 : vector<2x8x32xf32> to vector<2x8x32xbf16>
    %153 = vector.extract_strided_slice %149 {offsets = [0, 32], sizes = [16, 32], strides = [1, 1]} : vector<16x64xf32> to vector<16x32xf32>
    %154 = vector.shape_cast %153 : vector<16x32xf32> to vector<2x8x32xf32>
    %155 = arith.truncf %154 : vector<2x8x32xf32> to vector<2x8x32xbf16>
    %156 = vector.extract_strided_slice %145 {offsets = [0, 0], sizes = [32, 32], strides = [1, 1]} : vector<32x96xf32> to vector<32x32xf32>
    %157 = vector.shape_cast %156 : vector<32x32xf32> to vector<2x16x32xf32>
    %158 = arith.truncf %157 : vector<2x16x32xf32> to vector<2x16x32xbf16>
    %159 = vector.extract_strided_slice %145 {offsets = [0, 32], sizes = [32, 32], strides = [1, 1]} : vector<32x96xf32> to vector<32x32xf32>
    %160 = vector.shape_cast %159 : vector<32x32xf32> to vector<2x16x32xf32>
    %161 = vector.extract_strided_slice %145 {offsets = [0, 64], sizes = [32, 32], strides = [1, 1]} : vector<32x96xf32> to vector<32x32xf32>
    %162 = vector.shape_cast %161 : vector<32x32xf32> to vector<2x16x32xf32>
    %163 = vector.extract_strided_slice %158 {offsets = [0, 0, 0], sizes = [2, 16, 8], strides = [1, 1, 1]} : vector<2x16x32xbf16> to vector<2x16x8xbf16>
    %164 = vector.extract_strided_slice %152 {offsets = [0, 0, 0], sizes = [2, 8, 8], strides = [1, 1, 1]} : vector<2x8x32xbf16> to vector<2x8x8xbf16>
    "tpu.trace_start"() <{level = 10 : i32, message = "bqd,bkd->bqk"}> : () -> ()
    %cst_54 = arith.constant dense<0.000000e+00> : vector<2x16x8xf32>
    %165 = tpu.matmul %163, %164, %cst_54 {dimension_numbers = #tpu.dot_dimension_numbers<[2], [2], [1], [1], [0, 0, 0, 1, 1, 1], [0], [0]>} : vector<2x16x8xbf16>, vector<2x8x8xbf16>, vector<2x16x8xf32> -> vector<2x16x8xf32>
    "tpu.trace_stop"() : () -> ()
    %cst_55 = arith.constant dense<0xFF800000> : vector<2x16xf32>
    %166 = vector.multi_reduction <maximumf>, %165, %cst_55 [2] : vector<2x16x8xf32> to vector<2x16xf32>
    %167 = vector.shape_cast %166 : vector<2x16xf32> to vector<2x16x1xf32>
    %168 = vector.broadcast %167 : vector<2x16x1xf32> to vector<2x16x8xf32>
    %169 = arith.subf %165, %168 : vector<2x16x8xf32>
    %170 = math.exp %169 : vector<2x16x8xf32>
    %cst_56 = arith.constant dense<0.000000e+00> : vector<2x16xf32>
    %171 = vector.multi_reduction <add>, %170, %cst_56 [2] : vector<2x16x8xf32> to vector<2x16xf32>
    %172 = vector.shape_cast %171 : vector<2x16xf32> to vector<2x16x1xf32>
    %173 = tpu.reciprocal %172 {approx = true} : vector<2x16x1xf32> -> vector<2x16x1xf32>
    %174 = vector.broadcast %173 : vector<2x16x1xf32> to vector<2x16x8xf32>
    %175 = arith.mulf %170, %174 : vector<2x16x8xf32>
    %176 = arith.truncf %175 : vector<2x16x8xf32> to vector<2x16x8xbf16>
    %177 = vector.extract_strided_slice %155 {offsets = [0, 0, 0], sizes = [2, 8, 8], strides = [1, 1, 1]} : vector<2x8x32xbf16> to vector<2x8x8xbf16>
    "tpu.trace_start"() <{level = 10 : i32, message = "bqk,bkd->bqd"}> : () -> ()
    %cst_57 = arith.constant dense<0.000000e+00> : vector<2x16x8xf32>
    %178 = tpu.matmul %176, %177, %cst_57 {dimension_numbers = #tpu.dot_dimension_numbers<[2], [1], [1], [2], [0, 0, 0, 1, 1, 2], [0], [0]>} : vector<2x16x8xbf16>, vector<2x8x8xbf16>, vector<2x16x8xf32> -> vector<2x16x8xf32>
    "tpu.trace_stop"() : () -> ()
    %179 = vector.extract_strided_slice %158 {offsets = [0, 0, 8], sizes = [2, 16, 8], strides = [1, 1, 1]} : vector<2x16x32xbf16> to vector<2x16x8xbf16>
    %180 = vector.extract_strided_slice %152 {offsets = [0, 0, 8], sizes = [2, 8, 8], strides = [1, 1, 1]} : vector<2x8x32xbf16> to vector<2x8x8xbf16>
    "tpu.trace_start"() <{level = 10 : i32, message = "bqd,bkd->bqk"}> : () -> ()
    %cst_58 = arith.constant dense<0.000000e+00> : vector<2x16x8xf32>
    %181 = tpu.matmul %179, %180, %cst_58 {dimension_numbers = #tpu.dot_dimension_numbers<[2], [2], [1], [1], [0, 0, 0, 1, 1, 1], [0], [0]>} : vector<2x16x8xbf16>, vector<2x8x8xbf16>, vector<2x16x8xf32> -> vector<2x16x8xf32>
    "tpu.trace_stop"() : () -> ()
    %cst_59 = arith.constant dense<0xFF800000> : vector<2x16xf32>
    %182 = vector.multi_reduction <maximumf>, %181, %cst_59 [2] : vector<2x16x8xf32> to vector<2x16xf32>
    %183 = vector.shape_cast %182 : vector<2x16xf32> to vector<2x16x1xf32>
    %184 = vector.broadcast %183 : vector<2x16x1xf32> to vector<2x16x8xf32>
    %185 = arith.subf %181, %184 : vector<2x16x8xf32>
    %186 = math.exp %185 : vector<2x16x8xf32>
    %cst_60 = arith.constant dense<0.000000e+00> : vector<2x16xf32>
    %187 = vector.multi_reduction <add>, %186, %cst_60 [2] : vector<2x16x8xf32> to vector<2x16xf32>
    %188 = vector.shape_cast %187 : vector<2x16xf32> to vector<2x16x1xf32>
    %189 = tpu.reciprocal %188 {approx = true} : vector<2x16x1xf32> -> vector<2x16x1xf32>
    %190 = vector.broadcast %189 : vector<2x16x1xf32> to vector<2x16x8xf32>
    %191 = arith.mulf %186, %190 : vector<2x16x8xf32>
    %192 = arith.truncf %191 : vector<2x16x8xf32> to vector<2x16x8xbf16>
    %193 = vector.extract_strided_slice %155 {offsets = [0, 0, 8], sizes = [2, 8, 8], strides = [1, 1, 1]} : vector<2x8x32xbf16> to vector<2x8x8xbf16>
    "tpu.trace_start"() <{level = 10 : i32, message = "bqk,bkd->bqd"}> : () -> ()
    %cst_61 = arith.constant dense<0.000000e+00> : vector<2x16x8xf32>
    %194 = tpu.matmul %192, %193, %cst_61 {dimension_numbers = #tpu.dot_dimension_numbers<[2], [1], [1], [2], [0, 0, 0, 1, 1, 2], [0], [0]>} : vector<2x16x8xbf16>, vector<2x8x8xbf16>, vector<2x16x8xf32> -> vector<2x16x8xf32>
    "tpu.trace_stop"() : () -> ()
    %195 = vector.extract_strided_slice %158 {offsets = [0, 0, 16], sizes = [2, 16, 8], strides = [1, 1, 1]} : vector<2x16x32xbf16> to vector<2x16x8xbf16>
    %196 = vector.extract_strided_slice %152 {offsets = [0, 0, 16], sizes = [2, 8, 8], strides = [1, 1, 1]} : vector<2x8x32xbf16> to vector<2x8x8xbf16>
    "tpu.trace_start"() <{level = 10 : i32, message = "bqd,bkd->bqk"}> : () -> ()
    %cst_62 = arith.constant dense<0.000000e+00> : vector<2x16x8xf32>
    %197 = tpu.matmul %195, %196, %cst_62 {dimension_numbers = #tpu.dot_dimension_numbers<[2], [2], [1], [1], [0, 0, 0, 1, 1, 1], [0], [0]>} : vector<2x16x8xbf16>, vector<2x8x8xbf16>, vector<2x16x8xf32> -> vector<2x16x8xf32>
    "tpu.trace_stop"() : () -> ()
    %cst_63 = arith.constant dense<0xFF800000> : vector<2x16xf32>
    %198 = vector.multi_reduction <maximumf>, %197, %cst_63 [2] : vector<2x16x8xf32> to vector<2x16xf32>
    %199 = vector.shape_cast %198 : vector<2x16xf32> to vector<2x16x1xf32>
    %200 = vector.broadcast %199 : vector<2x16x1xf32> to vector<2x16x8xf32>
    %201 = arith.subf %197, %200 : vector<2x16x8xf32>
    %202 = math.exp %201 : vector<2x16x8xf32>
    %cst_64 = arith.constant dense<0.000000e+00> : vector<2x16xf32>
    %203 = vector.multi_reduction <add>, %202, %cst_64 [2] : vector<2x16x8xf32> to vector<2x16xf32>
    %204 = vector.shape_cast %203 : vector<2x16xf32> to vector<2x16x1xf32>
    %205 = tpu.reciprocal %204 {approx = true} : vector<2x16x1xf32> -> vector<2x16x1xf32>
    %206 = vector.broadcast %205 : vector<2x16x1xf32> to vector<2x16x8xf32>
    %207 = arith.mulf %202, %206 : vector<2x16x8xf32>
    %208 = arith.truncf %207 : vector<2x16x8xf32> to vector<2x16x8xbf16>
    %209 = vector.extract_strided_slice %155 {offsets = [0, 0, 16], sizes = [2, 8, 8], strides = [1, 1, 1]} : vector<2x8x32xbf16> to vector<2x8x8xbf16>
    "tpu.trace_start"() <{level = 10 : i32, message = "bqk,bkd->bqd"}> : () -> ()
    %cst_65 = arith.constant dense<0.000000e+00> : vector<2x16x8xf32>
    %210 = tpu.matmul %208, %209, %cst_65 {dimension_numbers = #tpu.dot_dimension_numbers<[2], [1], [1], [2], [0, 0, 0, 1, 1, 2], [0], [0]>} : vector<2x16x8xbf16>, vector<2x8x8xbf16>, vector<2x16x8xf32> -> vector<2x16x8xf32>
    "tpu.trace_stop"() : () -> ()
    %211 = vector.extract_strided_slice %158 {offsets = [0, 0, 24], sizes = [2, 16, 8], strides = [1, 1, 1]} : vector<2x16x32xbf16> to vector<2x16x8xbf16>
    %212 = vector.extract_strided_slice %152 {offsets = [0, 0, 24], sizes = [2, 8, 8], strides = [1, 1, 1]} : vector<2x8x32xbf16> to vector<2x8x8xbf16>
    "tpu.trace_start"() <{level = 10 : i32, message = "bqd,bkd->bqk"}> : () -> ()
    %cst_66 = arith.constant dense<0.000000e+00> : vector<2x16x8xf32>
    %213 = tpu.matmul %211, %212, %cst_66 {dimension_numbers = #tpu.dot_dimension_numbers<[2], [2], [1], [1], [0, 0, 0, 1, 1, 1], [0], [0]>} : vector<2x16x8xbf16>, vector<2x8x8xbf16>, vector<2x16x8xf32> -> vector<2x16x8xf32>
    "tpu.trace_stop"() : () -> ()
    %cst_67 = arith.constant dense<0xFF800000> : vector<2x16xf32>
    %214 = vector.multi_reduction <maximumf>, %213, %cst_67 [2] : vector<2x16x8xf32> to vector<2x16xf32>
    %215 = vector.shape_cast %214 : vector<2x16xf32> to vector<2x16x1xf32>
    %216 = vector.broadcast %215 : vector<2x16x1xf32> to vector<2x16x8xf32>
    %217 = arith.subf %213, %216 : vector<2x16x8xf32>
    %218 = math.exp %217 : vector<2x16x8xf32>
    %cst_68 = arith.constant dense<0.000000e+00> : vector<2x16xf32>
    %219 = vector.multi_reduction <add>, %218, %cst_68 [2] : vector<2x16x8xf32> to vector<2x16xf32>
    %220 = vector.shape_cast %219 : vector<2x16xf32> to vector<2x16x1xf32>
    %221 = tpu.reciprocal %220 {approx = true} : vector<2x16x1xf32> -> vector<2x16x1xf32>
    %222 = vector.broadcast %221 : vector<2x16x1xf32> to vector<2x16x8xf32>
    %223 = arith.mulf %218, %222 : vector<2x16x8xf32>
    %224 = arith.truncf %223 : vector<2x16x8xf32> to vector<2x16x8xbf16>
    %225 = vector.extract_strided_slice %155 {offsets = [0, 0, 24], sizes = [2, 8, 8], strides = [1, 1, 1]} : vector<2x8x32xbf16> to vector<2x8x8xbf16>
    "tpu.trace_start"() <{level = 10 : i32, message = "bqk,bkd->bqd"}> : () -> ()
    %cst_69 = arith.constant dense<0.000000e+00> : vector<2x16x8xf32>
    %226 = tpu.matmul %224, %225, %cst_69 {dimension_numbers = #tpu.dot_dimension_numbers<[2], [1], [1], [2], [0, 0, 0, 1, 1, 2], [0], [0]>} : vector<2x16x8xbf16>, vector<2x8x8xbf16>, vector<2x16x8xf32> -> vector<2x16x8xf32>
    "tpu.trace_stop"() : () -> ()
    %227 = tpu.concatenate %178, %194, %210, %226 in 2 : vector<2x16x8xf32>, vector<2x16x8xf32>, vector<2x16x8xf32>, vector<2x16x8xf32> -> vector<2x16x32xf32>
    %228 = vector.shape_cast %227 : vector<2x16x32xf32> to vector<32x32xf32>
    %229 = arith.truncf %228 : vector<32x32xf32> to vector<32x32xbf16>
    %cst_70 = arith.constant dense<0.000000e+00> : vector<32x32xf32>
    %230 = tpu.matmul %229, %138, %cst_70 {dimension_numbers = #tpu.dot_dimension_numbers<[1], [0], [0], [1], [0, 0, 1, 1], [], []>} : vector<32x32xbf16>, vector<32x32xbf16>, vector<32x32xf32> -> vector<32x32xf32>
    %231 = vector.shape_cast %230 : vector<32x32xf32> to vector<2x16x32xf32>
    %232 = vector.shape_cast %139 : vector<1x32xf32> to vector<1x1x32xf32>
    %233 = vector.broadcast %232 : vector<1x1x32xf32> to vector<2x16x32xf32>
    %234 = arith.addf %231, %233 : vector<2x16x32xf32>
    %235 = arith.addf %160, %234 : vector<2x16x32xf32>
    %236 = vector.shape_cast %235 : vector<2x16x32xf32> to vector<32x32xf32>
    %237 = arith.truncf %236 : vector<32x32xf32> to vector<32x32xbf16>
    %cst_71 = arith.constant dense<0.000000e+00> : vector<32x32xf32>
    %238 = tpu.matmul %237, %141, %cst_71 {dimension_numbers = #tpu.dot_dimension_numbers<[1], [0], [0], [1], [0, 0, 1, 1], [], []>} : vector<32x32xbf16>, vector<32x32xbf16>, vector<32x32xf32> -> vector<32x32xf32>
    %239 = vector.shape_cast %238 : vector<32x32xf32> to vector<2x16x32xf32>
    %240 = vector.shape_cast %142 : vector<1x32xf32> to vector<1x1x32xf32>
    %241 = vector.broadcast %240 : vector<1x1x32xf32> to vector<2x16x32xf32>
    %242 = arith.addf %239, %241 : vector<2x16x32xf32>
    %cst_72 = arith.constant 0.000000e+00 : f32
    %243 = vector.broadcast %cst_72 : f32 to vector<2x16x32xf32>
    %244 = arith.maximumf %242, %243 : vector<2x16x32xf32>
    %245 = arith.addf %235, %244 : vector<2x16x32xf32>
    %246 = arith.negf %162 : vector<2x16x32xf32>
    %247 = math.exp %246 : vector<2x16x32xf32>
    %cst_73 = arith.constant 1.000000e+00 : f32
    %248 = vector.broadcast %cst_73 : f32 to vector<2x16x32xf32>
    %249 = arith.addf %248, %247 : vector<2x16x32xf32>
    %250 = arith.divf %248, %249 : vector<2x16x32xf32>
    %251 = arith.mulf %162, %250 : vector<2x16x32xf32>
    %252 = arith.mulf %245, %251 : vector<2x16x32xf32>
    %c0_74 = arith.constant 0 : index
    %c0_75 = arith.constant 0 : index
    %c0_76 = arith.constant 0 : index
    %253 = vector.load %arg15[%c0_74, %c0_75, %c0_76] : memref<2x16x32xf32, #tpu.memory_space<vmem>>, vector<2x16x32xf32>
    tpu.vector_store %arg15[%c0_74, %c0_75, %c0_76], %252 {strides = array<i32>} : memref<2x16x32xf32, #tpu.memory_space<vmem>>, vector<2x16x32xf32>,
    return
  }
  func.func @transform_0(%arg0: i32) -> (i32, i32, i32) {
    %c0_i32 = arith.constant 0 : i32
    %c0_i32_0 = arith.constant 0 : i32
    %c0_i32_1 = arith.constant 0 : i32
    %c0_i32_2 = arith.constant 0 : i32
    return %c0_i32, %c0_i32_0, %c0_i32_1 : i32, i32, i32
  }
  func.func @transform_1(%arg0: i32) -> (i32, i32, i32) {
    %c0_i32 = arith.constant 0 : i32
    %c0_i32_0 = arith.constant 0 : i32
    %c0_i32_1 = arith.constant 0 : i32
    return %arg0, %c0_i32, %c0_i32_0 : i32, i32, i32
  }
  func.func @transform_2(%arg0: i32) -> (i32, i32) {
    %c0_i32 = arith.constant 0 : i32
    %c0_i32_0 = arith.constant 0 : i32
    %c0_i32_1 = arith.constant 0 : i32
    return %c0_i32, %c0_i32_0 : i32, i32
  }
  func.func @transform_3(%arg0: i32) -> (i32, i32) {
    %c0_i32 = arith.constant 0 : i32
    %c0_i32_0 = arith.constant 0 : i32
    %c0_i32_1 = arith.constant 0 : i32
    return %c0_i32, %c0_i32_0 : i32, i32
  }
  func.func @transform_4(%arg0: i32) -> (i32, i32) {
    %c0_i32 = arith.constant 0 : i32
    %c0_i32_0 = arith.constant 0 : i32
    %c0_i32_1 = arith.constant 0 : i32
    return %c0_i32, %c0_i32_0 : i32, i32
  }
  func.func @transform_5(%arg0: i32) -> (i32, i32) {
    %c0_i32 = arith.constant 0 : i32
    %c0_i32_0 = arith.constant 0 : i32
    %c0_i32_1 = arith.constant 0 : i32
    return %c0_i32, %c0_i32_0 : i32, i32
  }
  func.func @transform_6(%arg0: i32) -> (i32, i32, i32) {
    %c0_i32 = arith.constant 0 : i32
    %c0_i32_0 = arith.constant 0 : i32
    %c0_i32_1 = arith.constant 0 : i32
    %c0_i32_2 = arith.constant 0 : i32
    return %c0_i32, %c0_i32_0, %c0_i32_1 : i32, i32, i32
  }
  func.func @transform_7(%arg0: i32) -> (i32, i32) {
    %c0_i32 = arith.constant 0 : i32
    %c0_i32_0 = arith.constant 0 : i32
    %c0_i32_1 = arith.constant 0 : i32
    return %c0_i32, %c0_i32_0 : i32, i32
  }
  func.func @transform_8(%arg0: i32) -> (i32, i32) {
    %c0_i32 = arith.constant 0 : i32
    %c0_i32_0 = arith.constant 0 : i32
    %c0_i32_1 = arith.constant 0 : i32
    return %c0_i32, %c0_i32_0 : i32, i32
  }
  func.func @transform_9(%arg0: i32) -> (i32, i32) {
    %c0_i32 = arith.constant 0 : i32
    %c0_i32_0 = arith.constant 0 : i32
    %c0_i32_1 = arith.constant 0 : i32
    return %c0_i32, %c0_i32_0 : i32, i32
  }
  func.func @transform_10(%arg0: i32) -> (i32, i32) {
    %c0_i32 = arith.constant 0 : i32
    %c0_i32_0 = arith.constant 0 : i32
    %c0_i32_1 = arith.constant 0 : i32
    return %c0_i32, %c0_i32_0 : i32, i32
  }
  func.func @transform_11(%arg0: i32) -> (i32, i32) {
    %c0_i32 = arith.constant 0 : i32
    %c0_i32_0 = arith.constant 0 : i32
    %c0_i32_1 = arith.constant 0 : i32
    return %c0_i32, %c0_i32_0 : i32, i32
  }
  func.func @transform_12(%arg0: i32) -> (i32, i32, i32) {
    %c0_i32 = arith.constant 0 : i32
    %c0_i32_0 = arith.constant 0 : i32
    %c0_i32_1 = arith.constant 0 : i32
    %c0_i32_2 = arith.constant 0 : i32
    return %c0_i32, %c0_i32_0, %c0_i32_1 : i32, i32, i32
  }
  func.func @transform_13(%arg0: i32) -> (i32, i32) {
    %c0_i32 = arith.constant 0 : i32
    %c0_i32_0 = arith.constant 0 : i32
    %c0_i32_1 = arith.constant 0 : i32
    return %c0_i32, %c0_i32_0 : i32, i32
  }
  func.func @transform_14(%arg0: i32) -> (i32, i32, i32) {
    %c0_i32 = arith.constant 0 : i32
    %c0_i32_0 = arith.constant 0 : i32
    %c0_i32_1 = arith.constant 0 : i32
    return %arg0, %c0_i32, %c0_i32_0 : i32, i32, i32
  }
}

</mosaic_0001>

<llo_original>
// kernel: gab_forward.1
$region0: #{gab_forward.1}
  #allocation0 [shape = 'u32[]', space=smem, size = 0x4, offset = 0x4, fixed_abs, tag = 'smem constant byte address 0x4 - core index']
  #allocation1 [shape = 'u32[144,128]{1,0:T(1,128)}', space=vmem, size = 0x12000, scoped, tag = 'internal scratch']
  %s0 = inlined_call_operand.vmem [shape: f32[1,8,32], index: 0, kind: input, shape index: {}]
  %s1 = inlined_call_operand.vmem [shape: bf16[8,16,32], index: 1, kind: input, shape index: {}]
  %s2 = inlined_call_operand.vmem [shape: bf16[32,96], index: 2, kind: input, shape index: {}]
  %s3 = inlined_call_operand.vmem [shape: f32[1,96], index: 3, kind: input, shape index: {}]
  %s4 = inlined_call_operand.vmem [shape: bf16[32,64], index: 4, kind: input, shape index: {}]
  %s5 = inlined_call_operand.vmem [shape: f32[1,64], index: 5, kind: input, shape index: {}]
  %s6 = inlined_call_operand.vmem [shape: bf16[2,32,32], index: 6, kind: input, shape index: {}]
  %s7 = inlined_call_operand.vmem [shape: f32[2,32], index: 7, kind: input, shape index: {}]
  %s8 = inlined_call_operand.vmem [shape: bf16[32,96], index: 8, kind: input, shape index: {}]
  %s9 = inlined_call_operand.vmem [shape: f32[1,96], index: 9, kind: input, shape index: {}]
  %s10 = inlined_call_operand.vmem [shape: bf16[32,64], index: 10, kind: input, shape index: {}]
  %s11 = inlined_call_operand.vmem [shape: f32[1,64], index: 11, kind: input, shape index: {}]
  %s12 = inlined_call_operand.vmem [shape: bf16[2,32,32], index: 12, kind: input, shape index: {}]
  %s13 = inlined_call_operand.vmem [shape: f32[2,32], index: 13, kind: input, shape index: {}]
  %s14 = inlined_call_operand.hbm [shape: f32[8,16,32], index: 14, kind: output, shape index: {}]
  %s15 = sld [smem:[#allocation0]]
  $region89: #{gab_forward.1} parent=0
    _
  %s17 = ssub.s32 1, %s15
  %s18 = scalar_select 0, %s17, %s15
  $region1: #{gab_forward.1} parent=0
    #allocation2 [shape = 'u8[32768]{0}', space=vmem, size = 0x8000, scoped, tag = 'output window, operand 0']
    #allocation3 [shape = 's32[2]{0}', space=sflag, size = 0x8, scoped, tag = 'scoped memory for gab_forward.1']
    %19 = vsyncpa [#allocation3], 0
    %s20 = scalar_lea.sflag [#allocation3], 1
    %21 = vsyncpa %s20, 0
    loop: start=0, step=1, limit=6
    $region2: #{gab_forward.1} parent=1 // loop_pre_header
      _
    $region3: #{gab_forward.1} parent=1 // loop_header
      %s23 = sphi 0, %s27
      %p24 = scmp.ge.s32.totalorder %s23, 6
      %s31 = sphi 0, %s31
      %s33 = sphi 0, %s31
      %s34 = sphi 0, %s33
      %s48 = sphi 0, %s34
      %s54 = sphi 0, %s56
      %s57 = sphi 0, %s54
      %s58 = sphi 0, %s57
      %s74 = sphi 0, %s58
      %s78 = sphi 0, %s78
      %s80 = sphi 0, %s78
      %s81 = sphi 0, %s80
      %s95 = sphi 0, %s81
      %s99 = sphi 0, %s99
      %s101 = sphi 0, %s99
      %s102 = sphi 0, %s101
      %s116 = sphi 0, %s102
      %s120 = sphi 0, %s120
      %s122 = sphi 0, %s120
      %s123 = sphi 0, %s122
      %s137 = sphi 0, %s123
      %s141 = sphi 0, %s141
      %s143 = sphi 0, %s141
      %s144 = sphi 0, %s143
      %s158 = sphi 0, %s144
      %s162 = sphi 0, %s162
      %s164 = sphi 0, %s162
      %s165 = sphi 0, %s164
      %s179 = sphi 0, %s165
      %s183 = sphi 0, %s183
      %s185 = sphi 0, %s183
      %s186 = sphi 0, %s185
      %s200 = sphi 0, %s186
      %s204 = sphi 0, %s204
      %s206 = sphi 0, %s204
      %s207 = sphi 0, %s206
      %s221 = sphi 0, %s207
      %s225 = sphi 0, %s225
      %s227 = sphi 0, %s225
      %s228 = sphi 0, %s227
      %s242 = sphi 0, %s228
      %s246 = sphi 0, %s246
      %s248 = sphi 0, %s246
      %s249 = sphi 0, %s248
      %s263 = sphi 0, %s249
      %s267 = sphi 0, %s267
      %s269 = sphi 0, %s267
      %s270 = sphi 0, %s269
      %s284 = sphi 0, %s270
      %s288 = sphi 0, %s288
      %s290 = sphi 0, %s288
      %s291 = sphi 0, %s290
      %s305 = sphi 0, %s291
      %s309 = sphi 0, %s309
      %s311 = sphi 0, %s309
      %s312 = sphi 0, %s311
      %s326 = sphi 0, %s312
      %s332 = sphi 0, %s334
      %s335 = sphi 0, %s332
      %s336 = sphi 0, %s335
      %s352 = sphi 0, %s336
    $region4: #{gab_forward.1} parent=1 // loop_header_branch
      %26 = sbr.rel (%p24) target = $region8
    $region5: #{gab_forward.1} parent=1 // loop_body
      %s28 = ssub.s32 %s23, 1
      %s29 = ssub.s32 %s23, 2
      %s30 = sadd.s32 %s23, 1
      %s32 = sadd.s32 %s31, 1
      %p35 = scmp.eq.s32.totalorder %s23, 3
      %p36 = scmp.ne.s32.totalorder %s31, %s33
      %p37 = scmp.eq.s32.totalorder %s23, 0
      %p38 = por %p36, %p37
      %p39 = scmp.ne.s32.totalorder %s31, %s33
      %p40 = scmp.eq.s32.totalorder %s28, 3
      %p41 = por %p39, %p40
      %p42 = scmp.ne.s32.totalorder %s33, %s34
      %p43 = scmp.eq.s32.totalorder %s28, 0
      %p44 = por %p42, %p43
      %p45 = scmp.ne.s32.totalorder %s33, %s34
      %p46 = scmp.eq.s32.totalorder %s29, 3
      %p47 = por %p45, %p46
      %p49 = scmp.ne.s32.totalorder %s34, %s48
      %p50 = scmp.eq.s32.totalorder %s29, 0
      %p51 = por %p49, %p50
      %s52 = ssub.s32 %s23, %s30
      %p53 = scmp.eq.s32.totalorder %s52, 0
      %s55 = sadd.s32 %s54, 1
      %s56 = scalar_select %p53, %s54, %s55
      %p59 = pneg %p53
      %p60 = scmp.eq.s32.totalorder %s23, 3
      %p61 = por %p59, %p60
      %p62 = scmp.ne.s32.totalorder %s54, %s57
      %p63 = scmp.eq.s32.totalorder %s23, 0
      %p64 = por %p62, %p63
      %p65 = scmp.ne.s32.totalorder %s54, %s57
      %p66 = scmp.eq.s32.totalorder %s28, 3
      %p67 = por %p65, %p66
      %p68 = scmp.ne.s32.totalorder %s57, %s58
      %p69 = scmp.eq.s32.totalorder %s28, 0
      %p70 = por %p68, %p69
      %p71 = scmp.ne.s32.totalorder %s57, %s58
      %p72 = scmp.eq.s32.totalorder %s29, 3
      %p73 = por %p71, %p72
      %p75 = scmp.ne.s32.totalorder %s58, %s74
      %p76 = scmp.eq.s32.totalorder %s29, 0
      %p77 = por %p75, %p76
      %s79 = sadd.s32 %s78, 1
      %p82 = scmp.eq.s32.totalorder %s23, 3
      %p83 = scmp.ne.s32.totalorder %s78, %s80
      %p84 = scmp.eq.s32.totalorder %s23, 0
      %p85 = por %p83, %p84
      %p86 = scmp.ne.s32.totalorder %s78, %s80
      %p87 = scmp.eq.s32.totalorder %s28, 3
      %p88 = por %p86, %p87
      %p89 = scmp.ne.s32.totalorder %s80, %s81
      %p90 = scmp.eq.s32.totalorder %s28, 0
      %p91 = por %p89, %p90
      %p92 = scmp.ne.s32.totalorder %s80, %s81
      %p93 = scmp.eq.s32.totalorder %s29, 3
      %p94 = por %p92, %p93
      %p96 = scmp.ne.s32.totalorder %s81, %s95
      %p97 = scmp.eq.s32.totalorder %s29, 0
      %p98 = por %p96, %p97
      %s100 = sadd.s32 %s99, 1
      %p103 = scmp.eq.s32.totalorder %s23, 3
      %p104 = scmp.ne.s32.totalorder %s99, %s101
      %p105 = scmp.eq.s32.totalorder %s23, 0
      %p106 = por %p104, %p105
      %p107 = scmp.ne.s32.totalorder %s99, %s101
      %p108 = scmp.eq.s32.totalorder %s28, 3
      %p109 = por %p107, %p108
      %p110 = scmp.ne.s32.totalorder %s101, %s102
      %p111 = scmp.eq.s32.totalorder %s28, 0
      %p112 = por %p110, %p111
      %p113 = scmp.ne.s32.totalorder %s101, %s102
      %p114 = scmp.eq.s32.totalorder %s29, 3
      %p115 = por %p113, %p114
      %p117 = scmp.ne.s32.totalorder %s102, %s116
      %p118 = scmp.eq.s32.totalorder %s29, 0
      %p119 = por %p117, %p118
      %s121 = sadd.s32 %s120, 1
      %p124 = scmp.eq.s32.totalorder %s23, 3
      %p125 = scmp.ne.s32.totalorder %s120, %s122
      %p126 = scmp.eq.s32.totalorder %s23, 0
      %p127 = por %p125, %p126
      %p128 = scmp.ne.s32.totalorder %s120, %s122
      %p129 = scmp.eq.s32.totalorder %s28, 3
      %p130 = por %p128, %p129
      %p131 = scmp.ne.s32.totalorder %s122, %s123
      %p132 = scmp.eq.s32.totalorder %s28, 0
      %p133 = por %p131, %p132
      %p134 = scmp.ne.s32.totalorder %s122, %s123
      %p135 = scmp.eq.s32.totalorder %s29, 3
      %p136 = por %p134, %p135
      %p138 = scmp.ne.s32.totalorder %s123, %s137
      %p139 = scmp.eq.s32.totalorder %s29, 0
      %p140 = por %p138, %p139
      %s142 = sadd.s32 %s141, 1
      %p145 = scmp.eq.s32.totalorder %s23, 3
      %p146 = scmp.ne.s32.totalorder %s141, %s143
      %p147 = scmp.eq.s32.totalorder %s23, 0
      %p148 = por %p146, %p147
      %p149 = scmp.ne.s32.totalorder %s141, %s143
      %p150 = scmp.eq.s32.totalorder %s28, 3
      %p151 = por %p149, %p150
      %p152 = scmp.ne.s32.totalorder %s143, %s144
      %p153 = scmp.eq.s32.totalorder %s28, 0
      %p154 = por %p152, %p153
      %p155 = scmp.ne.s32.totalorder %s143, %s144
      %p156 = scmp.eq.s32.totalorder %s29, 3
      %p157 = por %p155, %p156
      %p159 = scmp.ne.s32.totalorder %s144, %s158
      %p160 = scmp.eq.s32.totalorder %s29, 0
      %p161 = por %p159, %p160
      %s163 = sadd.s32 %s162, 1
      %p166 = scmp.eq.s32.totalorder %s23, 3
      %p167 = scmp.ne.s32.totalorder %s162, %s164
      %p168 = scmp.eq.s32.totalorder %s23, 0
      %p169 = por %p167, %p168
      %p170 = scmp.ne.s32.totalorder %s162, %s164
      %p171 = scmp.eq.s32.totalorder %s28, 3
      %p172 = por %p170, %p171
      %p173 = scmp.ne.s32.totalorder %s164, %s165
      %p174 = scmp.eq.s32.totalorder %s28, 0
      %p175 = por %p173, %p174
      %p176 = scmp.ne.s32.totalorder %s164, %s165
      %p177 = scmp.eq.s32.totalorder %s29, 3
      %p178 = por %p176, %p177
      %p180 = scmp.ne.s32.totalorder %s165, %s179
      %p181 = scmp.eq.s32.totalorder %s29, 0
      %p182 = por %p180, %p181
      %s184 = sadd.s32 %s183, 1
      %p187 = scmp.eq.s32.totalorder %s23, 3
      %p188 = scmp.ne.s32.totalorder %s183, %s185
      %p189 = scmp.eq.s32.totalorder %s23, 0
      %p190 = por %p188, %p189
      %p191 = scmp.ne.s32.totalorder %s183, %s185
      %p192 = scmp.eq.s32.totalorder %s28, 3
      %p193 = por %p191, %p192
      %p194 = scmp.ne.s32.totalorder %s185, %s186
      %p195 = scmp.eq.s32.totalorder %s28, 0
      %p196 = por %p194, %p195
      %p197 = scmp.ne.s32.totalorder %s185, %s186
      %p198 = scmp.eq.s32.totalorder %s29, 3
      %p199 = por %p197, %p198
      %p201 = scmp.ne.s32.totalorder %s186, %s200
      %p202 = scmp.eq.s32.totalorder %s29, 0
      %p203 = por %p201, %p202
      %s205 = sadd.s32 %s204, 1
      %p208 = scmp.eq.s32.totalorder %s23, 3
      %p209 = scmp.ne.s32.totalorder %s204, %s206
      %p210 = scmp.eq.s32.totalorder %s23, 0
      %p211 = por %p209, %p210
      %p212 = scmp.ne.s32.totalorder %s204, %s206
      %p213 = scmp.eq.s32.totalorder %s28, 3
      %p214 = por %p212, %p213
      %p215 = scmp.ne.s32.totalorder %s206, %s207
      %p216 = scmp.eq.s32.totalorder %s28, 0
      %p217 = por %p215, %p216
      %p218 = scmp.ne.s32.totalorder %s206, %s207
      %p219 = scmp.eq.s32.totalorder %s29, 3
      %p220 = por %p218, %p219
      %p222 = scmp.ne.s32.totalorder %s207, %s221
      %p223 = scmp.eq.s32.totalorder %s29, 0
      %p224 = por %p222, %p223
      %s226 = sadd.s32 %s225, 1
      %p229 = scmp.eq.s32.totalorder %s23, 3
      %p230 = scmp.ne.s32.totalorder %s225, %s227
      %p231 = scmp.eq.s32.totalorder %s23, 0
      %p232 = por %p230, %p231
      %p233 = scmp.ne.s32.totalorder %s225, %s227
      %p234 = scmp.eq.s32.totalorder %s28, 3
      %p235 = por %p233, %p234
      %p236 = scmp.ne.s32.totalorder %s227, %s228
      %p237 = scmp.eq.s32.totalorder %s28, 0
      %p238 = por %p236, %p237
      %p239 = scmp.ne.s32.totalorder %s227, %s228
      %p240 = scmp.eq.s32.totalorder %s29, 3
      %p241 = por %p239, %p240
      %p243 = scmp.ne.s32.totalorder %s228, %s242
      %p244 = scmp.eq.s32.totalorder %s29, 0
      %p245 = por %p243, %p244
      %s247 = sadd.s32 %s246, 1
      %p250 = scmp.eq.s32.totalorder %s23, 3
      %p251 = scmp.ne.s32.totalorder %s246, %s248
      %p252 = scmp.eq.s32.totalorder %s23, 0
      %p253 = por %p251, %p252
      %p254 = scmp.ne.s32.totalorder %s246, %s248
      %p255 = scmp.eq.s32.totalorder %s28, 3
      %p256 = por %p254, %p255
      %p257 = scmp.ne.s32.totalorder %s248, %s249
      %p258 = scmp.eq.s32.totalorder %s28, 0
      %p259 = por %p257, %p258
      %p260 = scmp.ne.s32.totalorder %s248, %s249
      %p261 = scmp.eq.s32.totalorder %s29, 3
      %p262 = por %p260, %p261
      %p264 = scmp.ne.s32.totalorder %s249, %s263
      %p265 = scmp.eq.s32.totalorder %s29, 0
      %p266 = por %p264, %p265
      %s268 = sadd.s32 %s267, 1
      %p271 = scmp.eq.s32.totalorder %s23, 3
      %p272 = scmp.ne.s32.totalorder %s267, %s269
      %p273 = scmp.eq.s32.totalorder %s23, 0
      %p274 = por %p272, %p273
      %p275 = scmp.ne.s32.totalorder %s267, %s269
      %p276 = scmp.eq.s32.totalorder %s28, 3
      %p277 = por %p275, %p276
      %p278 = scmp.ne.s32.totalorder %s269, %s270
      %p279 = scmp.eq.s32.totalorder %s28, 0
      %p280 = por %p278, %p279
      %p281 = scmp.ne.s32.totalorder %s269, %s270
      %p282 = scmp.eq.s32.totalorder %s29, 3
      %p283 = por %p281, %p282
      %p285 = scmp.ne.s32.totalorder %s270, %s284
      %p286 = scmp.eq.s32.totalorder %s29, 0
      %p287 = por %p285, %p286
      %s289 = sadd.s32 %s288, 1
      %p292 = scmp.eq.s32.totalorder %s23, 3
      %p293 = scmp.ne.s32.totalorder %s288, %s290
      %p294 = scmp.eq.s32.totalorder %s23, 0
      %p295 = por %p293, %p294
      %p296 = scmp.ne.s32.totalorder %s288, %s290
      %p297 = scmp.eq.s32.totalorder %s28, 3
      %p298 = por %p296, %p297
      %p299 = scmp.ne.s32.totalorder %s290, %s291
      %p300 = scmp.eq.s32.totalorder %s28, 0
      %p301 = por %p299, %p300
      %p302 = scmp.ne.s32.totalorder %s290, %s291
      %p303 = scmp.eq.s32.totalorder %s29, 3
      %p304 = por %p302, %p303
      %p306 = scmp.ne.s32.totalorder %s291, %s305
      %p307 = scmp.eq.s32.totalorder %s29, 0
      %p308 = por %p306, %p307
      %s310 = sadd.s32 %s309, 1
      %p313 = scmp.eq.s32.totalorder %s23, 3
      %p314 = scmp.ne.s32.totalorder %s309, %s311
      %p315 = scmp.eq.s32.totalorder %s23, 0
      %p316 = por %p314, %p315
      %p317 = scmp.ne.s32.totalorder %s309, %s311
      %p318 = scmp.eq.s32.totalorder %s28, 3
      %p319 = por %p317, %p318
      %p320 = scmp.ne.s32.totalorder %s311, %s312
      %p321 = scmp.eq.s32.totalorder %s28, 0
      %p322 = por %p320, %p321
      %p323 = scmp.ne.s32.totalorder %s311, %s312
      %p324 = scmp.eq.s32.totalorder %s29, 3
      %p325 = por %p323, %p324
      %p327 = scmp.ne.s32.totalorder %s312, %s326
      %p328 = scmp.eq.s32.totalorder %s29, 0
      %p329 = por %p327, %p328
      %s330 = ssub.s32 %s23, %s30
      %p331 = scmp.eq.s32.totalorder %s330, 0
      %s333 = sadd.s32 %s332, 1
      %s334 = scalar_select %p331, %s332, %s333
      %p337 = pneg %p331
      %p338 = scmp.eq.s32.totalorder %s23, 3
      %p339 = por %p337, %p338
      %p340 = scmp.ne.s32.totalorder %s332, %s335
      %p341 = scmp.eq.s32.totalorder %s23, 0
      %p342 = por %p340, %p341
      %p343 = scmp.ne.s32.totalorder %s332, %s335
      %p344 = scmp.eq.s32.totalorder %s28, 3
      %p345 = por %p343, %p344
      %p346 = scmp.ne.s32.totalorder %s335, %s336
      %p347 = scmp.eq.s32.totalorder %s28, 0
      %p348 = por %p346, %p347
      %p349 = scmp.ne.s32.totalorder %s335, %s336
      %p350 = scmp.eq.s32.totalorder %s29, 3
      %p351 = por %p349, %p350
      %p353 = scmp.ne.s32.totalorder %s336, %s352
      %p354 = scmp.eq.s32.totalorder %s29, 0
      %p355 = por %p353, %p354
      %p356 = scmp.le.s32.totalorder 1, %s23
      %p357 = scmp.lt.s32.totalorder %s23, 5
      %p358 = pnand %p356, %p357
      %p359 = pneg %p358
      // Predicated region
      $region9: #{gab_forward.1} parent=5 // pred_check
        _
      $region10: #{gab_forward.1} parent=5 // pred_check_branch
        %361 = sbr.rel (%p358) target = $region12
      $region11: #{gab_forward.1} parent=5 // pred_region
        %s362 = ssub.s32 %s23, 1
        // Predicated region
        $region13: #{gab_forward.1} parent=11 // pred_check
          %p363 = pneg %p44
        $region14: #{gab_forward.1} parent=11 // pred_check_branch
          %365 = sbr.rel (%p363) target = $region16
        $region15: #{gab_forward.1} parent=11 // pred_region
          _
        $region16: #{gab_forward.1} parent=11 // pred_fallthru
          _
        // Predicated region
        $region17: #{gab_forward.1} parent=11 // pred_check
          %p366 = pneg %p91
        $region18: #{gab_forward.1} parent=11 // pred_check_branch
          %368 = sbr.rel (%p366) target = $region20
        $region19: #{gab_forward.1} parent=11 // pred_region
          _
        $region20: #{gab_forward.1} parent=11 // pred_fallthru
          _
        // Predicated region
        $region21: #{gab_forward.1} parent=11 // pred_check
          %p369 = pneg %p112
        $region22: #{gab_forward.1} parent=11 // pred_check_branch
          %371 = sbr.rel (%p369) target = $region24
        $region23: #{gab_forward.1} parent=11 // pred_region
          _
        $region24: #{gab_forward.1} parent=11 // pred_fallthru
          _
        // Predicated region
        $region25: #{gab_forward.1} parent=11 // pred_check
          %p372 = pneg %p133
        $region26: #{gab_forward.1} parent=11 // pred_check_branch
          %374 = sbr.rel (%p372) target = $region28
        $region27: #{gab_forward.1} parent=11 // pred_region
          _
        $region28: #{gab_forward.1} parent=11 // pred_fallthru
          _
        // Predicated region
        $region29: #{gab_forward.1} parent=11 // pred_check
          %p375 = pneg %p154
        $region30: #{gab_forward.1} parent=11 // pred_check_branch
          %377 = sbr.rel (%p375) target = $region32
        $region31: #{gab_forward.1} parent=11 // pred_region
          _
        $region32: #{gab_forward.1} parent=11 // pred_fallthru
          _
        // Predicated region
        $region33: #{gab_forward.1} parent=11 // pred_check
          %p378 = pneg %p175
        $region34: #{gab_forward.1} parent=11 // pred_check_branch
          %380 = sbr.rel (%p378) target = $region36
        $region35: #{gab_forward.1} parent=11 // pred_region
          _
        $region36: #{gab_forward.1} parent=11 // pred_fallthru
          _
        // Predicated region
        $region37: #{gab_forward.1} parent=11 // pred_check
          %p381 = pneg %p196
        $region38: #{gab_forward.1} parent=11 // pred_check_branch
          %383 = sbr.rel (%p381) target = $region40
        $region39: #{gab_forward.1} parent=11 // pred_region
          _
        $region40: #{gab_forward.1} parent=11 // pred_fallthru
          _
        // Predicated region
        $region41: #{gab_forward.1} parent=11 // pred_check
          %p384 = pneg %p217
        $region42: #{gab_forward.1} parent=11 // pred_check_branch
          %386 = sbr.rel (%p384) target = $region44
        $region43: #{gab_forward.1} parent=11 // pred_region
          _
        $region44: #{gab_forward.1} parent=11 // pred_fallthru
          _
        // Predicated region
        $region45: #{gab_forward.1} parent=11 // pred_check
          %p387 = pneg %p238
        $region46: #{gab_forward.1} parent=11 // pred_check_branch
          %389 = sbr.rel (%p387) target = $region48
        $region47: #{gab_forward.1} parent=11 // pred_region
          _
        $region48: #{gab_forward.1} parent=11 // pred_fallthru
          _
        // Predicated region
        $region49: #{gab_forward.1} parent=11 // pred_check
          %p390 = pneg %p259
        $region50: #{gab_forward.1} parent=11 // pred_check_branch
          %392 = sbr.rel (%p390) target = $region52
        $region51: #{gab_forward.1} parent=11 // pred_region
          _
        $region52: #{gab_forward.1} parent=11 // pred_fallthru
          _
        // Predicated region
        $region53: #{gab_forward.1} parent=11 // pred_check
          %p393 = pneg %p280
        $region54: #{gab_forward.1} parent=11 // pred_check_branch
          %395 = sbr.rel (%p393) target = $region56
        $region55: #{gab_forward.1} parent=11 // pred_region
          _
        $region56: #{gab_forward.1} parent=11 // pred_fallthru
          _
        // Predicated region
        $region57: #{gab_forward.1} parent=11 // pred_check
          %p396 = pneg %p301
        $region58: #{gab_forward.1} parent=11 // pred_check_branch
          %398 = sbr.rel (%p396) target = $region60
        $region59: #{gab_forward.1} parent=11 // pred_region
          _
        $region60: #{gab_forward.1} parent=11 // pred_fallthru
          _
        // Predicated region
        $region61: #{gab_forward.1} parent=11 // pred_check
          %p399 = pneg %p322
        $region62: #{gab_forward.1} parent=11 // pred_check_branch
          %401 = sbr.rel (%p399) target = $region64
        $region63: #{gab_forward.1} parent=11 // pred_region
          _
        $region64: #{gab_forward.1} parent=11 // pred_fallthru
          _
      $region12: #{gab_forward.1} parent=5 // pred_fallthru
        _
      %p402 = scmp.lt.s32.totalorder %s23, 4
      // Predicated region
      $region65: #{gab_forward.1} parent=5 // pred_check
        %p403 = pneg %p402
      $region66: #{gab_forward.1} parent=5 // pred_check_branch
        %405 = sbr.rel (%p403) target = $region68
      $region67: #{gab_forward.1} parent=5 // pred_region
        // Predicated region
        $region69: #{gab_forward.1} parent=67 // pred_check
          %p406 = pneg %p64
        $region70: #{gab_forward.1} parent=67 // pred_check_branch
          %408 = sbr.rel (%p406) target = $region72
        $region71: #{gab_forward.1} parent=67 // pred_region
          %s409 = smul.u32 2, %s23
          %p410 = scmp.lt.s32.totalorder %s409, 7
          %s411 = scalar_select %p410, %s409, 7
          %s412 = smul.addr %s411, 2
          %s413 = smul.addr %s412, 4
          %s414 = scalar_lea.vmem %s1, %s413
          %s415 = smul.u32 2, %s23
        $region72: #{gab_forward.1} parent=67 // pred_fallthru
          _
      $region68: #{gab_forward.1} parent=5 // pred_fallthru
        _
      %p416 = scmp.le.s32.totalorder 1, %s23
      %p417 = scmp.lt.s32.totalorder %s23, 5
      %p418 = pnand %p416, %p417
      %p419 = pneg %p418
      // Predicated region
      $region73: #{gab_forward.1} parent=5 // pred_check
        _
      $region74: #{gab_forward.1} parent=5 // pred_check_branch
        %421 = sbr.rel (%p418) target = $region76
      $region75: #{gab_forward.1} parent=5 // pred_region
        %s422 = ssub.s32 %s23, 1
        %p423 = pneg %p44
        %p424 = pneg %p41
        %s425 = smul.u32 2, %s28
        %p426 = scmp.lt.s32.totalorder %s425, 7
        %s427 = scalar_select %p426, %s425, 7
        %s428 = smul.addr %s427, 2
        %s429 = smul.addr %s428, 4
        %s430 = scalar_lea.vmem %s1, %s429
        %p431 = pneg %p70
        %p432 = pneg %p67
        %p433 = pneg %p91
        %p434 = pneg %p88
        %p435 = pneg %p112
        %p436 = pneg %p109
        %p437 = pneg %p133
        %p438 = pneg %p130
        %p439 = pneg %p154
        %p440 = pneg %p151
        %p441 = pneg %p175
        %p442 = pneg %p172
        %p443 = pneg %p196
        %p444 = pneg %p193
        %p445 = pneg %p217
        %p446 = pneg %p214
        %p447 = pneg %p238
        %p448 = pneg %p235
        %p449 = pneg %p259
        %p450 = pneg %p256
        %p451 = pneg %p280
        %p452 = pneg %p277
        %p453 = pneg %p301
        %p454 = pneg %p298
        %p455 = pneg %p322
        %p456 = pneg %p319
        %p457 = pneg %p348
        %p458 = pneg %p345
        %s459 = sand.u32 %s335, 1
        %s460 = scalar_lea.sflag [#allocation3], %s459
        %s461 = sand.u32 %s335, 1
        %s462 = smul.addr %s461, 32
        %s463 = scalar_lea.vmem [#allocation2], %s462
        %s464 = smul.u32 2, %s28
        %p465 = scmp.lt.s32.totalorder %s464, 7
        %s466 = scalar_select %p465, %s464, 7
        %s467 = smul.addr %s466, 2
        %s468 = smul.addr %s467, 4
        %s469 = scalar_lea.vmem %s1, %s468
        %s470 = smul.u32 2, %s28
        %s471 = smul.u32 2, %s28
        %v473 = vld [vmem:[%s469] sm:$0xf]
        %v474 = vld [vmem:[%s469 + $0x4] sm:$0xf]
        %v475 = vld [vmem:[%s469 + $0x8] sm:$0xf]
        %v476 = vld [vmem:[%s469 + $0xc] sm:$0xf]
        %v477 = vld [vmem:[%s0] sm:$0xff]
        %v478 = vld [vmem:[%s6] sm:$0xf]
        %v479 = vld [vmem:[%s6 + $0x4] sm:$0xf]
        %v480 = vld [vmem:[%s6 + $0x8] sm:$0xf]
        %v481 = vld [vmem:[%s6 + $0xc] sm:$0xf]
        %v482 = vld [vmem:[%s6 + $0x10] sm:$0xf]
        %v483 = vld [vmem:[%s6 + $0x14] sm:$0xf]
        %v484 = vld [vmem:[%s6 + $0x18] sm:$0xf]
        %v485 = vld [vmem:[%s6 + $0x1c] sm:$0xf]
        %v486 = vld [vmem:[%s7] sm:$0x3]
        %v487 = vld [vmem:[%s12] sm:$0xf]
        %v488 = vld [vmem:[%s12 + $0x4] sm:$0xf]
        %v489 = vld [vmem:[%s12 + $0x8] sm:$0xf]
        %v490 = vld [vmem:[%s12 + $0xc] sm:$0xf]
        %v491 = vld [vmem:[%s12 + $0x10] sm:$0xf]
        %v492 = vld [vmem:[%s12 + $0x14] sm:$0xf]
        %v493 = vld [vmem:[%s12 + $0x18] sm:$0xf]
        %v494 = vld [vmem:[%s12 + $0x1c] sm:$0xf]
        %v495 = vld [vmem:[%s13] sm:$0x3]
        %v496 = vld [vmem:[%s2] sm:$0xf]
        %v497 = vld [vmem:[%s2 + $0x4] sm:$0xf]
        %v498 = vld [vmem:[%s2 + $0x8] sm:$0xf]
        %v499 = vld [vmem:[%s2 + $0xc] sm:$0xf]
        %v500 = vld [vmem:[%s3] sm:$0x1]
        %v501 = vld [vmem:[%s4] sm:$0xf]
        %v502 = vld [vmem:[%s4 + $0x4] sm:$0xf]
        %v503 = vld [vmem:[%s4 + $0x8] sm:$0xf]
        %v504 = vld [vmem:[%s4 + $0xc] sm:$0xf]
        %v505 = vld [vmem:[%s5] sm:$0x1]
        %v506 = vpack.c.bf16 %v477, %v477
        %v508 = vlaneseq
        %v509 = vshrl.u32 %v508, 7
        %v510 = vsub.s32 0, %v509
        %v511 = vrot.slane %v500, %v510
        %v517 = vunpack.c.l.b16 %v496
        %v518 = vunpack.c.l.b16 %v497
        %v519 = vunpack.c.l.b16 %v498
        %v520 = vunpack.c.l.b16 %v499
        %v521 = vpack.c.b16 %v518, %v517
        %v522 = vpack.c.b16 %v520, %v519
        %vm525 = vcmask 261120
        %v527 = vsel %vm525, %v506, 0
        %529 = vmatprep.subr.bf16.mxu0 0
        %530 = vmatpush1.bf16.msra.mxu0 %v521
        %531 = vmatprep.subr.bf16.mxu0 0
        %532 = vmatpush1.bf16.msra.mxu0 %v522
        %533 = vmatprep.subr.bf16.mxu0 0
        %534 = vmatpush1.bf16.msra.mxu0 0
        %535 = vmatprep.subr.bf16.mxu0 0
        %536 = vmatpush1.bf16.msra.mxu0 0
        %537 = vmatprep.subr.bf16.mxu0 0
        %538 = vmatpush1.bf16.msra.mxu0 0
        %539 = vmatprep.subr.bf16.mxu0 0
        %540 = vmatpush1.bf16.msra.mxu0 0
        %541 = vmatprep.subr.bf16.mxu0 0
        %542 = vmatpush1.bf16.msra.mxu0 0
        %543 = vmatprep.subr.bf16.mxu0 0
        %544 = vmatpush1.bf16.msra.mxu0 0
        %545 = vmatprep.subr.bf16.mxu0 0
        %546 = vmatpush1.bf16.msra.mxu0 0
        %547 = vmatprep.subr.bf16.mxu0 0
        %548 = vmatpush1.bf16.msra.mxu0 0
        %549 = vmatprep.subr.bf16.mxu0 0
        %550 = vmatpush1.bf16.msra.mxu0 0
        %551 = vmatprep.subr.bf16.mxu0 0
        %552 = vmatpush1.bf16.msra.mxu0 0
        %553 = vmatprep.subr.bf16.mxu0 0
        %554 = vmatpush1.bf16.msra.mxu0 0
        %555 = vmatprep.subr.bf16.mxu0 0
        %556 = vmatpush1.bf16.msra.mxu0 0
        %557 = vmatprep.subr.bf16.mxu0 0
        %558 = vmatpush1.bf16.msra.mxu0 0
        %559 = vmatprep.subr.bf16.mxu0 0
        %560 = vmatpush1.bf16.msra.mxu0 0
        %561 = vmatprep.mubr.bf16.mxu0 0
        %562 = vmatmul.mubr.bf16.gmra.mrb[0].mxu0 %v527
        %v563 = vpop.f32.mrb[0].mxu0
        %v564 = vadd.f32 %v511, %v563
        %v565 = vpop.f32.mrb[0].mxu0
        %v566 = vpop.f32.mrb[0].mxu0
        %v567 = vpop.f32.mrb[0].mxu0
        %568 = vdwg.mxu0
        %v570 = vlaneseq
        %v571 = vshrl.u32 %v570, 7
        %v572 = vsub.s32 0, %v571
        %v573 = vrot.slane %v505, %v572
        %v579 = vunpack.c.l.b16 %v473
        %v580 = vunpack.c.l.b16 %v474
        %v581 = vunpack.c.l.b16 %v475
        %v582 = vunpack.c.l.b16 %v476
        %v583 = vpack.c.b16 %v580, %v579
        %v584 = vpack.c.b16 %v582, %v581
        %v589 = vunpack.c.l.b16 %v501
        %v590 = vunpack.c.l.b16 %v502
        %v591 = vunpack.c.l.b16 %v503
        %v592 = vunpack.c.l.b16 %v504
        %v593 = vpack.c.b16 %v590, %v589
        %v594 = vpack.c.b16 %v592, %v591
        %v598 = vsel %vm525, %v583, 0
        %v601 = vsel %vm525, %v584, 0
        %603 = vmatprep.subr.bf16.mxu0 0
        %604 = vmatpush1.bf16.msra.mxu0 %v593
        %605 = vmatprep.subr.bf16.mxu0 0
        %606 = vmatpush1.bf16.msra.mxu0 %v594
        %607 = vmatprep.subr.bf16.mxu0 0
        %608 = vmatpush1.bf16.msra.mxu0 0
        %609 = vmatprep.subr.bf16.mxu0 0
        %610 = vmatpush1.bf16.msra.mxu0 0
        %611 = vmatprep.subr.bf16.mxu0 0
        %612 = vmatpush1.bf16.msra.mxu0 0
        %613 = vmatprep.subr.bf16.mxu0 0
        %614 = vmatpush1.bf16.msra.mxu0 0
        %615 = vmatprep.subr.bf16.mxu0 0
        %616 = vmatpush1.bf16.msra.mxu0 0
        %617 = vmatprep.subr.bf16.mxu0 0
        %618 = vmatpush1.bf16.msra.mxu0 0
        %619 = vmatprep.subr.bf16.mxu0 0
        %620 = vmatpush1.bf16.msra.mxu0 0
        %621 = vmatprep.subr.bf16.mxu0 0
        %622 = vmatpush1.bf16.msra.mxu0 0
        %623 = vmatprep.subr.bf16.mxu0 0
        %624 = vmatpush1.bf16.msra.mxu0 0
        %625 = vmatprep.subr.bf16.mxu0 0
        %626 = vmatpush1.bf16.msra.mxu0 0
        %627 = vmatprep.subr.bf16.mxu0 0
        %628 = vmatpush1.bf16.msra.mxu0 0
        %629 = vmatprep.subr.bf16.mxu0 0
        %630 = vmatpush1.bf16.msra.mxu0 0
        %631 = vmatprep.subr.bf16.mxu0 0
        %632 = vmatpush1.bf16.msra.mxu0 0
        %633 = vmatprep.subr.bf16.mxu0 0
        %634 = vmatpush1.bf16.msra.mxu0 0
        %635 = vmatprep.mubr.bf16.mxu0 0
        %636 = vmatmul.mubr.bf16.gmra.mrb[0].mxu0 %v598
        %v637 = vpop.f32.mrb[0].mxu0
        %v638 = vadd.f32 %v573, %v637
        %v639 = vpop.f32.mrb[0].mxu0
        %v640 = vpop.f32.mrb[0].mxu0
        %v641 = vadd.f32 %v573, %v640
        %v642 = vpop.f32.mrb[0].mxu0
        %643 = vmatprep.mubr.bf16.mxu0 0
        %644 = vmatmul.mubr.bf16.gmra.mrb[0].mxu0 %v601
        %v645 = vpop.f32.mrb[0].mxu0
        %v646 = vadd.f32 %v573, %v645
        %v647 = vpop.f32.mrb[0].mxu0
        %v648 = vpop.f32.mrb[0].mxu0
        %v649 = vadd.f32 %v573, %v648
        %v650 = vpop.f32.mrb[0].mxu0
        %651 = vdwg.mxu0
        %v652 = vpack.c.bf16 %v641, %v638
        %v653 = vpack.c.bf16 %v649, %v646
        %v654 = vpack.c.bf16 %v564, %v564
        %vm655 = vcmask 64512
        %v657 = vsel %vm655, %v654, 0
        %v660 = vsel %vm655, %v652, 0
        %662 = vmatprep.subr.bf16.mxu0 0
        %663 = vmatpush1.bf16.xpose.msra.mxu0 %v660
        %664 = vmatprep.subr.bf16.mxu0 0
        %665 = vmatpush1.bf16.xpose.msra.mxu0 0
        %666 = vmatprep.subr.bf16.mxu0 0
        %667 = vmatpush1.bf16.xpose.msra.mxu0 0
        %668 = vmatprep.subr.bf16.mxu0 0
        %669 = vmatpush1.bf16.xpose.msra.mxu0 0
        %670 = vmatprep.subr.bf16.mxu0 0
        %671 = vmatpush1.bf16.xpose.msra.mxu0 0
        %672 = vmatprep.subr.bf16.mxu0 0
        %673 = vmatpush1.bf16.xpose.msra.mxu0 0
        %674 = vmatprep.subr.bf16.mxu0 0
        %675 = vmatpush1.bf16.xpose.msra.mxu0 0
        %676 = vmatprep.subr.bf16.mxu0 0
        %677 = vmatpush1.bf16.xpose.msra.mxu0 0
        %678 = vmatprep.subr.bf16.mxu0 0
        %679 = vmatpush1.bf16.xpose.msra.mxu0 0
        %680 = vmatprep.subr.bf16.mxu0 0
        %681 = vmatpush1.bf16.xpose.msra.mxu0 0
        %682 = vmatprep.subr.bf16.mxu0 0
        %683 = vmatpush1.bf16.xpose.msra.mxu0 0
        %684 = vmatprep.subr.bf16.mxu0 0
        %685 = vmatpush1.bf16.xpose.msra.mxu0 0
        %686 = vmatprep.subr.bf16.mxu0 0
        %687 = vmatpush1.bf16.xpose.msra.mxu0 0
        %688 = vmatprep.subr.bf16.mxu0 0
        %689 = vmatpush1.bf16.xpose.msra.mxu0 0
        %690 = vmatprep.subr.bf16.mxu0 0
        %691 = vmatpush1.bf16.xpose.msra.mxu0 0
        %692 = vmatprep.subr.bf16.mxu0 0
        %693 = vmatpush1.bf16.xpose.msra.mxu0 0
        %694 = vmatprep.mubr.bf16.mxu0 0
        %695 = vmatmul.mubr.bf16.gmra.mrb[0].mxu0 %v657
        %v696 = vpop.f32.mrb[0].mxu0
        %v697 = vadd.f32 0.0, %v696
        %v698 = vpop.f32.mrb[0].mxu0
        %v699 = vpop.f32.mrb[0].mxu0
        %v700 = vpop.f32.mrb[0].mxu0
        %701 = vdwg.mxu0
        %v703 = vsel %vm655, %v653, 0
        %705 = vmatprep.subr.bf16.mxu0 0
        %706 = vmatpush1.bf16.xpose.msra.mxu0 %v703
        %707 = vmatprep.subr.bf16.mxu0 0
        %708 = vmatpush1.bf16.xpose.msra.mxu0 0
        %709 = vmatprep.subr.bf16.mxu0 0
        %710 = vmatpush1.bf16.xpose.msra.mxu0 0
        %711 = vmatprep.subr.bf16.mxu0 0
        %712 = vmatpush1.bf16.xpose.msra.mxu0 0
        %713 = vmatprep.subr.bf16.mxu0 0
        %714 = vmatpush1.bf16.xpose.msra.mxu0 0
        %715 = vmatprep.subr.bf16.mxu0 0
        %716 = vmatpush1.bf16.xpose.msra.mxu0 0
        %717 = vmatprep.subr.bf16.mxu0 0
        %718 = vmatpush1.bf16.xpose.msra.mxu0 0
        %719 = vmatprep.subr.bf16.mxu0 0
        %720 = vmatpush1.bf16.xpose.msra.mxu0 0
        %721 = vmatprep.subr.bf16.mxu0 0
        %722 = vmatpush1.bf16.xpose.msra.mxu0 0
        %723 = vmatprep.subr.bf16.mxu0 0
        %724 = vmatpush1.bf16.xpose.msra.mxu0 0
        %725 = vmatprep.subr.bf16.mxu0 0
        %726 = vmatpush1.bf16.xpose.msra.mxu0 0
        %727 = vmatprep.subr.bf16.mxu0 0
        %728 = vmatpush1.bf16.xpose.msra.mxu0 0
        %729 = vmatprep.subr.bf16.mxu0 0
        %730 = vmatpush1.bf16.xpose.msra.mxu0 0
        %731 = vmatprep.subr.bf16.mxu0 0
        %732 = vmatpush1.bf16.xpose.msra.mxu0 0
        %733 = vmatprep.subr.bf16.mxu0 0
        %734 = vmatpush1.bf16.xpose.msra.mxu0 0
        %735 = vmatprep.subr.bf16.mxu0 0
        %736 = vmatpush1.bf16.xpose.msra.mxu0 0
        %737 = vmatprep.mubr.bf16.mxu0 0
        %738 = vmatmul.mubr.bf16.gmra.mrb[0].mxu0 %v657
        %v739 = vpop.f32.mrb[0].mxu0
        %v740 = vadd.f32 0.0, %v739
        %v741 = vpop.f32.mrb[0].mxu0
        %v742 = vpop.f32.mrb[0].mxu0
        %v743 = vpop.f32.mrb[0].mxu0
        %744 = vdwg.mxu0
        %vm745 = vcmask 130048
        %v746 = vsel %vm745, %v697, -inf
        %747 = vmax.xlane.f32.xlu0 %v746
        %v748 = vpop.xlane.xlu0 %747
        %v749 = vsel %vm745, %v740, -inf
        %750 = vmax.xlane.f32.xlu0 %v749
        %v751 = vpop.xlane.xlu0 %750
        %v752 = vsub.f32 %v697, %v748
        %v753 = vsub.f32 %v740, %v751
        %v754 = vmul.f32 %v752, 1.442695
        %v755 = vpow.pop %v754
        %v756 = vmul.f32 %v753, 1.442695
        %v757 = vpow.pop %v756
        %v758 = vsel %vm745, %v755, 0.0
        %759 = vadd.xlane.f32.xlu0 %v758
        %v760 = vpop.xlane.xlu0 %759
        %v761 = vsel %vm745, %v757, 0.0
        %762 = vadd.xlane.f32.xlu0 %v761
        %v763 = vpop.xlane.xlu0 %762
        %v764 = vrcp.pop %v760
        %v765 = vrcp.pop %v763
        %v766 = vmul.f32 %v755, %v764
        %v767 = vmul.f32 %v757, %v765
        %v768 = vpack.c.bf16 %v766, %v766
        %v769 = vpack.c.bf16 %v767, %v767
        %771 = vrot.lane.b32.xlu0 %v652, 96
        %v772 = vpop.permute.xlu0 %771
        %v775 = vsel %vm745, %v768, 0
        %777 = vmatprep.subr.bf16.mxu0 0
        %778 = vmatpush1.bf16.msra.mxu0 %v772
        %779 = vmatprep.subr.bf16.mxu0 0
        %780 = vmatpush1.bf16.msra.mxu0 0
        %781 = vmatprep.subr.bf16.mxu0 0
        %782 = vmatpush1.bf16.msra.mxu0 0
        %783 = vmatprep.subr.bf16.mxu0 0
        %784 = vmatpush1.bf16.msra.mxu0 0
        %785 = vmatprep.subr.bf16.mxu0 0
        %786 = vmatpush1.bf16.msra.mxu0 0
        %787 = vmatprep.subr.bf16.mxu0 0
        %788 = vmatpush1.bf16.msra.mxu0 0
        %789 = vmatprep.subr.bf16.mxu0 0
        %790 = vmatpush1.bf16.msra.mxu0 0
        %791 = vmatprep.subr.bf16.mxu0 0
        %792 = vmatpush1.bf16.msra.mxu0 0
        %793 = vmatprep.subr.bf16.mxu0 0
        %794 = vmatpush1.bf16.msra.mxu0 0
        %795 = vmatprep.subr.bf16.mxu0 0
        %796 = vmatpush1.bf16.msra.mxu0 0
        %797 = vmatprep.subr.bf16.mxu0 0
        %798 = vmatpush1.bf16.msra.mxu0 0
        %799 = vmatprep.subr.bf16.mxu0 0
        %800 = vmatpush1.bf16.msra.mxu0 0
        %801 = vmatprep.subr.bf16.mxu0 0
        %802 = vmatpush1.bf16.msra.mxu0 0
        %803 = vmatprep.subr.bf16.mxu0 0
        %804 = vmatpush1.bf16.msra.mxu0 0
        %805 = vmatprep.subr.bf16.mxu0 0
        %806 = vmatpush1.bf16.msra.mxu0 0
        %807 = vmatprep.subr.bf16.mxu0 0
        %808 = vmatpush1.bf16.msra.mxu0 0
        %809 = vmatprep.mubr.bf16.mxu0 0
        %810 = vmatmul.mubr.bf16.gmra.mrb[0].mxu0 %v775
        %v811 = vpop.f32.mrb[0].mxu0
        %v812 = vadd.f32 0.0, %v811
        %v813 = vpop.f32.mrb[0].mxu0
        %v814 = vpop.f32.mrb[0].mxu0
        %v815 = vpop.f32.mrb[0].mxu0
        %816 = vdwg.mxu0
        %818 = vrot.lane.b32.xlu0 %v653, 96
        %v819 = vpop.permute.xlu0 %818
        %v822 = vsel %vm745, %v769, 0
        %824 = vmatprep.subr.bf16.mxu0 0
        %825 = vmatpush1.bf16.msra.mxu0 %v819
        %826 = vmatprep.subr.bf16.mxu0 0
        %827 = vmatpush1.bf16.msra.mxu0 0
        %828 = vmatprep.subr.bf16.mxu0 0
        %829 = vmatpush1.bf16.msra.mxu0 0
        %830 = vmatprep.subr.bf16.mxu0 0
        %831 = vmatpush1.bf16.msra.mxu0 0
        %832 = vmatprep.subr.bf16.mxu0 0
        %833 = vmatpush1.bf16.msra.mxu0 0
        %834 = vmatprep.subr.bf16.mxu0 0
        %835 = vmatpush1.bf16.msra.mxu0 0
        %836 = vmatprep.subr.bf16.mxu0 0
        %837 = vmatpush1.bf16.msra.mxu0 0
        %838 = vmatprep.subr.bf16.mxu0 0
        %839 = vmatpush1.bf16.msra.mxu0 0
        %840 = vmatprep.subr.bf16.mxu0 0
        %841 = vmatpush1.bf16.msra.mxu0 0
        %842 = vmatprep.subr.bf16.mxu0 0
        %843 = vmatpush1.bf16.msra.mxu0 0
        %844 = vmatprep.subr.bf16.mxu0 0
        %845 = vmatpush1.bf16.msra.mxu0 0
        %846 = vmatprep.subr.bf16.mxu0 0
        %847 = vmatpush1.bf16.msra.mxu0 0
        %848 = vmatprep.subr.bf16.mxu0 0
        %849 = vmatpush1.bf16.msra.mxu0 0
        %850 = vmatprep.subr.bf16.mxu0 0
        %851 = vmatpush1.bf16.msra.mxu0 0
        %852 = vmatprep.subr.bf16.mxu0 0
        %853 = vmatpush1.bf16.msra.mxu0 0
        %854 = vmatprep.subr.bf16.mxu0 0
        %855 = vmatpush1.bf16.msra.mxu0 0
        %856 = vmatprep.mubr.bf16.mxu0 0
        %857 = vmatmul.mubr.bf16.gmra.mrb[0].mxu0 %v822
        %v858 = vpop.f32.mrb[0].mxu0
        %v859 = vadd.f32 0.0, %v858
        %v860 = vpop.f32.mrb[0].mxu0
        %v861 = vpop.f32.mrb[0].mxu0
        %v862 = vpop.f32.mrb[0].mxu0
        %863 = vdwg.mxu0
        %865 = vrot.lane.b32.xlu0 %v654, 120
        %v866 = vpop.permute.xlu0 %865
        %867 = vrot.lane.b32.xlu0 %v652, 120
        %v868 = vpop.permute.xlu0 %867
        %v870 = vsel %vm655, %v866, 0
        %v873 = vsel %vm655, %v868, 0
        %875 = vmatprep.subr.bf16.mxu0 0
        %876 = vmatpush1.bf16.xpose.msra.mxu0 %v873
        %877 = vmatprep.subr.bf16.mxu0 0
        %878 = vmatpush1.bf16.xpose.msra.mxu0 0
        %879 = vmatprep.subr.bf16.mxu0 0
        %880 = vmatpush1.bf16.xpose.msra.mxu0 0
        %881 = vmatprep.subr.bf16.mxu0 0
        %882 = vmatpush1.bf16.xpose.msra.mxu0 0
        %883 = vmatprep.subr.bf16.mxu0 0
        %884 = vmatpush1.bf16.xpose.msra.mxu0 0
        %885 = vmatprep.subr.bf16.mxu0 0
        %886 = vmatpush1.bf16.xpose.msra.mxu0 0
        %887 = vmatprep.subr.bf16.mxu0 0
        %888 = vmatpush1.bf16.xpose.msra.mxu0 0
        %889 = vmatprep.subr.bf16.mxu0 0
        %890 = vmatpush1.bf16.xpose.msra.mxu0 0
        %891 = vmatprep.subr.bf16.mxu0 0
        %892 = vmatpush1.bf16.xpose.msra.mxu0 0
        %893 = vmatprep.subr.bf16.mxu0 0
        %894 = vmatpush1.bf16.xpose.msra.mxu0 0
        %895 = vmatprep.subr.bf16.mxu0 0
        %896 = vmatpush1.bf16.xpose.msra.mxu0 0
        %897 = vmatprep.subr.bf16.mxu0 0
        %898 = vmatpush1.bf16.xpose.msra.mxu0 0
        %899 = vmatprep.subr.bf16.mxu0 0
        %900 = vmatpush1.bf16.xpose.msra.mxu0 0
        %901 = vmatprep.subr.bf16.mxu0 0
        %902 = vmatpush1.bf16.xpose.msra.mxu0 0
        %903 = vmatprep.subr.bf16.mxu0 0
        %904 = vmatpush1.bf16.xpose.msra.mxu0 0
        %905 = vmatprep.subr.bf16.mxu0 0
        %906 = vmatpush1.bf16.xpose.msra.mxu0 0
        %907 = vmatprep.mubr.bf16.mxu0 0
        %908 = vmatmul.mubr.bf16.gmra.mrb[0].mxu0 %v870
        %v909 = vpop.f32.mrb[0].mxu0
        %v910 = vadd.f32 0.0, %v909
        %v911 = vpop.f32.mrb[0].mxu0
        %v912 = vpop.f32.mrb[0].mxu0
        %v913 = vpop.f32.mrb[0].mxu0
        %914 = vdwg.mxu0
        %915 = vrot.lane.b32.xlu0 %v653, 120
        %v916 = vpop.permute.xlu0 %915
        %v918 = vsel %vm655, %v916, 0
        %920 = vmatprep.subr.bf16.mxu0 0
        %921 = vmatpush1.bf16.xpose.msra.mxu0 %v918
        %922 = vmatprep.subr.bf16.mxu0 0
        %923 = vmatpush1.bf16.xpose.msra.mxu0 0
        %924 = vmatprep.subr.bf16.mxu0 0
        %925 = vmatpush1.bf16.xpose.msra.mxu0 0
        %926 = vmatprep.subr.bf16.mxu0 0
        %927 = vmatpush1.bf16.xpose.msra.mxu0 0
        %928 = vmatprep.subr.bf16.mxu0 0
        %929 = vmatpush1.bf16.xpose.msra.mxu0 0
        %930 = vmatprep.subr.bf16.mxu0 0
        %931 = vmatpush1.bf16.xpose.msra.mxu0 0
        %932 = vmatprep.subr.bf16.mxu0 0
        %933 = vmatpush1.bf16.xpose.msra.mxu0 0
        %934 = vmatprep.subr.bf16.mxu0 0
        %935 = vmatpush1.bf16.xpose.msra.mxu0 0
        %936 = vmatprep.subr.bf16.mxu0 0
        %937 = vmatpush1.bf16.xpose.msra.mxu0 0
        %938 = vmatprep.subr.bf16.mxu0 0
        %939 = vmatpush1.bf16.xpose.msra.mxu0 0
        %940 = vmatprep.subr.bf16.mxu0 0
        %941 = vmatpush1.bf16.xpose.msra.mxu0 0
        %942 = vmatprep.subr.bf16.mxu0 0
        %943 = vmatpush1.bf16.xpose.msra.mxu0 0
        %944 = vmatprep.subr.bf16.mxu0 0
        %945 = vmatpush1.bf16.xpose.msra.mxu0 0
        %946 = vmatprep.subr.bf16.mxu0 0
        %947 = vmatpush1.bf16.xpose.msra.mxu0 0
        %948 = vmatprep.subr.bf16.mxu0 0
        %949 = vmatpush1.bf16.xpose.msra.mxu0 0
        %950 = vmatprep.subr.bf16.mxu0 0
        %951 = vmatpush1.bf16.xpose.msra.mxu0 0
        %952 = vmatprep.mubr.bf16.mxu0 0
        %953 = vmatmul.mubr.bf16.gmra.mrb[0].mxu0 %v870
        %v954 = vpop.f32.mrb[0].mxu0
        %v955 = vadd.f32 0.0, %v954
        %v956 = vpop.f32.mrb[0].mxu0
        %v957 = vpop.f32.mrb[0].mxu0
        %v958 = vpop.f32.mrb[0].mxu0
        %959 = vdwg.mxu0
        %v960 = vsel %vm745, %v910, -inf
        %961 = vmax.xlane.f32.xlu0 %v960
        %v962 = vpop.xlane.xlu0 %961
        %v963 = vsel %vm745, %v955, -inf
        %964 = vmax.xlane.f32.xlu0 %v963
        %v965 = vpop.xlane.xlu0 %964
        %v966 = vsub.f32 %v910, %v962
        %v967 = vsub.f32 %v955, %v965
        %v968 = vmul.f32 %v966, 1.442695
        %v969 = vpow.pop %v968
        %v970 = vmul.f32 %v967, 1.442695
        %v971 = vpow.pop %v970
        %v972 = vsel %vm745, %v969, 0.0
        %973 = vadd.xlane.f32.xlu0 %v972
        %v974 = vpop.xlane.xlu0 %973
        %v975 = vsel %vm745, %v971, 0.0
        %976 = vadd.xlane.f32.xlu0 %v975
        %v977 = vpop.xlane.xlu0 %976
        %v978 = vrcp.pop %v974
        %v979 = vrcp.pop %v977
        %v980 = vmul.f32 %v969, %v978
        %v981 = vmul.f32 %v971, %v979
        %v982 = vpack.c.bf16 %v980, %v980
        %v983 = vpack.c.bf16 %v981, %v981
        %984 = vrot.lane.b32.xlu0 %v652, 88
        %v985 = vpop.permute.xlu0 %984
        %v988 = vsel %vm745, %v982, 0
        %990 = vmatprep.subr.bf16.mxu0 0
        %991 = vmatpush1.bf16.msra.mxu0 %v985
        %992 = vmatprep.subr.bf16.mxu0 0
        %993 = vmatpush1.bf16.msra.mxu0 0
        %994 = vmatprep.subr.bf16.mxu0 0
        %995 = vmatpush1.bf16.msra.mxu0 0
        %996 = vmatprep.subr.bf16.mxu0 0
        %997 = vmatpush1.bf16.msra.mxu0 0
        %998 = vmatprep.subr.bf16.mxu0 0
        %999 = vmatpush1.bf16.msra.mxu0 0
        %1000 = vmatprep.subr.bf16.mxu0 0
        %1001 = vmatpush1.bf16.msra.mxu0 0
        %1002 = vmatprep.subr.bf16.mxu0 0
        %1003 = vmatpush1.bf16.msra.mxu0 0
        %1004 = vmatprep.subr.bf16.mxu0 0
        %1005 = vmatpush1.bf16.msra.mxu0 0
        %1006 = vmatprep.subr.bf16.mxu0 0
        %1007 = vmatpush1.bf16.msra.mxu0 0
        %1008 = vmatprep.subr.bf16.mxu0 0
        %1009 = vmatpush1.bf16.msra.mxu0 0
        %1010 = vmatprep.subr.bf16.mxu0 0
        %1011 = vmatpush1.bf16.msra.mxu0 0
        %1012 = vmatprep.subr.bf16.mxu0 0
        %1013 = vmatpush1.bf16.msra.mxu0 0
        %1014 = vmatprep.subr.bf16.mxu0 0
        %1015 = vmatpush1.bf16.msra.mxu0 0
        %1016 = vmatprep.subr.bf16.mxu0 0
        %1017 = vmatpush1.bf16.msra.mxu0 0
        %1018 = vmatprep.subr.bf16.mxu0 0
        %1019 = vmatpush1.bf16.msra.mxu0 0
        %1020 = vmatprep.subr.bf16.mxu0 0
        %1021 = vmatpush1.bf16.msra.mxu0 0
        %1022 = vmatprep.mubr.bf16.mxu0 0
        %1023 = vmatmul.mubr.bf16.gmra.mrb[0].mxu0 %v988
        %v1024 = vpop.f32.mrb[0].mxu0
        %v1025 = vadd.f32 0.0, %v1024
        %v1026 = vpop.f32.mrb[0].mxu0
        %v1027 = vpop.f32.mrb[0].mxu0
        %v1028 = vpop.f32.mrb[0].mxu0
        %1029 = vdwg.mxu0
        %1030 = vrot.lane.b32.xlu0 %v653, 88
        %v1031 = vpop.permute.xlu0 %1030
        %v1034 = vsel %vm745, %v983, 0
        %1036 = vmatprep.subr.bf16.mxu0 0
        %1037 = vmatpush1.bf16.msra.mxu0 %v1031
        %1038 = vmatprep.subr.bf16.mxu0 0
        %1039 = vmatpush1.bf16.msra.mxu0 0
        %1040 = vmatprep.subr.bf16.mxu0 0
        %1041 = vmatpush1.bf16.msra.mxu0 0
        %1042 = vmatprep.subr.bf16.mxu0 0
        %1043 = vmatpush1.bf16.msra.mxu0 0
        %1044 = vmatprep.subr.bf16.mxu0 0
        %1045 = vmatpush1.bf16.msra.mxu0 0
        %1046 = vmatprep.subr.bf16.mxu0 0
        %1047 = vmatpush1.bf16.msra.mxu0 0
        %1048 = vmatprep.subr.bf16.mxu0 0
        %1049 = vmatpush1.bf16.msra.mxu0 0
        %1050 = vmatprep.subr.bf16.mxu0 0
        %1051 = vmatpush1.bf16.msra.mxu0 0
        %1052 = vmatprep.subr.bf16.mxu0 0
        %1053 = vmatpush1.bf16.msra.mxu0 0
        %1054 = vmatprep.subr.bf16.mxu0 0
        %1055 = vmatpush1.bf16.msra.mxu0 0
        %1056 = vmatprep.subr.bf16.mxu0 0
        %1057 = vmatpush1.bf16.msra.mxu0 0
        %1058 = vmatprep.subr.bf16.mxu0 0
        %1059 = vmatpush1.bf16.msra.mxu0 0
        %1060 = vmatprep.subr.bf16.mxu0 0
        %1061 = vmatpush1.bf16.msra.mxu0 0
        %1062 = vmatprep.subr.bf16.mxu0 0
        %1063 = vmatpush1.bf16.msra.mxu0 0
        %1064 = vmatprep.subr.bf16.mxu0 0
        %1065 = vmatpush1.bf16.msra.mxu0 0
        %1066 = vmatprep.subr.bf16.mxu0 0
        %1067 = vmatpush1.bf16.msra.mxu0 0
        %1068 = vmatprep.mubr.bf16.mxu0 0
        %1069 = vmatmul.mubr.bf16.gmra.mrb[0].mxu0 %v1034
        %v1070 = vpop.f32.mrb[0].mxu0
        %v1071 = vadd.f32 0.0, %v1070
        %v1072 = vpop.f32.mrb[0].mxu0
        %v1073 = vpop.f32.mrb[0].mxu0
        %v1074 = vpop.f32.mrb[0].mxu0
        %1075 = vdwg.mxu0
        %1076 = vrot.lane.b32.xlu0 %v654, 112
        %v1077 = vpop.permute.xlu0 %1076
        %1078 = vrot.lane.b32.xlu0 %v652, 112
        %v1079 = vpop.permute.xlu0 %1078
        %v1081 = vsel %vm655, %v1077, 0
        %v1084 = vsel %vm655, %v1079, 0
        %1086 = vmatprep.subr.bf16.mxu0 0
        %1087 = vmatpush1.bf16.xpose.msra.mxu0 %v1084
        %1088 = vmatprep.subr.bf16.mxu0 0
        %1089 = vmatpush1.bf16.xpose.msra.mxu0 0
        %1090 = vmatprep.subr.bf16.mxu0 0
        %1091 = vmatpush1.bf16.xpose.msra.mxu0 0
        %1092 = vmatprep.subr.bf16.mxu0 0
        %1093 = vmatpush1.bf16.xpose.msra.mxu0 0
        %1094 = vmatprep.subr.bf16.mxu0 0
        %1095 = vmatpush1.bf16.xpose.msra.mxu0 0
        %1096 = vmatprep.subr.bf16.mxu0 0
        %1097 = vmatpush1.bf16.xpose.msra.mxu0 0
        %1098 = vmatprep.subr.bf16.mxu0 0
        %1099 = vmatpush1.bf16.xpose.msra.mxu0 0
        %1100 = vmatprep.subr.bf16.mxu0 0
        %1101 = vmatpush1.bf16.xpose.msra.mxu0 0
        %1102 = vmatprep.subr.bf16.mxu0 0
        %1103 = vmatpush1.bf16.xpose.msra.mxu0 0
        %1104 = vmatprep.subr.bf16.mxu0 0
        %1105 = vmatpush1.bf16.xpose.msra.mxu0 0
        %1106 = vmatprep.subr.bf16.mxu0 0
        %1107 = vmatpush1.bf16.xpose.msra.mxu0 0
        %1108 = vmatprep.subr.bf16.mxu0 0
        %1109 = vmatpush1.bf16.xpose.msra.mxu0 0
        %1110 = vmatprep.subr.bf16.mxu0 0
        %1111 = vmatpush1.bf16.xpose.msra.mxu0 0
        %1112 = vmatprep.subr.bf16.mxu0 0
        %1113 = vmatpush1.bf16.xpose.msra.mxu0 0
        %1114 = vmatprep.subr.bf16.mxu0 0
        %1115 = vmatpush1.bf16.xpose.msra.mxu0 0
        %1116 = vmatprep.subr.bf16.mxu0 0
        %1117 = vmatpush1.bf16.xpose.msra.mxu0 0
        %1118 = vmatprep.mubr.bf16.mxu0 0
        %1119 = vmatmul.mubr.bf16.gmra.mrb[0].mxu0 %v1081
        %v1120 = vpop.f32.mrb[0].mxu0
        %v1121 = vadd.f32 0.0, %v1120
        %v1122 = vpop.f32.mrb[0].mxu0
        %v1123 = vpop.f32.mrb[0].mxu0
        %v1124 = vpop.f32.mrb[0].mxu0
        %1125 = vdwg.mxu0
        %1126 = vrot.lane.b32.xlu0 %v653, 112
        %v1127 = vpop.permute.xlu0 %1126
        %v1129 = vsel %vm655, %v1127, 0
        %1131 = vmatprep.subr.bf16.mxu0 0
        %1132 = vmatpush1.bf16.xpose.msra.mxu0 %v1129
        %1133 = vmatprep.subr.bf16.mxu0 0
        %1134 = vmatpush1.bf16.xpose.msra.mxu0 0
        %1135 = vmatprep.subr.bf16.mxu0 0
        %1136 = vmatpush1.bf16.xpose.msra.mxu0 0
        %1137 = vmatprep.subr.bf16.mxu0 0
        %1138 = vmatpush1.bf16.xpose.msra.mxu0 0
        %1139 = vmatprep.subr.bf16.mxu0 0
        %1140 = vmatpush1.bf16.xpose.msra.mxu0 0
        %1141 = vmatprep.subr.bf16.mxu0 0
        %1142 = vmatpush1.bf16.xpose.msra.mxu0 0
        %1143 = vmatprep.subr.bf16.mxu0 0
        %1144 = vmatpush1.bf16.xpose.msra.mxu0 0
        %1145 = vmatprep.subr.bf16.mxu0 0
        %1146 = vmatpush1.bf16.xpose.msra.mxu0 0
        %1147 = vmatprep.subr.bf16.mxu0 0
        %1148 = vmatpush1.bf16.xpose.msra.mxu0 0
        %1149 = vmatprep.subr.bf16.mxu0 0
        %1150 = vmatpush1.bf16.xpose.msra.mxu0 0
        %1151 = vmatprep.subr.bf16.mxu0 0
        %1152 = vmatpush1.bf16.xpose.msra.mxu0 0
        %1153 = vmatprep.subr.bf16.mxu0 0
        %1154 = vmatpush1.bf16.xpose.msra.mxu0 0
        %1155 = vmatprep.subr.bf16.mxu0 0
        %1156 = vmatpush1.bf16.xpose.msra.mxu0 0
        %1157 = vmatprep.subr.bf16.mxu0 0
        %1158 = vmatpush1.bf16.xpose.msra.mxu0 0
        %1159 = vmatprep.subr.bf16.mxu0 0
        %1160 = vmatpush1.bf16.xpose.msra.mxu0 0
        %1161 = vmatprep.subr.bf16.mxu0 0
        %1162 = vmatpush1.bf16.xpose.msra.mxu0 0
        %1163 = vmatprep.mubr.bf16.mxu0 0
        %1164 = vmatmul.mubr.bf16.gmra.mrb[0].mxu0 %v1081
        %v1165 = vpop.f32.mrb[0].mxu0
        %v1166 = vadd.f32 0.0, %v1165
        %v1167 = vpop.f32.mrb[0].mxu0
        %v1168 = vpop.f32.mrb[0].mxu0
        %v1169 = vpop.f32.mrb[0].mxu0
        %1170 = vdwg.mxu0
        %v1171 = vsel %vm745, %v1121, -inf
        %1172 = vmax.xlane.f32.xlu0 %v1171
        %v1173 = vpop.xlane.xlu0 %1172
        %v1174 = vsel %vm745, %v1166, -inf
        %1175 = vmax.xlane.f32.xlu0 %v1174
        %v1176 = vpop.xlane.xlu0 %1175
        %v1177 = vsub.f32 %v1121, %v1173
        %v1178 = vsub.f32 %v1166, %v1176
        %v1179 = vmul.f32 %v1177, 1.442695
        %v1180 = vpow.pop %v1179
        %v1181 = vmul.f32 %v1178, 1.442695
        %v1182 = vpow.pop %v1181
        %v1183 = vsel %vm745, %v1180, 0.0
        %1184 = vadd.xlane.f32.xlu0 %v1183
        %v1185 = vpop.xlane.xlu0 %1184
        %v1186 = vsel %vm745, %v1182, 0.0
        %1187 = vadd.xlane.f32.xlu0 %v1186
        %v1188 = vpop.xlane.xlu0 %1187
        %v1189 = vrcp.pop %v1185
        %v1190 = vrcp.pop %v1188
        %v1191 = vmul.f32 %v1180, %v1189
        %v1192 = vmul.f32 %v1182, %v1190
        %v1193 = vpack.c.bf16 %v1191, %v1191
        %v1194 = vpack.c.bf16 %v1192, %v1192
        %1195 = vrot.lane.b32.xlu0 %v652, 80
        %v1196 = vpop.permute.xlu0 %1195
        %v1199 = vsel %vm745, %v1193, 0
        %1201 = vmatprep.subr.bf16.mxu0 0
        %1202 = vmatpush1.bf16.msra.mxu0 %v1196
        %1203 = vmatprep.subr.bf16.mxu0 0
        %1204 = vmatpush1.bf16.msra.mxu0 0
        %1205 = vmatprep.subr.bf16.mxu0 0
        %1206 = vmatpush1.bf16.msra.mxu0 0
        %1207 = vmatprep.subr.bf16.mxu0 0
        %1208 = vmatpush1.bf16.msra.mxu0 0
        %1209 = vmatprep.subr.bf16.mxu0 0
        %1210 = vmatpush1.bf16.msra.mxu0 0
        %1211 = vmatprep.subr.bf16.mxu0 0
        %1212 = vmatpush1.bf16.msra.mxu0 0
        %1213 = vmatprep.subr.bf16.mxu0 0
        %1214 = vmatpush1.bf16.msra.mxu0 0
        %1215 = vmatprep.subr.bf16.mxu0 0
        %1216 = vmatpush1.bf16.msra.mxu0 0
        %1217 = vmatprep.subr.bf16.mxu0 0
        %1218 = vmatpush1.bf16.msra.mxu0 0
        %1219 = vmatprep.subr.bf16.mxu0 0
        %1220 = vmatpush1.bf16.msra.mxu0 0
        %1221 = vmatprep.subr.bf16.mxu0 0
        %1222 = vmatpush1.bf16.msra.mxu0 0
        %1223 = vmatprep.subr.bf16.mxu0 0
        %1224 = vmatpush1.bf16.msra.mxu0 0
        %1225 = vmatprep.subr.bf16.mxu0 0
        %1226 = vmatpush1.bf16.msra.mxu0 0
        %1227 = vmatprep.subr.bf16.mxu0 0
        %1228 = vmatpush1.bf16.msra.mxu0 0
        %1229 = vmatprep.subr.bf16.mxu0 0
        %1230 = vmatpush1.bf16.msra.mxu0 0
        %1231 = vmatprep.subr.bf16.mxu0 0
        %1232 = vmatpush1.bf16.msra.mxu0 0
        %1233 = vmatprep.mubr.bf16.mxu0 0
        %1234 = vmatmul.mubr.bf16.gmra.mrb[0].mxu0 %v1199
        %v1235 = vpop.f32.mrb[0].mxu0
        %v1236 = vadd.f32 0.0, %v1235
        %v1237 = vpop.f32.mrb[0].mxu0
        %v1238 = vpop.f32.mrb[0].mxu0
        %v1239 = vpop.f32.mrb[0].mxu0
        %1240 = vdwg.mxu0
        %1241 = vrot.lane.b32.xlu0 %v653, 80
        %v1242 = vpop.permute.xlu0 %1241
        %v1245 = vsel %vm745, %v1194, 0
        %1247 = vmatprep.subr.bf16.mxu0 0
        %1248 = vmatpush1.bf16.msra.mxu0 %v1242
        %1249 = vmatprep.subr.bf16.mxu0 0
        %1250 = vmatpush1.bf16.msra.mxu0 0
        %1251 = vmatprep.subr.bf16.mxu0 0
        %1252 = vmatpush1.bf16.msra.mxu0 0
        %1253 = vmatprep.subr.bf16.mxu0 0
        %1254 = vmatpush1.bf16.msra.mxu0 0
        %1255 = vmatprep.subr.bf16.mxu0 0
        %1256 = vmatpush1.bf16.msra.mxu0 0
        %1257 = vmatprep.subr.bf16.mxu0 0
        %1258 = vmatpush1.bf16.msra.mxu0 0
        %1259 = vmatprep.subr.bf16.mxu0 0
        %1260 = vmatpush1.bf16.msra.mxu0 0
        %1261 = vmatprep.subr.bf16.mxu0 0
        %1262 = vmatpush1.bf16.msra.mxu0 0
        %1263 = vmatprep.subr.bf16.mxu0 0
        %1264 = vmatpush1.bf16.msra.mxu0 0
        %1265 = vmatprep.subr.bf16.mxu0 0
        %1266 = vmatpush1.bf16.msra.mxu0 0
        %1267 = vmatprep.subr.bf16.mxu0 0
        %1268 = vmatpush1.bf16.msra.mxu0 0
        %1269 = vmatprep.subr.bf16.mxu0 0
        %1270 = vmatpush1.bf16.msra.mxu0 0
        %1271 = vmatprep.subr.bf16.mxu0 0
        %1272 = vmatpush1.bf16.msra.mxu0 0
        %1273 = vmatprep.subr.bf16.mxu0 0
        %1274 = vmatpush1.bf16.msra.mxu0 0
        %1275 = vmatprep.subr.bf16.mxu0 0
        %1276 = vmatpush1.bf16.msra.mxu0 0
        %1277 = vmatprep.subr.bf16.mxu0 0
        %1278 = vmatpush1.bf16.msra.mxu0 0
        %1279 = vmatprep.mubr.bf16.mxu0 0
        %1280 = vmatmul.mubr.bf16.gmra.mrb[0].mxu0 %v1245
        %v1281 = vpop.f32.mrb[0].mxu0
        %v1282 = vadd.f32 0.0, %v1281
        %v1283 = vpop.f32.mrb[0].mxu0
        %v1284 = vpop.f32.mrb[0].mxu0
        %v1285 = vpop.f32.mrb[0].mxu0
        %1286 = vdwg.mxu0
        %1287 = vrot.lane.b32.xlu0 %v654, 104
        %v1288 = vpop.permute.xlu0 %1287
        %1289 = vrot.lane.b32.xlu0 %v652, 104
        %v1290 = vpop.permute.xlu0 %1289
        %v1292 = vsel %vm655, %v1288, 0
        %v1295 = vsel %vm655, %v1290, 0
        %1297 = vmatprep.subr.bf16.mxu0 0
        %1298 = vmatpush1.bf16.xpose.msra.mxu0 %v1295
        %1299 = vmatprep.subr.bf16.mxu0 0
        %1300 = vmatpush1.bf16.xpose.msra.mxu0 0
        %1301 = vmatprep.subr.bf16.mxu0 0
        %1302 = vmatpush1.bf16.xpose.msra.mxu0 0
        %1303 = vmatprep.subr.bf16.mxu0 0
        %1304 = vmatpush1.bf16.xpose.msra.mxu0 0
        %1305 = vmatprep.subr.bf16.mxu0 0
        %1306 = vmatpush1.bf16.xpose.msra.mxu0 0
        %1307 = vmatprep.subr.bf16.mxu0 0
        %1308 = vmatpush1.bf16.xpose.msra.mxu0 0
        %1309 = vmatprep.subr.bf16.mxu0 0
        %1310 = vmatpush1.bf16.xpose.msra.mxu0 0
        %1311 = vmatprep.subr.bf16.mxu0 0
        %1312 = vmatpush1.bf16.xpose.msra.mxu0 0
        %1313 = vmatprep.subr.bf16.mxu0 0
        %1314 = vmatpush1.bf16.xpose.msra.mxu0 0
        %1315 = vmatprep.subr.bf16.mxu0 0
        %1316 = vmatpush1.bf16.xpose.msra.mxu0 0
        %1317 = vmatprep.subr.bf16.mxu0 0
        %1318 = vmatpush1.bf16.xpose.msra.mxu0 0
        %1319 = vmatprep.subr.bf16.mxu0 0
        %1320 = vmatpush1.bf16.xpose.msra.mxu0 0
        %1321 = vmatprep.subr.bf16.mxu0 0
        %1322 = vmatpush1.bf16.xpose.msra.mxu0 0
        %1323 = vmatprep.subr.bf16.mxu0 0
        %1324 = vmatpush1.bf16.xpose.msra.mxu0 0
        %1325 = vmatprep.subr.bf16.mxu0 0
        %1326 = vmatpush1.bf16.xpose.msra.mxu0 0
        %1327 = vmatprep.subr.bf16.mxu0 0
        %1328 = vmatpush1.bf16.xpose.msra.mxu0 0
        %1329 = vmatprep.mubr.bf16.mxu0 0
        %1330 = vmatmul.mubr.bf16.gmra.mrb[0].mxu0 %v1292
        %v1331 = vpop.f32.mrb[0].mxu0
        %v1332 = vadd.f32 0.0, %v1331
        %v1333 = vpop.f32.mrb[0].mxu0
        %v1334 = vpop.f32.mrb[0].mxu0
        %v1335 = vpop.f32.mrb[0].mxu0
        %1336 = vdwg.mxu0
        %1337 = vrot.lane.b32.xlu0 %v653, 104
        %v1338 = vpop.permute.xlu0 %1337
        %v1340 = vsel %vm655, %v1338, 0
        %1342 = vmatprep.subr.bf16.mxu0 0
        %1343 = vmatpush1.bf16.xpose.msra.mxu0 %v1340
        %1344 = vmatprep.subr.bf16.mxu0 0
        %1345 = vmatpush1.bf16.xpose.msra.mxu0 0
        %1346 = vmatprep.subr.bf16.mxu0 0
        %1347 = vmatpush1.bf16.xpose.msra.mxu0 0
        %1348 = vmatprep.subr.bf16.mxu0 0
        %1349 = vmatpush1.bf16.xpose.msra.mxu0 0
        %1350 = vmatprep.subr.bf16.mxu0 0
        %1351 = vmatpush1.bf16.xpose.msra.mxu0 0
        %1352 = vmatprep.subr.bf16.mxu0 0
        %1353 = vmatpush1.bf16.xpose.msra.mxu0 0
        %1354 = vmatprep.subr.bf16.mxu0 0
        %1355 = vmatpush1.bf16.xpose.msra.mxu0 0
        %1356 = vmatprep.subr.bf16.mxu0 0
        %1357 = vmatpush1.bf16.xpose.msra.mxu0 0
        %1358 = vmatprep.subr.bf16.mxu0 0
        %1359 = vmatpush1.bf16.xpose.msra.mxu0 0
        %1360 = vmatprep.subr.bf16.mxu0 0
        %1361 = vmatpush1.bf16.xpose.msra.mxu0 0
        %1362 = vmatprep.subr.bf16.mxu0 0
        %1363 = vmatpush1.bf16.xpose.msra.mxu0 0
        %1364 = vmatprep.subr.bf16.mxu0 0
        %1365 = vmatpush1.bf16.xpose.msra.mxu0 0
        %1366 = vmatprep.subr.bf16.mxu0 0
        %1367 = vmatpush1.bf16.xpose.msra.mxu0 0
        %1368 = vmatprep.subr.bf16.mxu0 0
        %1369 = vmatpush1.bf16.xpose.msra.mxu0 0
        %1370 = vmatprep.subr.bf16.mxu0 0
        %1371 = vmatpush1.bf16.xpose.msra.mxu0 0
        %1372 = vmatprep.subr.bf16.mxu0 0
        %1373 = vmatpush1.bf16.xpose.msra.mxu0 0
        %1374 = vmatprep.mubr.bf16.mxu0 0
        %1375 = vmatmul.mubr.bf16.gmra.mrb[0].mxu0 %v1292
        %v1376 = vpop.f32.mrb[0].mxu0
        %v1377 = vadd.f32 0.0, %v1376
        %v1378 = vpop.f32.mrb[0].mxu0
        %v1379 = vpop.f32.mrb[0].mxu0
        %v1380 = vpop.f32.mrb[0].mxu0
        %1381 = vdwg.mxu0
        %v1382 = vsel %vm745, %v1332, -inf
        %1383 = vmax.xlane.f32.xlu0 %v1382
        %v1384 = vpop.xlane.xlu0 %1383
        %v1385 = vsel %vm745, %v1377, -inf
        %1386 = vmax.xlane.f32.xlu0 %v1385
        %v1387 = vpop.xlane.xlu0 %1386
        %v1388 = vsub.f32 %v1332, %v1384
        %v1389 = vsub.f32 %v1377, %v1387
        %v1390 = vmul.f32 %v1388, 1.442695
        %v1391 = vpow.pop %v1390
        %v1392 = vmul.f32 %v1389, 1.442695
        %v1393 = vpow.pop %v1392
        %v1394 = vsel %vm745, %v1391, 0.0
        %1395 = vadd.xlane.f32.xlu0 %v1394
        %v1396 = vpop.xlane.xlu0 %1395
        %v1397 = vsel %vm745, %v1393, 0.0
        %1398 = vadd.xlane.f32.xlu0 %v1397
        %v1399 = vpop.xlane.xlu0 %1398
        %v1400 = vrcp.pop %v1396
        %v1401 = vrcp.pop %v1399
        %v1402 = vmul.f32 %v1391, %v1400
        %v1403 = vmul.f32 %v1393, %v1401
        %v1404 = vpack.c.bf16 %v1402, %v1402
        %v1405 = vpack.c.bf16 %v1403, %v1403
        %1406 = vrot.lane.b32.xlu0 %v652, 72
        %v1407 = vpop.permute.xlu0 %1406
        %v1410 = vsel %vm745, %v1404, 0
        %1412 = vmatprep.subr.bf16.mxu0 0
        %1413 = vmatpush1.bf16.msra.mxu0 %v1407
        %1414 = vmatprep.subr.bf16.mxu0 0
        %1415 = vmatpush1.bf16.msra.mxu0 0
        %1416 = vmatprep.subr.bf16.mxu0 0
        %1417 = vmatpush1.bf16.msra.mxu0 0
        %1418 = vmatprep.subr.bf16.mxu0 0
        %1419 = vmatpush1.bf16.msra.mxu0 0
        %1420 = vmatprep.subr.bf16.mxu0 0
        %1421 = vmatpush1.bf16.msra.mxu0 0
        %1422 = vmatprep.subr.bf16.mxu0 0
        %1423 = vmatpush1.bf16.msra.mxu0 0
        %1424 = vmatprep.subr.bf16.mxu0 0
        %1425 = vmatpush1.bf16.msra.mxu0 0
        %1426 = vmatprep.subr.bf16.mxu0 0
        %1427 = vmatpush1.bf16.msra.mxu0 0
        %1428 = vmatprep.subr.bf16.mxu0 0
        %1429 = vmatpush1.bf16.msra.mxu0 0
        %1430 = vmatprep.subr.bf16.mxu0 0
        %1431 = vmatpush1.bf16.msra.mxu0 0
        %1432 = vmatprep.subr.bf16.mxu0 0
        %1433 = vmatpush1.bf16.msra.mxu0 0
        %1434 = vmatprep.subr.bf16.mxu0 0
        %1435 = vmatpush1.bf16.msra.mxu0 0
        %1436 = vmatprep.subr.bf16.mxu0 0
        %1437 = vmatpush1.bf16.msra.mxu0 0
        %1438 = vmatprep.subr.bf16.mxu0 0
        %1439 = vmatpush1.bf16.msra.mxu0 0
        %1440 = vmatprep.subr.bf16.mxu0 0
        %1441 = vmatpush1.bf16.msra.mxu0 0
        %1442 = vmatprep.subr.bf16.mxu0 0
        %1443 = vmatpush1.bf16.msra.mxu0 0
        %1444 = vmatprep.mubr.bf16.mxu0 0
        %1445 = vmatmul.mubr.bf16.gmra.mrb[0].mxu0 %v1410
        %v1446 = vpop.f32.mrb[0].mxu0
        %v1447 = vadd.f32 0.0, %v1446
        %v1448 = vpop.f32.mrb[0].mxu0
        %v1449 = vpop.f32.mrb[0].mxu0
        %v1450 = vpop.f32.mrb[0].mxu0
        %1451 = vdwg.mxu0
        %1452 = vrot.lane.b32.xlu0 %v653, 72
        %v1453 = vpop.permute.xlu0 %1452
        %v1456 = vsel %vm745, %v1405, 0
        %1458 = vmatprep.subr.bf16.mxu0 0
        %1459 = vmatpush1.bf16.msra.mxu0 %v1453
        %1460 = vmatprep.subr.bf16.mxu0 0
        %1461 = vmatpush1.bf16.msra.mxu0 0
        %1462 = vmatprep.subr.bf16.mxu0 0
        %1463 = vmatpush1.bf16.msra.mxu0 0
        %1464 = vmatprep.subr.bf16.mxu0 0
        %1465 = vmatpush1.bf16.msra.mxu0 0
        %1466 = vmatprep.subr.bf16.mxu0 0
        %1467 = vmatpush1.bf16.msra.mxu0 0
        %1468 = vmatprep.subr.bf16.mxu0 0
        %1469 = vmatpush1.bf16.msra.mxu0 0
        %1470 = vmatprep.subr.bf16.mxu0 0
        %1471 = vmatpush1.bf16.msra.mxu0 0
        %1472 = vmatprep.subr.bf16.mxu0 0
        %1473 = vmatpush1.bf16.msra.mxu0 0
        %1474 = vmatprep.subr.bf16.mxu0 0
        %1475 = vmatpush1.bf16.msra.mxu0 0
        %1476 = vmatprep.subr.bf16.mxu0 0
        %1477 = vmatpush1.bf16.msra.mxu0 0
        %1478 = vmatprep.subr.bf16.mxu0 0
        %1479 = vmatpush1.bf16.msra.mxu0 0
        %1480 = vmatprep.subr.bf16.mxu0 0
        %1481 = vmatpush1.bf16.msra.mxu0 0
        %1482 = vmatprep.subr.bf16.mxu0 0
        %1483 = vmatpush1.bf16.msra.mxu0 0
        %1484 = vmatprep.subr.bf16.mxu0 0
        %1485 = vmatpush1.bf16.msra.mxu0 0
        %1486 = vmatprep.subr.bf16.mxu0 0
        %1487 = vmatpush1.bf16.msra.mxu0 0
        %1488 = vmatprep.subr.bf16.mxu0 0
        %1489 = vmatpush1.bf16.msra.mxu0 0
        %1490 = vmatprep.mubr.bf16.mxu0 0
        %1491 = vmatmul.mubr.bf16.gmra.mrb[0].mxu0 %v1456
        %v1492 = vpop.f32.mrb[0].mxu0
        %v1493 = vadd.f32 0.0, %v1492
        %v1494 = vpop.f32.mrb[0].mxu0
        %v1495 = vpop.f32.mrb[0].mxu0
        %v1496 = vpop.f32.mrb[0].mxu0
        %1497 = vdwg.mxu0
        %1500 = vrot.lane.b32.xlu0 %v1025, 8
        %v1501 = vpop.permute.xlu0 %1500
        %1502 = vrot.lane.b32.xlu0 %v1071, 8
        %v1503 = vpop.permute.xlu0 %1502
        %1508 = vrot.lane.b32.xlu0 %v1236, 16
        %v1509 = vpop.permute.xlu0 %1508
        %1510 = vrot.lane.b32.xlu0 %v1282, 16
        %v1511 = vpop.permute.xlu0 %1510
        %1516 = vrot.lane.b32.xlu0 %v1447, 24
        %v1517 = vpop.permute.xlu0 %1516
        %1518 = vrot.lane.b32.xlu0 %v1493, 24
        %v1519 = vpop.permute.xlu0 %1518
        %v1522 = vsel %vm655, %v812, %v1501
        %v1523 = vsel %vm655, %v859, %v1503
        %v1524 = vsel %vm745, %v1522, %v1509
        %v1525 = vsel %vm745, %v1523, %v1511
        %vm1526 = vcmask 195584
        %v1527 = vsel %vm1526, %v1524, %v1517
        %v1528 = vsel %vm1526, %v1525, %v1519
        %v1529 = vpack.c.bf16 %v1528, %v1527
        %v1534 = vunpack.c.l.b16 %v478
        %v1535 = vunpack.c.l.b16 %v479
        %v1536 = vunpack.c.l.b16 %v480
        %v1537 = vunpack.c.l.b16 %v481
        %v1538 = vpack.c.b16 %v1535, %v1534
        %v1539 = vpack.c.b16 %v1537, %v1536
        %v1543 = vsel %vm525, %v1529, 0
        %1545 = vmatprep.subr.bf16.mxu0 0
        %1546 = vmatpush1.bf16.msra.mxu0 %v1538
        %1547 = vmatprep.subr.bf16.mxu0 0
        %1548 = vmatpush1.bf16.msra.mxu0 %v1539
        %1549 = vmatprep.subr.bf16.mxu0 0
        %1550 = vmatpush1.bf16.msra.mxu0 0
        %1551 = vmatprep.subr.bf16.mxu0 0
        %1552 = vmatpush1.bf16.msra.mxu0 0
        %1553 = vmatprep.subr.bf16.mxu0 0
        %1554 = vmatpush1.bf16.msra.mxu0 0
        %1555 = vmatprep.subr.bf16.mxu0 0
        %1556 = vmatpush1.bf16.msra.mxu0 0
        %1557 = vmatprep.subr.bf16.mxu0 0
        %1558 = vmatpush1.bf16.msra.mxu0 0
        %1559 = vmatprep.subr.bf16.mxu0 0
        %1560 = vmatpush1.bf16.msra.mxu0 0
        %1561 = vmatprep.subr.bf16.mxu0 0
        %1562 = vmatpush1.bf16.msra.mxu0 0
        %1563 = vmatprep.subr.bf16.mxu0 0
        %1564 = vmatpush1.bf16.msra.mxu0 0
        %1565 = vmatprep.subr.bf16.mxu0 0
        %1566 = vmatpush1.bf16.msra.mxu0 0
        %1567 = vmatprep.subr.bf16.mxu0 0
        %1568 = vmatpush1.bf16.msra.mxu0 0
        %1569 = vmatprep.subr.bf16.mxu0 0
        %1570 = vmatpush1.bf16.msra.mxu0 0
        %1571 = vmatprep.subr.bf16.mxu0 0
        %1572 = vmatpush1.bf16.msra.mxu0 0
        %1573 = vmatprep.subr.bf16.mxu0 0
        %1574 = vmatpush1.bf16.msra.mxu0 0
        %1575 = vmatprep.subr.bf16.mxu0 0
        %1576 = vmatpush1.bf16.msra.mxu0 0
        %1577 = vmatprep.mubr.bf16.mxu0 0
        %1578 = vmatmul.mubr.bf16.gmra.mrb[0].mxu0 %v1543
        %v1579 = vpop.f32.mrb[0].mxu0
        %v1580 = vadd.f32 0.0, %v1579
        %v1581 = vpop.f32.mrb[0].mxu0
        %v1582 = vpop.f32.mrb[0].mxu0
        %v1583 = vadd.f32 0.0, %v1582
        %v1584 = vpop.f32.mrb[0].mxu0
        %1585 = vdwg.mxu0
        %v1586 = vlaneseq
        %v1587 = vshrl.u32 %v1586, 7
        %v1588 = vsub.s32 0, %v1587
        %v1589 = vrot.slane %v486, %v1588
        %v1590 = vadd.f32 %v1580, %v1589
        %v1591 = vadd.f32 %v1583, %v1589
        %1594 = vrot.lane.b32.xlu0 %v1590, 32
        %v1595 = vpop.permute.xlu0 %1594
        %1596 = vrot.lane.b32.xlu0 %v1591, 32
        %v1597 = vpop.permute.xlu0 %1596
        %v1600 = vadd.f32 %v564, %v1595
        %v1601 = vadd.f32 %v564, %v1597
        %v1602 = vpack.c.bf16 %v1601, %v1600
        %1604 = vrot.lane.b32.xlu0 %v1602, 96
        %v1605 = vpop.permute.xlu0 %1604
        %v1610 = vunpack.c.l.b16 %v482
        %v1611 = vunpack.c.l.b16 %v483
        %v1612 = vunpack.c.l.b16 %v484
        %v1613 = vunpack.c.l.b16 %v485
        %v1614 = vpack.c.b16 %v1611, %v1610
        %v1615 = vpack.c.b16 %v1613, %v1612
        %v1619 = vsel %vm525, %v1605, 0
        %1621 = vmatprep.subr.bf16.mxu0 0
        %1622 = vmatpush1.bf16.msra.mxu0 %v1614
        %1623 = vmatprep.subr.bf16.mxu0 0
        %1624 = vmatpush1.bf16.msra.mxu0 %v1615
        %1625 = vmatprep.subr.bf16.mxu0 0
        %1626 = vmatpush1.bf16.msra.mxu0 0
        %1627 = vmatprep.subr.bf16.mxu0 0
        %1628 = vmatpush1.bf16.msra.mxu0 0
        %1629 = vmatprep.subr.bf16.mxu0 0
        %1630 = vmatpush1.bf16.msra.mxu0 0
        %1631 = vmatprep.subr.bf16.mxu0 0
        %1632 = vmatpush1.bf16.msra.mxu0 0
        %1633 = vmatprep.subr.bf16.mxu0 0
        %1634 = vmatpush1.bf16.msra.mxu0 0
        %1635 = vmatprep.subr.bf16.mxu0 0
        %1636 = vmatpush1.bf16.msra.mxu0 0
        %1637 = vmatprep.subr.bf16.mxu0 0
        %1638 = vmatpush1.bf16.msra.mxu0 0
        %1639 = vmatprep.subr.bf16.mxu0 0
        %1640 = vmatpush1.bf16.msra.mxu0 0
        %1641 = vmatprep.subr.bf16.mxu0 0
        %1642 = vmatpush1.bf16.msra.mxu0 0
        %1643 = vmatprep.subr.bf16.mxu0 0
        %1644 = vmatpush1.bf16.msra.mxu0 0
        %1645 = vmatprep.subr.bf16.mxu0 0
        %1646 = vmatpush1.bf16.msra.mxu0 0
        %1647 = vmatprep.subr.bf16.mxu0 0
        %1648 = vmatpush1.bf16.msra.mxu0 0
        %1649 = vmatprep.subr.bf16.mxu0 0
        %1650 = vmatpush1.bf16.msra.mxu0 0
        %1651 = vmatprep.subr.bf16.mxu0 0
        %1652 = vmatpush1.bf16.msra.mxu0 0
        %1653 = vmatprep.mubr.bf16.mxu0 0
        %1654 = vmatmul.mubr.bf16.gmra.mrb[0].mxu0 %v1619
        %v1655 = vpop.f32.mrb[0].mxu0
        %v1656 = vadd.f32 0.0, %v1655
        %v1657 = vpop.f32.mrb[0].mxu0
        %v1658 = vpop.f32.mrb[0].mxu0
        %v1659 = vadd.f32 0.0, %v1658
        %v1660 = vpop.f32.mrb[0].mxu0
        %1661 = vdwg.mxu0
        %v1662 = vlaneseq
        %v1663 = vshrl.u32 %v1662, 7
        %v1664 = vsub.s32 1, %v1663
        %v1665 = vrot.slane %v486, %v1664
        %v1666 = vadd.f32 %v1656, %v1665
        %v1667 = vadd.f32 %v1659, %v1665
        %v1668 = vmax.f32 %v1666, 0.0
        %v1669 = vmax.f32 %v1667, 0.0
        %1672 = vrot.lane.b32.xlu0 %v1668, 32
        %v1673 = vpop.permute.xlu0 %1672
        %1674 = vrot.lane.b32.xlu0 %v1669, 32
        %v1675 = vpop.permute.xlu0 %1674
        %v1678 = vadd.f32 %v1600, %v1673
        %v1679 = vadd.f32 %v1601, %v1675
        %v1680 = vxor.u32 %v564, 2147483648
        %v1681 = vmul.f32 %v1680, 1.442695
        %v1682 = vpow.pop %v1681
        %v1683 = vadd.f32 %v1682, 1.0
        %v1684 = vrcp.pop %v1683
        %v1685 = vmul.f32 1.0, %v1684
        %v1686 = vmul.f32 %v564, %v1685
        %1688 = vrot.lane.b32.xlu0 %v1686, 96
        %v1689 = vpop.permute.xlu0 %1688
        %v1691 = vmul.f32 %v1678, %v1689
        %v1692 = vmul.f32 %v1679, %v1689
        %v1693 = vld [vmem:[%s8] sm:$0xf]
        %v1694 = vld [vmem:[%s8 + $0x4] sm:$0xf]
        %v1695 = vld [vmem:[%s8 + $0x8] sm:$0xf]
        %v1696 = vld [vmem:[%s8 + $0xc] sm:$0xf]
        %v1697 = vld [vmem:[%s9] sm:$0x1]
        %v1698 = vld [vmem:[%s10] sm:$0xf]
        %v1699 = vld [vmem:[%s10 + $0x4] sm:$0xf]
        %v1700 = vld [vmem:[%s10 + $0x8] sm:$0xf]
        %v1701 = vld [vmem:[%s10 + $0xc] sm:$0xf]
        %v1702 = vld [vmem:[%s11] sm:$0x1]
        %v1704 = vlaneseq
        %v1705 = vshrl.u32 %v1704, 7
        %v1706 = vsub.s32 0, %v1705
        %v1707 = vrot.slane %v1697, %v1706
        %v1713 = vunpack.c.l.b16 %v1693
        %v1714 = vunpack.c.l.b16 %v1694
        %v1715 = vunpack.c.l.b16 %v1695
        %v1716 = vunpack.c.l.b16 %v1696
        %v1717 = vpack.c.b16 %v1714, %v1713
        %v1718 = vpack.c.b16 %v1716, %v1715
        %1721 = vmatprep.subr.bf16.mxu0 0
        %1722 = vmatpush1.bf16.msra.mxu0 %v1717
        %1723 = vmatprep.subr.bf16.mxu0 0
        %1724 = vmatpush1.bf16.msra.mxu0 %v1718
        %1725 = vmatprep.subr.bf16.mxu0 0
        %1726 = vmatpush1.bf16.msra.mxu0 0
        %1727 = vmatprep.subr.bf16.mxu0 0
        %1728 = vmatpush1.bf16.msra.mxu0 0
        %1729 = vmatprep.subr.bf16.mxu0 0
        %1730 = vmatpush1.bf16.msra.mxu0 0
        %1731 = vmatprep.subr.bf16.mxu0 0
        %1732 = vmatpush1.bf16.msra.mxu0 0
        %1733 = vmatprep.subr.bf16.mxu0 0
        %1734 = vmatpush1.bf16.msra.mxu0 0
        %1735 = vmatprep.subr.bf16.mxu0 0
        %1736 = vmatpush1.bf16.msra.mxu0 0
        %1737 = vmatprep.subr.bf16.mxu0 0
        %1738 = vmatpush1.bf16.msra.mxu0 0
        %1739 = vmatprep.subr.bf16.mxu0 0
        %1740 = vmatpush1.bf16.msra.mxu0 0
        %1741 = vmatprep.subr.bf16.mxu0 0
        %1742 = vmatpush1.bf16.msra.mxu0 0
        %1743 = vmatprep.subr.bf16.mxu0 0
        %1744 = vmatpush1.bf16.msra.mxu0 0
        %1745 = vmatprep.subr.bf16.mxu0 0
        %1746 = vmatpush1.bf16.msra.mxu0 0
        %1747 = vmatprep.subr.bf16.mxu0 0
        %1748 = vmatpush1.bf16.msra.mxu0 0
        %1749 = vmatprep.subr.bf16.mxu0 0
        %1750 = vmatpush1.bf16.msra.mxu0 0
        %1751 = vmatprep.subr.bf16.mxu0 0
        %1752 = vmatpush1.bf16.msra.mxu0 0
        %1753 = vmatprep.mubr.bf16.mxu0 0
        %1754 = vmatmul.mubr.bf16.gmra.mrb[0].mxu0 %v598
        %v1755 = vpop.f32.mrb[0].mxu0
        %v1756 = vadd.f32 %v1707, %v1755
        %v1757 = vpop.f32.mrb[0].mxu0
        %v1758 = vpop.f32.mrb[0].mxu0
        %v1759 = vadd.f32 %v1707, %v1758
        %v1760 = vpop.f32.mrb[0].mxu0
        %1761 = vmatprep.mubr.bf16.mxu0 0
        %1762 = vmatmul.mubr.bf16.gmra.mrb[0].mxu0 %v601
        %v1763 = vpop.f32.mrb[0].mxu0
        %v1764 = vadd.f32 %v1707, %v1763
        %v1765 = vpop.f32.mrb[0].mxu0
        %v1766 = vpop.f32.mrb[0].mxu0
        %v1767 = vadd.f32 %v1707, %v1766
        %v1768 = vpop.f32.mrb[0].mxu0
        %1769 = vdwg.mxu0
        %v1770 = vpack.c.bf16 %v1692, %v1691
        %v1772 = vlaneseq
        %v1773 = vshrl.u32 %v1772, 7
        %v1774 = vsub.s32 0, %v1773
        %v1775 = vrot.slane %v1702, %v1774
        %1778 = vrot.lane.b32.xlu0 %v1770, 96
        %v1779 = vpop.permute.xlu0 %1778
        %v1784 = vunpack.c.l.b16 %v1698
        %v1785 = vunpack.c.l.b16 %v1699
        %v1786 = vunpack.c.l.b16 %v1700
        %v1787 = vunpack.c.l.b16 %v1701
        %v1788 = vpack.c.b16 %v1785, %v1784
        %v1789 = vpack.c.b16 %v1787, %v1786
        %v1793 = vsel %vm525, %v1779, 0
        %1795 = vmatprep.subr.bf16.mxu0 0
        %1796 = vmatpush1.bf16.msra.mxu0 %v1788
        %1797 = vmatprep.subr.bf16.mxu0 0
        %1798 = vmatpush1.bf16.msra.mxu0 %v1789
        %1799 = vmatprep.subr.bf16.mxu0 0
        %1800 = vmatpush1.bf16.msra.mxu0 0
        %1801 = vmatprep.subr.bf16.mxu0 0
        %1802 = vmatpush1.bf16.msra.mxu0 0
        %1803 = vmatprep.subr.bf16.mxu0 0
        %1804 = vmatpush1.bf16.msra.mxu0 0
        %1805 = vmatprep.subr.bf16.mxu0 0
        %1806 = vmatpush1.bf16.msra.mxu0 0
        %1807 = vmatprep.subr.bf16.mxu0 0
        %1808 = vmatpush1.bf16.msra.mxu0 0
        %1809 = vmatprep.subr.bf16.mxu0 0
        %1810 = vmatpush1.bf16.msra.mxu0 0
        %1811 = vmatprep.subr.bf16.mxu0 0
        %1812 = vmatpush1.bf16.msra.mxu0 0
        %1813 = vmatprep.subr.bf16.mxu0 0
        %1814 = vmatpush1.bf16.msra.mxu0 0
        %1815 = vmatprep.subr.bf16.mxu0 0
        %1816 = vmatpush1.bf16.msra.mxu0 0
        %1817 = vmatprep.subr.bf16.mxu0 0
        %1818 = vmatpush1.bf16.msra.mxu0 0
        %1819 = vmatprep.subr.bf16.mxu0 0
        %1820 = vmatpush1.bf16.msra.mxu0 0
        %1821 = vmatprep.subr.bf16.mxu0 0
        %1822 = vmatpush1.bf16.msra.mxu0 0
        %1823 = vmatprep.subr.bf16.mxu0 0
        %1824 = vmatpush1.bf16.msra.mxu0 0
        %1825 = vmatprep.subr.bf16.mxu0 0
        %1826 = vmatpush1.bf16.msra.mxu0 0
        %1827 = vmatprep.mubr.bf16.mxu0 0
        %1828 = vmatmul.mubr.bf16.gmra.mrb[0].mxu0 %v1793
        %v1829 = vpop.f32.mrb[0].mxu0
        %v1830 = vadd.f32 %v1775, %v1829
        %v1831 = vpop.f32.mrb[0].mxu0
        %v1832 = vpop.f32.mrb[0].mxu0
        %v1833 = vadd.f32 %v1775, %v1832
        %v1834 = vpop.f32.mrb[0].mxu0
        %1835 = vdwg.mxu0
        %v1836 = vpack.c.bf16 %v1830, %v1830
        %v1837 = vpack.c.bf16 %v1833, %v1833
        %v1838 = vpack.c.bf16 %v1759, %v1756
        %v1839 = vpack.c.bf16 %v1767, %v1764
        %v1841 = vsel %vm655, %v1838, 0
        %v1844 = vsel %vm655, %v1836, 0
        %1846 = vmatprep.subr.bf16.mxu0 0
        %1847 = vmatpush1.bf16.xpose.msra.mxu0 %v1844
        %1848 = vmatprep.subr.bf16.mxu0 0
        %1849 = vmatpush1.bf16.xpose.msra.mxu0 0
        %1850 = vmatprep.subr.bf16.mxu0 0
        %1851 = vmatpush1.bf16.xpose.msra.mxu0 0
        %1852 = vmatprep.subr.bf16.mxu0 0
        %1853 = vmatpush1.bf16.xpose.msra.mxu0 0
        %1854 = vmatprep.subr.bf16.mxu0 0
        %1855 = vmatpush1.bf16.xpose.msra.mxu0 0
        %1856 = vmatprep.subr.bf16.mxu0 0
        %1857 = vmatpush1.bf16.xpose.msra.mxu0 0
        %1858 = vmatprep.subr.bf16.mxu0 0
        %1859 = vmatpush1.bf16.xpose.msra.mxu0 0
        %1860 = vmatprep.subr.bf16.mxu0 0
        %1861 = vmatpush1.bf16.xpose.msra.mxu0 0
        %1862 = vmatprep.subr.bf16.mxu0 0
        %1863 = vmatpush1.bf16.xpose.msra.mxu0 0
        %1864 = vmatprep.subr.bf16.mxu0 0
        %1865 = vmatpush1.bf16.xpose.msra.mxu0 0
        %1866 = vmatprep.subr.bf16.mxu0 0
        %1867 = vmatpush1.bf16.xpose.msra.mxu0 0
        %1868 = vmatprep.subr.bf16.mxu0 0
        %1869 = vmatpush1.bf16.xpose.msra.mxu0 0
        %1870 = vmatprep.subr.bf16.mxu0 0
        %1871 = vmatpush1.bf16.xpose.msra.mxu0 0
        %1872 = vmatprep.subr.bf16.mxu0 0
        %1873 = vmatpush1.bf16.xpose.msra.mxu0 0
        %1874 = vmatprep.subr.bf16.mxu0 0
        %1875 = vmatpush1.bf16.xpose.msra.mxu0 0
        %1876 = vmatprep.subr.bf16.mxu0 0
        %1877 = vmatpush1.bf16.xpose.msra.mxu0 0
        %1878 = vmatprep.mubr.bf16.mxu0 0
        %1879 = vmatmul.mubr.bf16.gmra.mrb[0].mxu0 %v1841
        %v1880 = vpop.f32.mrb[0].mxu0
        %v1881 = vadd.f32 0.0, %v1880
        %v1882 = vpop.f32.mrb[0].mxu0
        %v1883 = vpop.f32.mrb[0].mxu0
        %v1884 = vadd.f32 0.0, %v1883
        %v1885 = vpop.f32.mrb[0].mxu0
        %1886 = vdwg.mxu0
        %v1888 = vsel %vm655, %v1839, 0
        %v1891 = vsel %vm655, %v1837, 0
        %1893 = vmatprep.subr.bf16.mxu0 0
        %1894 = vmatpush1.bf16.xpose.msra.mxu0 %v1891
        %1895 = vmatprep.subr.bf16.mxu0 0
        %1896 = vmatpush1.bf16.xpose.msra.mxu0 0
        %1897 = vmatprep.subr.bf16.mxu0 0
        %1898 = vmatpush1.bf16.xpose.msra.mxu0 0
        %1899 = vmatprep.subr.bf16.mxu0 0
        %1900 = vmatpush1.bf16.xpose.msra.mxu0 0
        %1901 = vmatprep.subr.bf16.mxu0 0
        %1902 = vmatpush1.bf16.xpose.msra.mxu0 0
        %1903 = vmatprep.subr.bf16.mxu0 0
        %1904 = vmatpush1.bf16.xpose.msra.mxu0 0
        %1905 = vmatprep.subr.bf16.mxu0 0
        %1906 = vmatpush1.bf16.xpose.msra.mxu0 0
        %1907 = vmatprep.subr.bf16.mxu0 0
        %1908 = vmatpush1.bf16.xpose.msra.mxu0 0
        %1909 = vmatprep.subr.bf16.mxu0 0
        %1910 = vmatpush1.bf16.xpose.msra.mxu0 0
        %1911 = vmatprep.subr.bf16.mxu0 0
        %1912 = vmatpush1.bf16.xpose.msra.mxu0 0
        %1913 = vmatprep.subr.bf16.mxu0 0
        %1914 = vmatpush1.bf16.xpose.msra.mxu0 0
        %1915 = vmatprep.subr.bf16.mxu0 0
        %1916 = vmatpush1.bf16.xpose.msra.mxu0 0
        %1917 = vmatprep.subr.bf16.mxu0 0
        %1918 = vmatpush1.bf16.xpose.msra.mxu0 0
        %1919 = vmatprep.subr.bf16.mxu0 0
        %1920 = vmatpush1.bf16.xpose.msra.mxu0 0
        %1921 = vmatprep.subr.bf16.mxu0 0
        %1922 = vmatpush1.bf16.xpose.msra.mxu0 0
        %1923 = vmatprep.subr.bf16.mxu0 0
        %1924 = vmatpush1.bf16.xpose.msra.mxu0 0
        %1925 = vmatprep.mubr.bf16.mxu0 0
        %1926 = vmatmul.mubr.bf16.gmra.mrb[0].mxu0 %v1888
        %v1927 = vpop.f32.mrb[0].mxu0
        %v1928 = vadd.f32 0.0, %v1927
        %v1929 = vpop.f32.mrb[0].mxu0
        %v1930 = vpop.f32.mrb[0].mxu0
        %v1931 = vadd.f32 0.0, %v1930
        %v1932 = vpop.f32.mrb[0].mxu0
        %1933 = vdwg.mxu0
        %v1934 = vsel %vm655, %v1881, -inf
        %1935 = vmax.xlane.f32.xlu0 %v1934
        %v1936 = vpop.xlane.xlu0 %1935
        %v1937 = vsel %vm655, %v1884, -inf
        %1938 = vmax.xlane.f32.xlu0 %v1937
        %v1939 = vpop.xlane.xlu0 %1938
        %v1940 = vsel %vm655, %v1928, -inf
        %1941 = vmax.xlane.f32.xlu0 %v1940
        %v1942 = vpop.xlane.xlu0 %1941
        %v1943 = vsel %vm655, %v1931, -inf
        %1944 = vmax.xlane.f32.xlu0 %v1943
        %v1945 = vpop.xlane.xlu0 %1944
        %v1946 = vsub.f32 %v1881, %v1936
        %v1947 = vsub.f32 %v1884, %v1939
        %v1948 = vsub.f32 %v1928, %v1942
        %v1949 = vsub.f32 %v1931, %v1945
        %v1950 = vmul.f32 %v1946, 1.442695
        %v1951 = vpow.pop %v1950
        %v1952 = vmul.f32 %v1947, 1.442695
        %v1953 = vpow.pop %v1952
        %v1954 = vmul.f32 %v1948, 1.442695
        %v1955 = vpow.pop %v1954
        %v1956 = vmul.f32 %v1949, 1.442695
        %v1957 = vpow.pop %v1956
        %v1958 = vsel %vm655, %v1951, 0.0
        %1959 = vadd.xlane.f32.xlu0 %v1958
        %v1960 = vpop.xlane.xlu0 %1959
        %v1961 = vsel %vm655, %v1953, 0.0
        %1962 = vadd.xlane.f32.xlu0 %v1961
        %v1963 = vpop.xlane.xlu0 %1962
        %v1964 = vsel %vm655, %v1955, 0.0
        %1965 = vadd.xlane.f32.xlu0 %v1964
        %v1966 = vpop.xlane.xlu0 %1965
        %v1967 = vsel %vm655, %v1957, 0.0
        %1968 = vadd.xlane.f32.xlu0 %v1967
        %v1969 = vpop.xlane.xlu0 %1968
        %v1970 = vrcp.pop %v1960
        %v1971 = vrcp.pop %v1963
        %v1972 = vrcp.pop %v1966
        %v1973 = vrcp.pop %v1969
        %v1974 = vmul.f32 %v1951, %v1970
        %v1975 = vmul.f32 %v1953, %v1971
        %v1976 = vmul.f32 %v1955, %v1972
        %v1977 = vmul.f32 %v1957, %v1973
        %v1978 = vpack.c.bf16 %v1975, %v1974
        %v1979 = vpack.c.bf16 %v1977, %v1976
        %1981 = vrot.lane.b32.xlu0 %v1836, 96
        %v1982 = vpop.permute.xlu0 %1981
        %v1984 = vsel %vm655, %v1978, 0
        %vm1986 = vcmask 1043456
        %v1988 = vsel %vm1986, %v1982, 0
        %1990 = vmatprep.subr.bf16.mxu0 0
        %1991 = vmatpush1.bf16.msra.mxu0 %v1988
        %1992 = vmatprep.subr.bf16.mxu0 0
        %1993 = vmatpush1.bf16.msra.mxu0 0
        %1994 = vmatprep.subr.bf16.mxu0 0
        %1995 = vmatpush1.bf16.msra.mxu0 0
        %1996 = vmatprep.subr.bf16.mxu0 0
        %1997 = vmatpush1.bf16.msra.mxu0 0
        %1998 = vmatprep.subr.bf16.mxu0 0
        %1999 = vmatpush1.bf16.msra.mxu0 0
        %2000 = vmatprep.subr.bf16.mxu0 0
        %2001 = vmatpush1.bf16.msra.mxu0 0
        %2002 = vmatprep.subr.bf16.mxu0 0
        %2003 = vmatpush1.bf16.msra.mxu0 0
        %2004 = vmatprep.subr.bf16.mxu0 0
        %2005 = vmatpush1.bf16.msra.mxu0 0
        %2006 = vmatprep.subr.bf16.mxu0 0
        %2007 = vmatpush1.bf16.msra.mxu0 0
        %2008 = vmatprep.subr.bf16.mxu0 0
        %2009 = vmatpush1.bf16.msra.mxu0 0
        %2010 = vmatprep.subr.bf16.mxu0 0
        %2011 = vmatpush1.bf16.msra.mxu0 0
        %2012 = vmatprep.subr.bf16.mxu0 0
        %2013 = vmatpush1.bf16.msra.mxu0 0
        %2014 = vmatprep.subr.bf16.mxu0 0
        %2015 = vmatpush1.bf16.msra.mxu0 0
        %2016 = vmatprep.subr.bf16.mxu0 0
        %2017 = vmatpush1.bf16.msra.mxu0 0
        %2018 = vmatprep.subr.bf16.mxu0 0
        %2019 = vmatpush1.bf16.msra.mxu0 0
        %2020 = vmatprep.subr.bf16.mxu0 0
        %2021 = vmatpush1.bf16.msra.mxu0 0
        %2022 = vmatprep.mubr.bf16.mxu0 0
        %2023 = vmatmul.mubr.bf16.gmra.mrb[0].mxu0 %v1984
        %v2024 = vpop.f32.mrb[0].mxu0
        %v2025 = vadd.f32 0.0, %v2024
        %v2026 = vpop.f32.mrb[0].mxu0
        %v2027 = vpop.f32.mrb[0].mxu0
        %v2028 = vadd.f32 0.0, %v2027
        %v2029 = vpop.f32.mrb[0].mxu0
        %2030 = vdwg.mxu0
        %2032 = vrot.lane.b32.xlu0 %v1837, 96
        %v2033 = vpop.permute.xlu0 %2032
        %v2035 = vsel %vm655, %v1979, 0
        %v2038 = vsel %vm1986, %v2033, 0
        %2040 = vmatprep.subr.bf16.mxu0 0
        %2041 = vmatpush1.bf16.msra.mxu0 %v2038
        %2042 = vmatprep.subr.bf16.mxu0 0
        %2043 = vmatpush1.bf16.msra.mxu0 0
        %2044 = vmatprep.subr.bf16.mxu0 0
        %2045 = vmatpush1.bf16.msra.mxu0 0
        %2046 = vmatprep.subr.bf16.mxu0 0
        %2047 = vmatpush1.bf16.msra.mxu0 0
        %2048 = vmatprep.subr.bf16.mxu0 0
        %2049 = vmatpush1.bf16.msra.mxu0 0
        %2050 = vmatprep.subr.bf16.mxu0 0
        %2051 = vmatpush1.bf16.msra.mxu0 0
        %2052 = vmatprep.subr.bf16.mxu0 0
        %2053 = vmatpush1.bf16.msra.mxu0 0
        %2054 = vmatprep.subr.bf16.mxu0 0
        %2055 = vmatpush1.bf16.msra.mxu0 0
        %2056 = vmatprep.subr.bf16.mxu0 0
        %2057 = vmatpush1.bf16.msra.mxu0 0
        %2058 = vmatprep.subr.bf16.mxu0 0
        %2059 = vmatpush1.bf16.msra.mxu0 0
        %2060 = vmatprep.subr.bf16.mxu0 0
        %2061 = vmatpush1.bf16.msra.mxu0 0
        %2062 = vmatprep.subr.bf16.mxu0 0
        %2063 = vmatpush1.bf16.msra.mxu0 0
        %2064 = vmatprep.subr.bf16.mxu0 0
        %2065 = vmatpush1.bf16.msra.mxu0 0
        %2066 = vmatprep.subr.bf16.mxu0 0
        %2067 = vmatpush1.bf16.msra.mxu0 0
        %2068 = vmatprep.subr.bf16.mxu0 0
        %2069 = vmatpush1.bf16.msra.mxu0 0
        %2070 = vmatprep.subr.bf16.mxu0 0
        %2071 = vmatpush1.bf16.msra.mxu0 0
        %2072 = vmatprep.mubr.bf16.mxu0 0
        %2073 = vmatmul.mubr.bf16.gmra.mrb[0].mxu0 %v2035
        %v2074 = vpop.f32.mrb[0].mxu0
        %v2075 = vadd.f32 0.0, %v2074
        %v2076 = vpop.f32.mrb[0].mxu0
        %v2077 = vpop.f32.mrb[0].mxu0
        %v2078 = vadd.f32 0.0, %v2077
        %v2079 = vpop.f32.mrb[0].mxu0
        %2080 = vdwg.mxu0
        %2082 = vrot.lane.b32.xlu0 %v1838, 120
        %v2083 = vpop.permute.xlu0 %2082
        %2084 = vrot.lane.b32.xlu0 %v1836, 120
        %v2085 = vpop.permute.xlu0 %2084
        %v2087 = vsel %vm655, %v2083, 0
        %v2090 = vsel %vm655, %v2085, 0
        %2092 = vmatprep.subr.bf16.mxu0 0
        %2093 = vmatpush1.bf16.xpose.msra.mxu0 %v2090
        %2094 = vmatprep.subr.bf16.mxu0 0
        %2095 = vmatpush1.bf16.xpose.msra.mxu0 0
        %2096 = vmatprep.subr.bf16.mxu0 0
        %2097 = vmatpush1.bf16.xpose.msra.mxu0 0
        %2098 = vmatprep.subr.bf16.mxu0 0
        %2099 = vmatpush1.bf16.xpose.msra.mxu0 0
        %2100 = vmatprep.subr.bf16.mxu0 0
        %2101 = vmatpush1.bf16.xpose.msra.mxu0 0
        %2102 = vmatprep.subr.bf16.mxu0 0
        %2103 = vmatpush1.bf16.xpose.msra.mxu0 0
        %2104 = vmatprep.subr.bf16.mxu0 0
        %2105 = vmatpush1.bf16.xpose.msra.mxu0 0
        %2106 = vmatprep.subr.bf16.mxu0 0
        %2107 = vmatpush1.bf16.xpose.msra.mxu0 0
        %2108 = vmatprep.subr.bf16.mxu0 0
        %2109 = vmatpush1.bf16.xpose.msra.mxu0 0
        %2110 = vmatprep.subr.bf16.mxu0 0
        %2111 = vmatpush1.bf16.xpose.msra.mxu0 0
        %2112 = vmatprep.subr.bf16.mxu0 0
        %2113 = vmatpush1.bf16.xpose.msra.mxu0 0
        %2114 = vmatprep.subr.bf16.mxu0 0
        %2115 = vmatpush1.bf16.xpose.msra.mxu0 0
        %2116 = vmatprep.subr.bf16.mxu0 0
        %2117 = vmatpush1.bf16.xpose.msra.mxu0 0
        %2118 = vmatprep.subr.bf16.mxu0 0
        %2119 = vmatpush1.bf16.xpose.msra.mxu0 0
        %2120 = vmatprep.subr.bf16.mxu0 0
        %2121 = vmatpush1.bf16.xpose.msra.mxu0 0
        %2122 = vmatprep.subr.bf16.mxu0 0
        %2123 = vmatpush1.bf16.xpose.msra.mxu0 0
        %2124 = vmatprep.mubr.bf16.mxu0 0
        %2125 = vmatmul.mubr.bf16.gmra.mrb[0].mxu0 %v2087
        %v2126 = vpop.f32.mrb[0].mxu0
        %v2127 = vadd.f32 0.0, %v2126
        %v2128 = vpop.f32.mrb[0].mxu0
        %v2129 = vpop.f32.mrb[0].mxu0
        %v2130 = vadd.f32 0.0, %v2129
        %v2131 = vpop.f32.mrb[0].mxu0
        %2132 = vdwg.mxu0
        %2134 = vrot.lane.b32.xlu0 %v1839, 120
        %v2135 = vpop.permute.xlu0 %2134
        %2136 = vrot.lane.b32.xlu0 %v1837, 120
        %v2137 = vpop.permute.xlu0 %2136
        %v2139 = vsel %vm655, %v2135, 0
        %v2142 = vsel %vm655, %v2137, 0
        %2144 = vmatprep.subr.bf16.mxu0 0
        %2145 = vmatpush1.bf16.xpose.msra.mxu0 %v2142
        %2146 = vmatprep.subr.bf16.mxu0 0
        %2147 = vmatpush1.bf16.xpose.msra.mxu0 0
        %2148 = vmatprep.subr.bf16.mxu0 0
        %2149 = vmatpush1.bf16.xpose.msra.mxu0 0
        %2150 = vmatprep.subr.bf16.mxu0 0
        %2151 = vmatpush1.bf16.xpose.msra.mxu0 0
        %2152 = vmatprep.subr.bf16.mxu0 0
        %2153 = vmatpush1.bf16.xpose.msra.mxu0 0
        %2154 = vmatprep.subr.bf16.mxu0 0
        %2155 = vmatpush1.bf16.xpose.msra.mxu0 0
        %2156 = vmatprep.subr.bf16.mxu0 0
        %2157 = vmatpush1.bf16.xpose.msra.mxu0 0
        %2158 = vmatprep.subr.bf16.mxu0 0
        %2159 = vmatpush1.bf16.xpose.msra.mxu0 0
        %2160 = vmatprep.subr.bf16.mxu0 0
        %2161 = vmatpush1.bf16.xpose.msra.mxu0 0
        %2162 = vmatprep.subr.bf16.mxu0 0
        %2163 = vmatpush1.bf16.xpose.msra.mxu0 0
        %2164 = vmatprep.subr.bf16.mxu0 0
        %2165 = vmatpush1.bf16.xpose.msra.mxu0 0
        %2166 = vmatprep.subr.bf16.mxu0 0
        %2167 = vmatpush1.bf16.xpose.msra.mxu0 0
        %2168 = vmatprep.subr.bf16.mxu0 0
        %2169 = vmatpush1.bf16.xpose.msra.mxu0 0
        %2170 = vmatprep.subr.bf16.mxu0 0
        %2171 = vmatpush1.bf16.xpose.msra.mxu0 0
        %2172 = vmatprep.subr.bf16.mxu0 0
        %2173 = vmatpush1.bf16.xpose.msra.mxu0 0
        %2174 = vmatprep.subr.bf16.mxu0 0
        %2175 = vmatpush1.bf16.xpose.msra.mxu0 0
        %2176 = vmatprep.mubr.bf16.mxu0 0
        %2177 = vmatmul.mubr.bf16.gmra.mrb[0].mxu0 %v2139
        %v2178 = vpop.f32.mrb[0].mxu0
        %v2179 = vadd.f32 0.0, %v2178
        %v2180 = vpop.f32.mrb[0].mxu0
        %v2181 = vpop.f32.mrb[0].mxu0
        %v2182 = vadd.f32 0.0, %v2181
        %v2183 = vpop.f32.mrb[0].mxu0
        %2184 = vdwg.mxu0
        %v2185 = vsel %vm655, %v2127, -inf
        %2186 = vmax.xlane.f32.xlu0 %v2185
        %v2187 = vpop.xlane.xlu0 %2186
        %v2188 = vsel %vm655, %v2130, -inf
        %2189 = vmax.xlane.f32.xlu0 %v2188
        %v2190 = vpop.xlane.xlu0 %2189
        %v2191 = vsel %vm655, %v2179, -inf
        %2192 = vmax.xlane.f32.xlu0 %v2191
        %v2193 = vpop.xlane.xlu0 %2192
        %v2194 = vsel %vm655, %v2182, -inf
        %2195 = vmax.xlane.f32.xlu0 %v2194
        %v2196 = vpop.xlane.xlu0 %2195
        %v2197 = vsub.f32 %v2127, %v2187
        %v2198 = vsub.f32 %v2130, %v2190
        %v2199 = vsub.f32 %v2179, %v2193
        %v2200 = vsub.f32 %v2182, %v2196
        %v2201 = vmul.f32 %v2197, 1.442695
        %v2202 = vpow.pop %v2201
        %v2203 = vmul.f32 %v2198, 1.442695
        %v2204 = vpow.pop %v2203
        %v2205 = vmul.f32 %v2199, 1.442695
        %v2206 = vpow.pop %v2205
        %v2207 = vmul.f32 %v2200, 1.442695
        %v2208 = vpow.pop %v2207
        %v2209 = vsel %vm655, %v2202, 0.0
        %2210 = vadd.xlane.f32.xlu0 %v2209
        %v2211 = vpop.xlane.xlu0 %2210
        %v2212 = vsel %vm655, %v2204, 0.0
        %2213 = vadd.xlane.f32.xlu0 %v2212
        %v2214 = vpop.xlane.xlu0 %2213
        %v2215 = vsel %vm655, %v2206, 0.0
        %2216 = vadd.xlane.f32.xlu0 %v2215
        %v2217 = vpop.xlane.xlu0 %2216
        %v2218 = vsel %vm655, %v2208, 0.0
        %2219 = vadd.xlane.f32.xlu0 %v2218
        %v2220 = vpop.xlane.xlu0 %2219
        %v2221 = vrcp.pop %v2211
        %v2222 = vrcp.pop %v2214
        %v2223 = vrcp.pop %v2217
        %v2224 = vrcp.pop %v2220
        %v2225 = vmul.f32 %v2202, %v2221
        %v2226 = vmul.f32 %v2204, %v2222
        %v2227 = vmul.f32 %v2206, %v2223
        %v2228 = vmul.f32 %v2208, %v2224
        %v2229 = vpack.c.bf16 %v2226, %v2225
        %v2230 = vpack.c.bf16 %v2228, %v2227
        %2231 = vrot.lane.b32.xlu0 %v1836, 88
        %v2232 = vpop.permute.xlu0 %2231
        %v2234 = vsel %vm655, %v2229, 0
        %v2237 = vsel %vm1986, %v2232, 0
        %2239 = vmatprep.subr.bf16.mxu0 0
        %2240 = vmatpush1.bf16.msra.mxu0 %v2237
        %2241 = vmatprep.subr.bf16.mxu0 0
        %2242 = vmatpush1.bf16.msra.mxu0 0
        %2243 = vmatprep.subr.bf16.mxu0 0
        %2244 = vmatpush1.bf16.msra.mxu0 0
        %2245 = vmatprep.subr.bf16.mxu0 0
        %2246 = vmatpush1.bf16.msra.mxu0 0
        %2247 = vmatprep.subr.bf16.mxu0 0
        %2248 = vmatpush1.bf16.msra.mxu0 0
        %2249 = vmatprep.subr.bf16.mxu0 0
        %2250 = vmatpush1.bf16.msra.mxu0 0
        %2251 = vmatprep.subr.bf16.mxu0 0
        %2252 = vmatpush1.bf16.msra.mxu0 0
        %2253 = vmatprep.subr.bf16.mxu0 0
        %2254 = vmatpush1.bf16.msra.mxu0 0
        %2255 = vmatprep.subr.bf16.mxu0 0
        %2256 = vmatpush1.bf16.msra.mxu0 0
        %2257 = vmatprep.subr.bf16.mxu0 0
        %2258 = vmatpush1.bf16.msra.mxu0 0
        %2259 = vmatprep.subr.bf16.mxu0 0
        %2260 = vmatpush1.bf16.msra.mxu0 0
        %2261 = vmatprep.subr.bf16.mxu0 0
        %2262 = vmatpush1.bf16.msra.mxu0 0
        %2263 = vmatprep.subr.bf16.mxu0 0
        %2264 = vmatpush1.bf16.msra.mxu0 0
        %2265 = vmatprep.subr.bf16.mxu0 0
        %2266 = vmatpush1.bf16.msra.mxu0 0
        %2267 = vmatprep.subr.bf16.mxu0 0
        %2268 = vmatpush1.bf16.msra.mxu0 0
        %2269 = vmatprep.subr.bf16.mxu0 0
        %2270 = vmatpush1.bf16.msra.mxu0 0
        %2271 = vmatprep.mubr.bf16.mxu0 0
        %2272 = vmatmul.mubr.bf16.gmra.mrb[0].mxu0 %v2234
        %v2273 = vpop.f32.mrb[0].mxu0
        %v2274 = vadd.f32 0.0, %v2273
        %v2275 = vpop.f32.mrb[0].mxu0
        %v2276 = vpop.f32.mrb[0].mxu0
        %v2277 = vadd.f32 0.0, %v2276
        %v2278 = vpop.f32.mrb[0].mxu0
        %2279 = vdwg.mxu0
        %2280 = vrot.lane.b32.xlu0 %v1837, 88
        %v2281 = vpop.permute.xlu0 %2280
        %v2283 = vsel %vm655, %v2230, 0
        %v2286 = vsel %vm1986, %v2281, 0
        %2288 = vmatprep.subr.bf16.mxu0 0
        %2289 = vmatpush1.bf16.msra.mxu0 %v2286
        %2290 = vmatprep.subr.bf16.mxu0 0
        %2291 = vmatpush1.bf16.msra.mxu0 0
        %2292 = vmatprep.subr.bf16.mxu0 0
        %2293 = vmatpush1.bf16.msra.mxu0 0
        %2294 = vmatprep.subr.bf16.mxu0 0
        %2295 = vmatpush1.bf16.msra.mxu0 0
        %2296 = vmatprep.subr.bf16.mxu0 0
        %2297 = vmatpush1.bf16.msra.mxu0 0
        %2298 = vmatprep.subr.bf16.mxu0 0
        %2299 = vmatpush1.bf16.msra.mxu0 0
        %2300 = vmatprep.subr.bf16.mxu0 0
        %2301 = vmatpush1.bf16.msra.mxu0 0
        %2302 = vmatprep.subr.bf16.mxu0 0
        %2303 = vmatpush1.bf16.msra.mxu0 0
        %2304 = vmatprep.subr.bf16.mxu0 0
        %2305 = vmatpush1.bf16.msra.mxu0 0
        %2306 = vmatprep.subr.bf16.mxu0 0
        %2307 = vmatpush1.bf16.msra.mxu0 0
        %2308 = vmatprep.subr.bf16.mxu0 0
        %2309 = vmatpush1.bf16.msra.mxu0 0
        %2310 = vmatprep.subr.bf16.mxu0 0
        %2311 = vmatpush1.bf16.msra.mxu0 0
        %2312 = vmatprep.subr.bf16.mxu0 0
        %2313 = vmatpush1.bf16.msra.mxu0 0
        %2314 = vmatprep.subr.bf16.mxu0 0
        %2315 = vmatpush1.bf16.msra.mxu0 0
        %2316 = vmatprep.subr.bf16.mxu0 0
        %2317 = vmatpush1.bf16.msra.mxu0 0
        %2318 = vmatprep.subr.bf16.mxu0 0
        %2319 = vmatpush1.bf16.msra.mxu0 0
        %2320 = vmatprep.mubr.bf16.mxu0 0
        %2321 = vmatmul.mubr.bf16.gmra.mrb[0].mxu0 %v2283
        %v2322 = vpop.f32.mrb[0].mxu0
        %v2323 = vadd.f32 0.0, %v2322
        %v2324 = vpop.f32.mrb[0].mxu0
        %v2325 = vpop.f32.mrb[0].mxu0
        %v2326 = vadd.f32 0.0, %v2325
        %v2327 = vpop.f32.mrb[0].mxu0
        %2328 = vdwg.mxu0
        %2329 = vrot.lane.b32.xlu0 %v1838, 112
        %v2330 = vpop.permute.xlu0 %2329
        %2331 = vrot.lane.b32.xlu0 %v1836, 112
        %v2332 = vpop.permute.xlu0 %2331
        %v2334 = vsel %vm655, %v2330, 0
        %v2337 = vsel %vm655, %v2332, 0
        %2339 = vmatprep.subr.bf16.mxu0 0
        %2340 = vmatpush1.bf16.xpose.msra.mxu0 %v2337
        %2341 = vmatprep.subr.bf16.mxu0 0
        %2342 = vmatpush1.bf16.xpose.msra.mxu0 0
        %2343 = vmatprep.subr.bf16.mxu0 0
        %2344 = vmatpush1.bf16.xpose.msra.mxu0 0
        %2345 = vmatprep.subr.bf16.mxu0 0
        %2346 = vmatpush1.bf16.xpose.msra.mxu0 0
        %2347 = vmatprep.subr.bf16.mxu0 0
        %2348 = vmatpush1.bf16.xpose.msra.mxu0 0
        %2349 = vmatprep.subr.bf16.mxu0 0
        %2350 = vmatpush1.bf16.xpose.msra.mxu0 0
        %2351 = vmatprep.subr.bf16.mxu0 0
        %2352 = vmatpush1.bf16.xpose.msra.mxu0 0
        %2353 = vmatprep.subr.bf16.mxu0 0
        %2354 = vmatpush1.bf16.xpose.msra.mxu0 0
        %2355 = vmatprep.subr.bf16.mxu0 0
        %2356 = vmatpush1.bf16.xpose.msra.mxu0 0
        %2357 = vmatprep.subr.bf16.mxu0 0
        %2358 = vmatpush1.bf16.xpose.msra.mxu0 0
        %2359 = vmatprep.subr.bf16.mxu0 0
        %2360 = vmatpush1.bf16.xpose.msra.mxu0 0
        %2361 = vmatprep.subr.bf16.mxu0 0
        %2362 = vmatpush1.bf16.xpose.msra.mxu0 0
        %2363 = vmatprep.subr.bf16.mxu0 0
        %2364 = vmatpush1.bf16.xpose.msra.mxu0 0
        %2365 = vmatprep.subr.bf16.mxu0 0
        %2366 = vmatpush1.bf16.xpose.msra.mxu0 0
        %2367 = vmatprep.subr.bf16.mxu0 0
        %2368 = vmatpush1.bf16.xpose.msra.mxu0 0
        %2369 = vmatprep.subr.bf16.mxu0 0
        %2370 = vmatpush1.bf16.xpose.msra.mxu0 0
        %2371 = vmatprep.mubr.bf16.mxu0 0
        %2372 = vmatmul.mubr.bf16.gmra.mrb[0].mxu0 %v2334
        %v2373 = vpop.f32.mrb[0].mxu0
        %v2374 = vadd.f32 0.0, %v2373
        %v2375 = vpop.f32.mrb[0].mxu0
        %v2376 = vpop.f32.mrb[0].mxu0
        %v2377 = vadd.f32 0.0, %v2376
        %v2378 = vpop.f32.mrb[0].mxu0
        %2379 = vdwg.mxu0
        %2380 = vrot.lane.b32.xlu0 %v1839, 112
        %v2381 = vpop.permute.xlu0 %2380
        %2382 = vrot.lane.b32.xlu0 %v1837, 112
        %v2383 = vpop.permute.xlu0 %2382
        %v2385 = vsel %vm655, %v2381, 0
        %v2388 = vsel %vm655, %v2383, 0
        %2390 = vmatprep.subr.bf16.mxu0 0
        %2391 = vmatpush1.bf16.xpose.msra.mxu0 %v2388
        %2392 = vmatprep.subr.bf16.mxu0 0
        %2393 = vmatpush1.bf16.xpose.msra.mxu0 0
        %2394 = vmatprep.subr.bf16.mxu0 0
        %2395 = vmatpush1.bf16.xpose.msra.mxu0 0
        %2396 = vmatprep.subr.bf16.mxu0 0
        %2397 = vmatpush1.bf16.xpose.msra.mxu0 0
        %2398 = vmatprep.subr.bf16.mxu0 0
        %2399 = vmatpush1.bf16.xpose.msra.mxu0 0
        %2400 = vmatprep.subr.bf16.mxu0 0
        %2401 = vmatpush1.bf16.xpose.msra.mxu0 0
        %2402 = vmatprep.subr.bf16.mxu0 0
        %2403 = vmatpush1.bf16.xpose.msra.mxu0 0
        %2404 = vmatprep.subr.bf16.mxu0 0
        %2405 = vmatpush1.bf16.xpose.msra.mxu0 0
        %2406 = vmatprep.subr.bf16.mxu0 0
        %2407 = vmatpush1.bf16.xpose.msra.mxu0 0
        %2408 = vmatprep.subr.bf16.mxu0 0
        %2409 = vmatpush1.bf16.xpose.msra.mxu0 0
        %2410 = vmatprep.subr.bf16.mxu0 0
        %2411 = vmatpush1.bf16.xpose.msra.mxu0 0
        %2412 = vmatprep.subr.bf16.mxu0 0
        %2413 = vmatpush1.bf16.xpose.msra.mxu0 0
        %2414 = vmatprep.subr.bf16.mxu0 0
        %2415 = vmatpush1.bf16.xpose.msra.mxu0 0
        %2416 = vmatprep.subr.bf16.mxu0 0
        %2417 = vmatpush1.bf16.xpose.msra.mxu0 0
        %2418 = vmatprep.subr.bf16.mxu0 0
        %2419 = vmatpush1.bf16.xpose.msra.mxu0 0
        %2420 = vmatprep.subr.bf16.mxu0 0
        %2421 = vmatpush1.bf16.xpose.msra.mxu0 0
        %2422 = vmatprep.mubr.bf16.mxu0 0
        %2423 = vmatmul.mubr.bf16.gmra.mrb[0].mxu0 %v2385
        %v2424 = vpop.f32.mrb[0].mxu0
        %v2425 = vadd.f32 0.0, %v2424
        %v2426 = vpop.f32.mrb[0].mxu0
        %v2427 = vpop.f32.mrb[0].mxu0
        %v2428 = vadd.f32 0.0, %v2427
        %v2429 = vpop.f32.mrb[0].mxu0
        %2430 = vdwg.mxu0
        %v2431 = vsel %vm655, %v2374, -inf
        %2432 = vmax.xlane.f32.xlu0 %v2431
        %v2433 = vpop.xlane.xlu0 %2432
        %v2434 = vsel %vm655, %v2377, -inf
        %2435 = vmax.xlane.f32.xlu0 %v2434
        %v2436 = vpop.xlane.xlu0 %2435
        %v2437 = vsel %vm655, %v2425, -inf
        %2438 = vmax.xlane.f32.xlu0 %v2437
        %v2439 = vpop.xlane.xlu0 %2438
        %v2440 = vsel %vm655, %v2428, -inf
        %2441 = vmax.xlane.f32.xlu0 %v2440
        %v2442 = vpop.xlane.xlu0 %2441
        %v2443 = vsub.f32 %v2374, %v2433
        %v2444 = vsub.f32 %v2377, %v2436
        %v2445 = vsub.f32 %v2425, %v2439
        %v2446 = vsub.f32 %v2428, %v2442
        %v2447 = vmul.f32 %v2443, 1.442695
        %v2448 = vpow.pop %v2447
        %v2449 = vmul.f32 %v2444, 1.442695
        %v2450 = vpow.pop %v2449
        %v2451 = vmul.f32 %v2445, 1.442695
        %v2452 = vpow.pop %v2451
        %v2453 = vmul.f32 %v2446, 1.442695
        %v2454 = vpow.pop %v2453
        %v2455 = vsel %vm655, %v2448, 0.0
        %2456 = vadd.xlane.f32.xlu0 %v2455
        %v2457 = vpop.xlane.xlu0 %2456
        %v2458 = vsel %vm655, %v2450, 0.0
        %2459 = vadd.xlane.f32.xlu0 %v2458
        %v2460 = vpop.xlane.xlu0 %2459
        %v2461 = vsel %vm655, %v2452, 0.0
        %2462 = vadd.xlane.f32.xlu0 %v2461
        %v2463 = vpop.xlane.xlu0 %2462
        %v2464 = vsel %vm655, %v2454, 0.0
        %2465 = vadd.xlane.f32.xlu0 %v2464
        %v2466 = vpop.xlane.xlu0 %2465
        %v2467 = vrcp.pop %v2457
        %v2468 = vrcp.pop %v2460
        %v2469 = vrcp.pop %v2463
        %v2470 = vrcp.pop %v2466
        %v2471 = vmul.f32 %v2448, %v2467
        %v2472 = vmul.f32 %v2450, %v2468
        %v2473 = vmul.f32 %v2452, %v2469
        %v2474 = vmul.f32 %v2454, %v2470
        %v2475 = vpack.c.bf16 %v2472, %v2471
        %v2476 = vpack.c.bf16 %v2474, %v2473
        %2477 = vrot.lane.b32.xlu0 %v1836, 80
        %v2478 = vpop.permute.xlu0 %2477
        %v2480 = vsel %vm655, %v2475, 0
        %v2483 = vsel %vm1986, %v2478, 0
        %2485 = vmatprep.subr.bf16.mxu0 0
        %2486 = vmatpush1.bf16.msra.mxu0 %v2483
        %2487 = vmatprep.subr.bf16.mxu0 0
        %2488 = vmatpush1.bf16.msra.mxu0 0
        %2489 = vmatprep.subr.bf16.mxu0 0
        %2490 = vmatpush1.bf16.msra.mxu0 0
        %2491 = vmatprep.subr.bf16.mxu0 0
        %2492 = vmatpush1.bf16.msra.mxu0 0
        %2493 = vmatprep.subr.bf16.mxu0 0
        %2494 = vmatpush1.bf16.msra.mxu0 0
        %2495 = vmatprep.subr.bf16.mxu0 0
        %2496 = vmatpush1.bf16.msra.mxu0 0
        %2497 = vmatprep.subr.bf16.mxu0 0
        %2498 = vmatpush1.bf16.msra.mxu0 0
        %2499 = vmatprep.subr.bf16.mxu0 0
        %2500 = vmatpush1.bf16.msra.mxu0 0
        %2501 = vmatprep.subr.bf16.mxu0 0
        %2502 = vmatpush1.bf16.msra.mxu0 0
        %2503 = vmatprep.subr.bf16.mxu0 0
        %2504 = vmatpush1.bf16.msra.mxu0 0
        %2505 = vmatprep.subr.bf16.mxu0 0
        %2506 = vmatpush1.bf16.msra.mxu0 0
        %2507 = vmatprep.subr.bf16.mxu0 0
        %2508 = vmatpush1.bf16.msra.mxu0 0
        %2509 = vmatprep.subr.bf16.mxu0 0
        %2510 = vmatpush1.bf16.msra.mxu0 0
        %2511 = vmatprep.subr.bf16.mxu0 0
        %2512 = vmatpush1.bf16.msra.mxu0 0
        %2513 = vmatprep.subr.bf16.mxu0 0
        %2514 = vmatpush1.bf16.msra.mxu0 0
        %2515 = vmatprep.subr.bf16.mxu0 0
        %2516 = vmatpush1.bf16.msra.mxu0 0
        %2517 = vmatprep.mubr.bf16.mxu0 0
        %2518 = vmatmul.mubr.bf16.gmra.mrb[0].mxu0 %v2480
        %v2519 = vpop.f32.mrb[0].mxu0
        %v2520 = vadd.f32 0.0, %v2519
        %v2521 = vpop.f32.mrb[0].mxu0
        %v2522 = vpop.f32.mrb[0].mxu0
        %v2523 = vadd.f32 0.0, %v2522
        %v2524 = vpop.f32.mrb[0].mxu0
        %2525 = vdwg.mxu0
        %2526 = vrot.lane.b32.xlu0 %v1837, 80
        %v2527 = vpop.permute.xlu0 %2526
        %v2529 = vsel %vm655, %v2476, 0
        %v2532 = vsel %vm1986, %v2527, 0
        %2534 = vmatprep.subr.bf16.mxu0 0
        %2535 = vmatpush1.bf16.msra.mxu0 %v2532
        %2536 = vmatprep.subr.bf16.mxu0 0
        %2537 = vmatpush1.bf16.msra.mxu0 0
        %2538 = vmatprep.subr.bf16.mxu0 0
        %2539 = vmatpush1.bf16.msra.mxu0 0
        %2540 = vmatprep.subr.bf16.mxu0 0
        %2541 = vmatpush1.bf16.msra.mxu0 0
        %2542 = vmatprep.subr.bf16.mxu0 0
        %2543 = vmatpush1.bf16.msra.mxu0 0
        %2544 = vmatprep.subr.bf16.mxu0 0
        %2545 = vmatpush1.bf16.msra.mxu0 0
        %2546 = vmatprep.subr.bf16.mxu0 0
        %2547 = vmatpush1.bf16.msra.mxu0 0
        %2548 = vmatprep.subr.bf16.mxu0 0
        %2549 = vmatpush1.bf16.msra.mxu0 0
        %2550 = vmatprep.subr.bf16.mxu0 0
        %2551 = vmatpush1.bf16.msra.mxu0 0
        %2552 = vmatprep.subr.bf16.mxu0 0
        %2553 = vmatpush1.bf16.msra.mxu0 0
        %2554 = vmatprep.subr.bf16.mxu0 0
        %2555 = vmatpush1.bf16.msra.mxu0 0
        %2556 = vmatprep.subr.bf16.mxu0 0
        %2557 = vmatpush1.bf16.msra.mxu0 0
        %2558 = vmatprep.subr.bf16.mxu0 0
        %2559 = vmatpush1.bf16.msra.mxu0 0
        %2560 = vmatprep.subr.bf16.mxu0 0
        %2561 = vmatpush1.bf16.msra.mxu0 0
        %2562 = vmatprep.subr.bf16.mxu0 0
        %2563 = vmatpush1.bf16.msra.mxu0 0
        %2564 = vmatprep.subr.bf16.mxu0 0
        %2565 = vmatpush1.bf16.msra.mxu0 0
        %2566 = vmatprep.mubr.bf16.mxu0 0
        %2567 = vmatmul.mubr.bf16.gmra.mrb[0].mxu0 %v2529
        %v2568 = vpop.f32.mrb[0].mxu0
        %v2569 = vadd.f32 0.0, %v2568
        %v2570 = vpop.f32.mrb[0].mxu0
        %v2571 = vpop.f32.mrb[0].mxu0
        %v2572 = vadd.f32 0.0, %v2571
        %v2573 = vpop.f32.mrb[0].mxu0
        %2574 = vdwg.mxu0
        %2575 = vrot.lane.b32.xlu0 %v1838, 104
        %v2576 = vpop.permute.xlu0 %2575
        %2577 = vrot.lane.b32.xlu0 %v1836, 104
        %v2578 = vpop.permute.xlu0 %2577
        %v2580 = vsel %vm655, %v2576, 0
        %v2583 = vsel %vm655, %v2578, 0
        %2585 = vmatprep.subr.bf16.mxu0 0
        %2586 = vmatpush1.bf16.xpose.msra.mxu0 %v2583
        %2587 = vmatprep.subr.bf16.mxu0 0
        %2588 = vmatpush1.bf16.xpose.msra.mxu0 0
        %2589 = vmatprep.subr.bf16.mxu0 0
        %2590 = vmatpush1.bf16.xpose.msra.mxu0 0
        %2591 = vmatprep.subr.bf16.mxu0 0
        %2592 = vmatpush1.bf16.xpose.msra.mxu0 0
        %2593 = vmatprep.subr.bf16.mxu0 0
        %2594 = vmatpush1.bf16.xpose.msra.mxu0 0
        %2595 = vmatprep.subr.bf16.mxu0 0
        %2596 = vmatpush1.bf16.xpose.msra.mxu0 0
        %2597 = vmatprep.subr.bf16.mxu0 0
        %2598 = vmatpush1.bf16.xpose.msra.mxu0 0
        %2599 = vmatprep.subr.bf16.mxu0 0
        %2600 = vmatpush1.bf16.xpose.msra.mxu0 0
        %2601 = vmatprep.subr.bf16.mxu0 0
        %2602 = vmatpush1.bf16.xpose.msra.mxu0 0
        %2603 = vmatprep.subr.bf16.mxu0 0
        %2604 = vmatpush1.bf16.xpose.msra.mxu0 0
        %2605 = vmatprep.subr.bf16.mxu0 0
        %2606 = vmatpush1.bf16.xpose.msra.mxu0 0
        %2607 = vmatprep.subr.bf16.mxu0 0
        %2608 = vmatpush1.bf16.xpose.msra.mxu0 0
        %2609 = vmatprep.subr.bf16.mxu0 0
        %2610 = vmatpush1.bf16.xpose.msra.mxu0 0
        %2611 = vmatprep.subr.bf16.mxu0 0
        %2612 = vmatpush1.bf16.xpose.msra.mxu0 0
        %2613 = vmatprep.subr.bf16.mxu0 0
        %2614 = vmatpush1.bf16.xpose.msra.mxu0 0
        %2615 = vmatprep.subr.bf16.mxu0 0
        %2616 = vmatpush1.bf16.xpose.msra.mxu0 0
        %2617 = vmatprep.mubr.bf16.mxu0 0
        %2618 = vmatmul.mubr.bf16.gmra.mrb[0].mxu0 %v2580
        %v2619 = vpop.f32.mrb[0].mxu0
        %v2620 = vadd.f32 0.0, %v2619
        %v2621 = vpop.f32.mrb[0].mxu0
        %v2622 = vpop.f32.mrb[0].mxu0
        %v2623 = vadd.f32 0.0, %v2622
        %v2624 = vpop.f32.mrb[0].mxu0
        %2625 = vdwg.mxu0
        %2626 = vrot.lane.b32.xlu0 %v1839, 104
        %v2627 = vpop.permute.xlu0 %2626
        %2628 = vrot.lane.b32.xlu0 %v1837, 104
        %v2629 = vpop.permute.xlu0 %2628
        %v2631 = vsel %vm655, %v2627, 0
        %v2634 = vsel %vm655, %v2629, 0
        %2636 = vmatprep.subr.bf16.mxu0 0
        %2637 = vmatpush1.bf16.xpose.msra.mxu0 %v2634
        %2638 = vmatprep.subr.bf16.mxu0 0
        %2639 = vmatpush1.bf16.xpose.msra.mxu0 0
        %2640 = vmatprep.subr.bf16.mxu0 0
        %2641 = vmatpush1.bf16.xpose.msra.mxu0 0
        %2642 = vmatprep.subr.bf16.mxu0 0
        %2643 = vmatpush1.bf16.xpose.msra.mxu0 0
        %2644 = vmatprep.subr.bf16.mxu0 0
        %2645 = vmatpush1.bf16.xpose.msra.mxu0 0
        %2646 = vmatprep.subr.bf16.mxu0 0
        %2647 = vmatpush1.bf16.xpose.msra.mxu0 0
        %2648 = vmatprep.subr.bf16.mxu0 0
        %2649 = vmatpush1.bf16.xpose.msra.mxu0 0
        %2650 = vmatprep.subr.bf16.mxu0 0
        %2651 = vmatpush1.bf16.xpose.msra.mxu0 0
        %2652 = vmatprep.subr.bf16.mxu0 0
        %2653 = vmatpush1.bf16.xpose.msra.mxu0 0
        %2654 = vmatprep.subr.bf16.mxu0 0
        %2655 = vmatpush1.bf16.xpose.msra.mxu0 0
        %2656 = vmatprep.subr.bf16.mxu0 0
        %2657 = vmatpush1.bf16.xpose.msra.mxu0 0
        %2658 = vmatprep.subr.bf16.mxu0 0
        %2659 = vmatpush1.bf16.xpose.msra.mxu0 0
        %2660 = vmatprep.subr.bf16.mxu0 0
        %2661 = vmatpush1.bf16.xpose.msra.mxu0 0
        %2662 = vmatprep.subr.bf16.mxu0 0
        %2663 = vmatpush1.bf16.xpose.msra.mxu0 0
        %2664 = vmatprep.subr.bf16.mxu0 0
        %2665 = vmatpush1.bf16.xpose.msra.mxu0 0
        %2666 = vmatprep.subr.bf16.mxu0 0
        %2667 = vmatpush1.bf16.xpose.msra.mxu0 0
        %2668 = vmatprep.mubr.bf16.mxu0 0
        %2669 = vmatmul.mubr.bf16.gmra.mrb[0].mxu0 %v2631
        %v2670 = vpop.f32.mrb[0].mxu0
        %v2671 = vadd.f32 0.0, %v2670
        %v2672 = vpop.f32.mrb[0].mxu0
        %v2673 = vpop.f32.mrb[0].mxu0
        %v2674 = vadd.f32 0.0, %v2673
        %v2675 = vpop.f32.mrb[0].mxu0
        %2676 = vdwg.mxu0
        %v2677 = vsel %vm655, %v2620, -inf
        %2678 = vmax.xlane.f32.xlu0 %v2677
        %v2679 = vpop.xlane.xlu0 %2678
        %v2680 = vsel %vm655, %v2623, -inf
        %2681 = vmax.xlane.f32.xlu0 %v2680
        %v2682 = vpop.xlane.xlu0 %2681
        %v2683 = vsel %vm655, %v2671, -inf
        %2684 = vmax.xlane.f32.xlu0 %v2683
        %v2685 = vpop.xlane.xlu0 %2684
        %v2686 = vsel %vm655, %v2674, -inf
        %2687 = vmax.xlane.f32.xlu0 %v2686
        %v2688 = vpop.xlane.xlu0 %2687
        %v2689 = vsub.f32 %v2620, %v2679
        %v2690 = vsub.f32 %v2623, %v2682
        %v2691 = vsub.f32 %v2671, %v2685
        %v2692 = vsub.f32 %v2674, %v2688
        %v2693 = vmul.f32 %v2689, 1.442695
        %v2694 = vpow.pop %v2693
        %v2695 = vmul.f32 %v2690, 1.442695
        %v2696 = vpow.pop %v2695
        %v2697 = vmul.f32 %v2691, 1.442695
        %v2698 = vpow.pop %v2697
        %v2699 = vmul.f32 %v2692, 1.442695
        %v2700 = vpow.pop %v2699
        %v2701 = vsel %vm655, %v2694, 0.0
        %2702 = vadd.xlane.f32.xlu0 %v2701
        %v2703 = vpop.xlane.xlu0 %2702
        %v2704 = vsel %vm655, %v2696, 0.0
        %2705 = vadd.xlane.f32.xlu0 %v2704
        %v2706 = vpop.xlane.xlu0 %2705
        %v2707 = vsel %vm655, %v2698, 0.0
        %2708 = vadd.xlane.f32.xlu0 %v2707
        %v2709 = vpop.xlane.xlu0 %2708
        %v2710 = vsel %vm655, %v2700, 0.0
        %2711 = vadd.xlane.f32.xlu0 %v2710
        %v2712 = vpop.xlane.xlu0 %2711
        %v2713 = vrcp.pop %v2703
        %v2714 = vrcp.pop %v2706
        %v2715 = vrcp.pop %v2709
        %v2716 = vrcp.pop %v2712
        %v2717 = vmul.f32 %v2694, %v2713
        %v2718 = vmul.f32 %v2696, %v2714
        %v2719 = vmul.f32 %v2698, %v2715
        %v2720 = vmul.f32 %v2700, %v2716
        %v2721 = vpack.c.bf16 %v2718, %v2717
        %v2722 = vpack.c.bf16 %v2720, %v2719
        %2723 = vrot.lane.b32.xlu0 %v1836, 72
        %v2724 = vpop.permute.xlu0 %2723
        %v2726 = vsel %vm655, %v2721, 0
        %v2729 = vsel %vm1986, %v2724, 0
        %2731 = vmatprep.subr.bf16.mxu0 0
        %2732 = vmatpush1.bf16.msra.mxu0 %v2729
        %2733 = vmatprep.subr.bf16.mxu0 0
        %2734 = vmatpush1.bf16.msra.mxu0 0
        %2735 = vmatprep.subr.bf16.mxu0 0
        %2736 = vmatpush1.bf16.msra.mxu0 0
        %2737 = vmatprep.subr.bf16.mxu0 0
        %2738 = vmatpush1.bf16.msra.mxu0 0
        %2739 = vmatprep.subr.bf16.mxu0 0
        %2740 = vmatpush1.bf16.msra.mxu0 0
        %2741 = vmatprep.subr.bf16.mxu0 0
        %2742 = vmatpush1.bf16.msra.mxu0 0
        %2743 = vmatprep.subr.bf16.mxu0 0
        %2744 = vmatpush1.bf16.msra.mxu0 0
        %2745 = vmatprep.subr.bf16.mxu0 0
        %2746 = vmatpush1.bf16.msra.mxu0 0
        %2747 = vmatprep.subr.bf16.mxu0 0
        %2748 = vmatpush1.bf16.msra.mxu0 0
        %2749 = vmatprep.subr.bf16.mxu0 0
        %2750 = vmatpush1.bf16.msra.mxu0 0
        %2751 = vmatprep.subr.bf16.mxu0 0
        %2752 = vmatpush1.bf16.msra.mxu0 0
        %2753 = vmatprep.subr.bf16.mxu0 0
        %2754 = vmatpush1.bf16.msra.mxu0 0
        %2755 = vmatprep.subr.bf16.mxu0 0
        %2756 = vmatpush1.bf16.msra.mxu0 0
        %2757 = vmatprep.subr.bf16.mxu0 0
        %2758 = vmatpush1.bf16.msra.mxu0 0
        %2759 = vmatprep.subr.bf16.mxu0 0
        %2760 = vmatpush1.bf16.msra.mxu0 0
        %2761 = vmatprep.subr.bf16.mxu0 0
        %2762 = vmatpush1.bf16.msra.mxu0 0
        %2763 = vmatprep.mubr.bf16.mxu0 0
        %2764 = vmatmul.mubr.bf16.gmra.mrb[0].mxu0 %v2726
        %v2765 = vpop.f32.mrb[0].mxu0
        %v2766 = vadd.f32 0.0, %v2765
        %v2767 = vpop.f32.mrb[0].mxu0
        %v2768 = vpop.f32.mrb[0].mxu0
        %v2769 = vadd.f32 0.0, %v2768
        %v2770 = vpop.f32.mrb[0].mxu0
        %2771 = vdwg.mxu0
        %2772 = vrot.lane.b32.xlu0 %v1837, 72
        %v2773 = vpop.permute.xlu0 %2772
        %v2775 = vsel %vm655, %v2722, 0
        %v2778 = vsel %vm1986, %v2773, 0
        %2780 = vmatprep.subr.bf16.mxu0 0
        %2781 = vmatpush1.bf16.msra.mxu0 %v2778
        %2782 = vmatprep.subr.bf16.mxu0 0
        %2783 = vmatpush1.bf16.msra.mxu0 0
        %2784 = vmatprep.subr.bf16.mxu0 0
        %2785 = vmatpush1.bf16.msra.mxu0 0
        %2786 = vmatprep.subr.bf16.mxu0 0
        %2787 = vmatpush1.bf16.msra.mxu0 0
        %2788 = vmatprep.subr.bf16.mxu0 0
        %2789 = vmatpush1.bf16.msra.mxu0 0
        %2790 = vmatprep.subr.bf16.mxu0 0
        %2791 = vmatpush1.bf16.msra.mxu0 0
        %2792 = vmatprep.subr.bf16.mxu0 0
        %2793 = vmatpush1.bf16.msra.mxu0 0
        %2794 = vmatprep.subr.bf16.mxu0 0
        %2795 = vmatpush1.bf16.msra.mxu0 0
        %2796 = vmatprep.subr.bf16.mxu0 0
        %2797 = vmatpush1.bf16.msra.mxu0 0
        %2798 = vmatprep.subr.bf16.mxu0 0
        %2799 = vmatpush1.bf16.msra.mxu0 0
        %2800 = vmatprep.subr.bf16.mxu0 0
        %2801 = vmatpush1.bf16.msra.mxu0 0
        %2802 = vmatprep.subr.bf16.mxu0 0
        %2803 = vmatpush1.bf16.msra.mxu0 0
        %2804 = vmatprep.subr.bf16.mxu0 0
        %2805 = vmatpush1.bf16.msra.mxu0 0
        %2806 = vmatprep.subr.bf16.mxu0 0
        %2807 = vmatpush1.bf16.msra.mxu0 0
        %2808 = vmatprep.subr.bf16.mxu0 0
        %2809 = vmatpush1.bf16.msra.mxu0 0
        %2810 = vmatprep.subr.bf16.mxu0 0
        %2811 = vmatpush1.bf16.msra.mxu0 0
        %2812 = vmatprep.mubr.bf16.mxu0 0
        %2813 = vmatmul.mubr.bf16.gmra.mrb[0].mxu0 %v2775
        %v2814 = vpop.f32.mrb[0].mxu0
        %v2815 = vadd.f32 0.0, %v2814
        %v2816 = vpop.f32.mrb[0].mxu0
        %v2817 = vpop.f32.mrb[0].mxu0
        %v2818 = vadd.f32 0.0, %v2817
        %v2819 = vpop.f32.mrb[0].mxu0
        %2820 = vdwg.mxu0
        %2825 = vrot.lane.b32.xlu0 %v2274, 8
        %v2826 = vpop.permute.xlu0 %2825
        %2827 = vrot.lane.b32.xlu0 %v2277, 8
        %v2828 = vpop.permute.xlu0 %2827
        %2829 = vrot.lane.b32.xlu0 %v2323, 8
        %v2830 = vpop.permute.xlu0 %2829
        %2831 = vrot.lane.b32.xlu0 %v2326, 8
        %v2832 = vpop.permute.xlu0 %2831
        %2841 = vrot.lane.b32.xlu0 %v2520, 16
        %v2842 = vpop.permute.xlu0 %2841
        %2843 = vrot.lane.b32.xlu0 %v2523, 16
        %v2844 = vpop.permute.xlu0 %2843
        %2845 = vrot.lane.b32.xlu0 %v2569, 16
        %v2846 = vpop.permute.xlu0 %2845
        %2847 = vrot.lane.b32.xlu0 %v2572, 16
        %v2848 = vpop.permute.xlu0 %2847
        %2857 = vrot.lane.b32.xlu0 %v2766, 24
        %v2858 = vpop.permute.xlu0 %2857
        %2859 = vrot.lane.b32.xlu0 %v2769, 24
        %v2860 = vpop.permute.xlu0 %2859
        %2861 = vrot.lane.b32.xlu0 %v2815, 24
        %v2862 = vpop.permute.xlu0 %2861
        %2863 = vrot.lane.b32.xlu0 %v2818, 24
        %v2864 = vpop.permute.xlu0 %2863
        %v2869 = vsel %vm655, %v2025, %v2826
        %v2870 = vsel %vm655, %v2028, %v2828
        %v2871 = vsel %vm655, %v2075, %v2830
        %v2872 = vsel %vm655, %v2078, %v2832
        %v2873 = vsel %vm745, %v2869, %v2842
        %v2874 = vsel %vm745, %v2870, %v2844
        %v2875 = vsel %vm745, %v2871, %v2846
        %v2876 = vsel %vm745, %v2872, %v2848
        %v2877 = vsel %vm1526, %v2873, %v2858
        %v2878 = vsel %vm1526, %v2874, %v2860
        %v2879 = vsel %vm1526, %v2875, %v2862
        %v2880 = vsel %vm1526, %v2876, %v2864
        %v2881 = vpack.c.bf16 %v2878, %v2877
        %v2882 = vpack.c.bf16 %v2880, %v2879
        %v2887 = vunpack.c.l.b16 %v487
        %v2888 = vunpack.c.l.b16 %v488
        %v2889 = vunpack.c.l.b16 %v489
        %v2890 = vunpack.c.l.b16 %v490
        %v2891 = vpack.c.b16 %v2888, %v2887
        %v2892 = vpack.c.b16 %v2890, %v2889
        %v2896 = vsel %vm525, %v2881, 0
        %v2899 = vsel %vm525, %v2882, 0
        %2901 = vmatprep.subr.bf16.mxu0 0
        %2902 = vmatpush1.bf16.msra.mxu0 %v2891
        %2903 = vmatprep.subr.bf16.mxu0 0
        %2904 = vmatpush1.bf16.msra.mxu0 %v2892
        %2905 = vmatprep.subr.bf16.mxu0 0
        %2906 = vmatpush1.bf16.msra.mxu0 0
        %2907 = vmatprep.subr.bf16.mxu0 0
        %2908 = vmatpush1.bf16.msra.mxu0 0
        %2909 = vmatprep.subr.bf16.mxu0 0
        %2910 = vmatpush1.bf16.msra.mxu0 0
        %2911 = vmatprep.subr.bf16.mxu0 0
        %2912 = vmatpush1.bf16.msra.mxu0 0
        %2913 = vmatprep.subr.bf16.mxu0 0
        %2914 = vmatpush1.bf16.msra.mxu0 0
        %2915 = vmatprep.subr.bf16.mxu0 0
        %2916 = vmatpush1.bf16.msra.mxu0 0
        %2917 = vmatprep.subr.bf16.mxu0 0
        %2918 = vmatpush1.bf16.msra.mxu0 0
        %2919 = vmatprep.subr.bf16.mxu0 0
        %2920 = vmatpush1.bf16.msra.mxu0 0
        %2921 = vmatprep.subr.bf16.mxu0 0
        %2922 = vmatpush1.bf16.msra.mxu0 0
        %2923 = vmatprep.subr.bf16.mxu0 0
        %2924 = vmatpush1.bf16.msra.mxu0 0
        %2925 = vmatprep.subr.bf16.mxu0 0
        %2926 = vmatpush1.bf16.msra.mxu0 0
        %2927 = vmatprep.subr.bf16.mxu0 0
        %2928 = vmatpush1.bf16.msra.mxu0 0
        %2929 = vmatprep.subr.bf16.mxu0 0
        %2930 = vmatpush1.bf16.msra.mxu0 0
        %2931 = vmatprep.subr.bf16.mxu0 0
        %2932 = vmatpush1.bf16.msra.mxu0 0
        %2933 = vmatprep.mubr.bf16.mxu0 0
        %2934 = vmatmul.mubr.bf16.gmra.mrb[0].mxu0 %v2896
        %v2935 = vpop.f32.mrb[0].mxu0
        %v2936 = vadd.f32 0.0, %v2935
        %v2937 = vpop.f32.mrb[0].mxu0
        %v2938 = vpop.f32.mrb[0].mxu0
        %v2939 = vadd.f32 0.0, %v2938
        %v2940 = vpop.f32.mrb[0].mxu0
        %2941 = vmatprep.mubr.bf16.mxu0 0
        %2942 = vmatmul.mubr.bf16.gmra.mrb[0].mxu0 %v2899
        %v2943 = vpop.f32.mrb[0].mxu0
        %v2944 = vadd.f32 0.0, %v2943
        %v2945 = vpop.f32.mrb[0].mxu0
        %v2946 = vpop.f32.mrb[0].mxu0
        %v2947 = vadd.f32 0.0, %v2946
        %v2948 = vpop.f32.mrb[0].mxu0
        %2949 = vdwg.mxu0
        %v2950 = vlaneseq
        %v2951 = vshrl.u32 %v2950, 7
        %v2952 = vsub.s32 0, %v2951
        %v2953 = vrot.slane %v495, %v2952
        %v2954 = vadd.f32 %v2936, %v2953
        %v2955 = vadd.f32 %v2939, %v2953
        %v2956 = vadd.f32 %v2944, %v2953
        %v2957 = vadd.f32 %v2947, %v2953
        %2962 = vrot.lane.b32.xlu0 %v2954, 32
        %v2963 = vpop.permute.xlu0 %2962
        %2964 = vrot.lane.b32.xlu0 %v2955, 32
        %v2965 = vpop.permute.xlu0 %2964
        %2966 = vrot.lane.b32.xlu0 %v2956, 32
        %v2967 = vpop.permute.xlu0 %2966
        %2968 = vrot.lane.b32.xlu0 %v2957, 32
        %v2969 = vpop.permute.xlu0 %2968
        %v2974 = vadd.f32 %v1756, %v2963
        %v2975 = vadd.f32 %v1759, %v2965
        %v2976 = vadd.f32 %v1764, %v2967
        %v2977 = vadd.f32 %v1767, %v2969
        %v2978 = vpack.c.bf16 %v2975, %v2974
        %v2979 = vpack.c.bf16 %v2977, %v2976
        %2982 = vrot.lane.b32.xlu0 %v2978, 96
        %v2983 = vpop.permute.xlu0 %2982
        %2984 = vrot.lane.b32.xlu0 %v2979, 96
        %v2985 = vpop.permute.xlu0 %2984
        %v2990 = vunpack.c.l.b16 %v491
        %v2991 = vunpack.c.l.b16 %v492
        %v2992 = vunpack.c.l.b16 %v493
        %v2993 = vunpack.c.l.b16 %v494
        %v2994 = vpack.c.b16 %v2991, %v2990
        %v2995 = vpack.c.b16 %v2993, %v2992
        %v2999 = vsel %vm525, %v2983, 0
        %v3002 = vsel %vm525, %v2985, 0
        %3004 = vmatprep.subr.bf16.mxu0 0
        %3005 = vmatpush1.bf16.msra.mxu0 %v2994
        %3006 = vmatprep.subr.bf16.mxu0 0
        %3007 = vmatpush1.bf16.msra.mxu0 %v2995
        %3008 = vmatprep.subr.bf16.mxu0 0
        %3009 = vmatpush1.bf16.msra.mxu0 0
        %3010 = vmatprep.subr.bf16.mxu0 0
        %3011 = vmatpush1.bf16.msra.mxu0 0
        %3012 = vmatprep.subr.bf16.mxu0 0
        %3013 = vmatpush1.bf16.msra.mxu0 0
        %3014 = vmatprep.subr.bf16.mxu0 0
        %3015 = vmatpush1.bf16.msra.mxu0 0
        %3016 = vmatprep.subr.bf16.mxu0 0
        %3017 = vmatpush1.bf16.msra.mxu0 0
        %3018 = vmatprep.subr.bf16.mxu0 0
        %3019 = vmatpush1.bf16.msra.mxu0 0
        %3020 = vmatprep.subr.bf16.mxu0 0
        %3021 = vmatpush1.bf16.msra.mxu0 0
        %3022 = vmatprep.subr.bf16.mxu0 0
        %3023 = vmatpush1.bf16.msra.mxu0 0
        %3024 = vmatprep.subr.bf16.mxu0 0
        %3025 = vmatpush1.bf16.msra.mxu0 0
        %3026 = vmatprep.subr.bf16.mxu0 0
        %3027 = vmatpush1.bf16.msra.mxu0 0
        %3028 = vmatprep.subr.bf16.mxu0 0
        %3029 = vmatpush1.bf16.msra.mxu0 0
        %3030 = vmatprep.subr.bf16.mxu0 0
        %3031 = vmatpush1.bf16.msra.mxu0 0
        %3032 = vmatprep.subr.bf16.mxu0 0
        %3033 = vmatpush1.bf16.msra.mxu0 0
        %3034 = vmatprep.subr.bf16.mxu0 0
        %3035 = vmatpush1.bf16.msra.mxu0 0
        %3036 = vmatprep.mubr.bf16.mxu0 0
        %3037 = vmatmul.mubr.bf16.gmra.mrb[0].mxu0 %v2999
        %v3038 = vpop.f32.mrb[0].mxu0
        %v3039 = vadd.f32 0.0, %v3038
        %v3040 = vpop.f32.mrb[0].mxu0
        %v3041 = vpop.f32.mrb[0].mxu0
        %v3042 = vadd.f32 0.0, %v3041
        %v3043 = vpop.f32.mrb[0].mxu0
        %3044 = vmatprep.mubr.bf16.mxu0 0
        %3045 = vmatmul.mubr.bf16.gmra.mrb[0].mxu0 %v3002
        %v3046 = vpop.f32.mrb[0].mxu0
        %v3047 = vadd.f32 0.0, %v3046
        %v3048 = vpop.f32.mrb[0].mxu0
        %v3049 = vpop.f32.mrb[0].mxu0
        %v3050 = vadd.f32 0.0, %v3049
        %v3051 = vpop.f32.mrb[0].mxu0
        %3052 = vdwg.mxu0
        %v3053 = vlaneseq
        %v3054 = vshrl.u32 %v3053, 7
        %v3055 = vsub.s32 1, %v3054
        %v3056 = vrot.slane %v495, %v3055
        %v3057 = vadd.f32 %v3039, %v3056
        %v3058 = vadd.f32 %v3042, %v3056
        %v3059 = vadd.f32 %v3047, %v3056
        %v3060 = vadd.f32 %v3050, %v3056
        %v3061 = vmax.f32 %v3057, 0.0
        %v3062 = vmax.f32 %v3058, 0.0
        %v3063 = vmax.f32 %v3059, 0.0
        %v3064 = vmax.f32 %v3060, 0.0
        %3069 = vrot.lane.b32.xlu0 %v3061, 32
        %v3070 = vpop.permute.xlu0 %3069
        %3071 = vrot.lane.b32.xlu0 %v3062, 32
        %v3072 = vpop.permute.xlu0 %3071
        %3073 = vrot.lane.b32.xlu0 %v3063, 32
        %v3074 = vpop.permute.xlu0 %3073
        %3075 = vrot.lane.b32.xlu0 %v3064, 32
        %v3076 = vpop.permute.xlu0 %3075
        %v3081 = vadd.f32 %v2974, %v3070
        %v3082 = vadd.f32 %v2975, %v3072
        %v3083 = vadd.f32 %v2976, %v3074
        %v3084 = vadd.f32 %v2977, %v3076
        %v3085 = vxor.u32 %v1756, 2147483648
        %v3086 = vxor.u32 %v1759, 2147483648
        %v3087 = vxor.u32 %v1764, 2147483648
        %v3088 = vxor.u32 %v1767, 2147483648
        %v3089 = vmul.f32 %v3085, 1.442695
        %v3090 = vpow.pop %v3089
        %v3091 = vmul.f32 %v3086, 1.442695
        %v3092 = vpow.pop %v3091
        %v3093 = vmul.f32 %v3087, 1.442695
        %v3094 = vpow.pop %v3093
        %v3095 = vmul.f32 %v3088, 1.442695
        %v3096 = vpow.pop %v3095
        %v3097 = vadd.f32 %v3090, 1.0
        %v3098 = vadd.f32 %v3092, 1.0
        %v3099 = vadd.f32 %v3094, 1.0
        %v3100 = vadd.f32 %v3096, 1.0
        %v3101 = vrcp.pop %v3097
        %v3102 = vmul.f32 1.0, %v3101
        %v3103 = vrcp.pop %v3098
        %v3104 = vmul.f32 1.0, %v3103
        %v3105 = vrcp.pop %v3099
        %v3106 = vmul.f32 1.0, %v3105
        %v3107 = vrcp.pop %v3100
        %v3108 = vmul.f32 1.0, %v3107
        %v3109 = vmul.f32 %v1756, %v3102
        %v3110 = vmul.f32 %v1759, %v3104
        %v3111 = vmul.f32 %v1764, %v3106
        %v3112 = vmul.f32 %v1767, %v3108
        %3117 = vrot.lane.b32.xlu0 %v3109, 96
        %v3118 = vpop.permute.xlu0 %3117
        %3119 = vrot.lane.b32.xlu0 %v3110, 96
        %v3120 = vpop.permute.xlu0 %3119
        %3121 = vrot.lane.b32.xlu0 %v3111, 96
        %v3122 = vpop.permute.xlu0 %3121
        %3123 = vrot.lane.b32.xlu0 %v3112, 96
        %v3124 = vpop.permute.xlu0 %3123
        %v3129 = vmul.f32 %v3081, %v3118
        %v3130 = vmul.f32 %v3082, %v3120
        %v3131 = vmul.f32 %v3083, %v3122
        %v3132 = vmul.f32 %v3084, %v3124
        %3137 = vrot.lane.b32.xlu0 %v3129, 96
        %v3138 = vpop.permute.xlu0 %3137
        %3139 = vrot.lane.b32.xlu0 %v3130, 96
        %v3140 = vpop.permute.xlu0 %3139
        %3141 = vrot.lane.b32.xlu0 %v3131, 96
        %v3142 = vpop.permute.xlu0 %3141
        %3143 = vrot.lane.b32.xlu0 %v3132, 96
        %v3144 = vpop.permute.xlu0 %3143
        %3149 = vst.msk [vmem:[%s463] sm:$0xff] %vm525, %v3138
        %3150 = vst.msk [vmem:[%s463 + $0x8] sm:$0xff] %vm525, %v3140
        %3151 = vst.msk [vmem:[%s463 + $0x10] sm:$0xff] %vm525, %v3142
        %3152 = vst.msk [vmem:[%s463 + $0x18] sm:$0xff] %vm525, %v3144
        %s3153 = sand.u32 %s335, 1
        %s3154 = scalar_lea.sflag [#allocation3], %s3153
        %s3155 = sand.u32 %s335, 1
        %s3156 = smul.addr %s3155, 32
        %s3157 = scalar_lea.vmem [#allocation2], %s3156
        // Predicated region
        $region77: #{gab_forward.1} parent=75 // pred_check
          %p3158 = pneg %p345
        $region78: #{gab_forward.1} parent=75 // pred_check_branch
          %3160 = sbr.rel (%p3158) target = $region80
        $region79: #{gab_forward.1} parent=75 // pred_region
          %s3161 = smul.u32 2, %s28
          %s3163 = ssub.s32 512, 512
          %3164 = vsyncadd %s3154, %s3163
          %s3165 = smul.addr %s3161, 2
          %s3166 = smul.addr %s3165, 128
          %s3167 = scalar_lea.hbm %s14, %s3166
          %s3168 = sshll.u32 %s3157, 4
          %s3169 = int_to_ptr.vmem [resolvable:$true] %s3168
          %3174 = dma.vmem_to_hbm [thread:$0]  %s3169, 512, %s3167, %s3154, 128, 128, 8
        $region80: #{gab_forward.1} parent=75 // pred_fallthru
          _
      $region76: #{gab_forward.1} parent=5 // pred_fallthru
        _
      %p3175 = scmp.le.s32.totalorder 2, %s23
      // Predicated region
      $region81: #{gab_forward.1} parent=5 // pred_check
        %p3176 = pneg %p3175
      $region82: #{gab_forward.1} parent=5 // pred_check_branch
        %3178 = sbr.rel (%p3176) target = $region84
      $region83: #{gab_forward.1} parent=5 // pred_region
        %s3179 = ssub.s32 %s23, 2
        // Predicated region
        $region85: #{gab_forward.1} parent=83 // pred_check
          %p3180 = pneg %p351
        $region86: #{gab_forward.1} parent=83 // pred_check_branch
          %3182 = sbr.rel (%p3180) target = $region88
        $region87: #{gab_forward.1} parent=83 // pred_region
          %s3183 = sand.u32 %s336, 1
          %s3184 = scalar_lea.sflag [#allocation3], %s3183
          %s3185 = sand.u32 %s336, 1
          %s3186 = smul.addr %s3185, 32
          %s3187 = scalar_lea.vmem [#allocation2], %s3186
          %3188 = dma.done %s3184, 512
        $region88: #{gab_forward.1} parent=83 // pred_fallthru
          _
      $region84: #{gab_forward.1} parent=5 // pred_fallthru
        _
    $region6: #{gab_forward.1} parent=1 // loop_footer
      %s27 = sadd.s32 1, %s23
    $region7: #{gab_forward.1} parent=1 // loop_footer_branch
      %22 = sbr.rel target = $region3
    $region8: #{gab_forward.1} parent=1 // loop_exit
      _
    %3189 = vsyncpa [#allocation3], 1
    %s3190 = scalar_lea.sflag [#allocation3], 1
    %3191 = vsyncpa %s3190, 1

</llo_original>
